<compile_context>
chip_gen: v7x
topology: tpu7x:2x2x1
jax: 0.10.0
libtpu: 0.0.40
codegen_flags: <defaults>
</compile_context>

<pallas_src>
import functools

import numpy as np

import jax
import jax.numpy as jnp
from jax.experimental import pallas as pl
from jax.experimental.pallas import tpu as pltpu  # noqa: F401

LATENT = 16
DEC_INPUT = 8


# ----------------------------------------------------------------------------
# The single fused kernel
# ----------------------------------------------------------------------------

def _conv_vae_kernel(x_ref, eps_ref,
                     s1_ref, c1_ref, bias1_ref,
                     s2_ref, c2_ref, bias2_ref,
                     wfc1_ref, bfc1_ref, wfc2_ref, bfc2_ref,
                     wmulv_ref, bmulv_ref, wdec_ref, bdec_ref, edec_ref,
                     st1_ref, ct1_ref, biast1_ref,
                     st2_ref, ct2_ref, biast2_ref,
                     recon_ref, mu_ref, lv_ref):
    f32 = jnp.float32
    bf16 = jnp.bfloat16

    def mm(a, b):
        return jnp.dot(a, b, preferred_element_type=f32)

    def conv_sum(x_bf16, s_ref, c_ref, bias_ref):
        # Conv / ConvTranspose as a sum over kernel-row taps:
        #   out = sum_kh (S_kh @ X) @ B_kh + bias
        acc = None
        for kh in range(s_ref.shape[0]):
            rows = mm(s_ref[kh], x_bf16)            # row-tap selection (0/1, exact)
            term = mm(rows.astype(bf16), c_ref[kh])  # kw taps + channel mixing
            acc = term if acc is None else acc + term
        return acc + bias_ref[...]

    n = eps_ref.shape[0]

    # ---------------- encoder ----------------
    # conv1: (N*28, 28) -> (N*14, 14*8), ReLU
    h1 = jnp.maximum(conv_sum(x_ref[...], s1_ref, c1_ref, bias1_ref), 0.0)
    # conv2: (N*14, 112) -> (N*7, 7*16), ReLU
    h2 = jnp.maximum(conv_sum(h1.astype(bf16), s2_ref, c2_ref, bias2_ref), 0.0)

    # adaptive_avg_pool2d(1): per-sample sum over the 7 output rows, built from
    # iota (no pool-matrix input).  The 1/49 mean factor and the sum over the
    # 7 output columns are folded into wfc1.
    col = jax.lax.broadcasted_iota(jnp.int32, (n, n * 7), 1)
    row = jax.lax.broadcasted_iota(jnp.int32, (n, n * 7), 0)
    gap = ((col >= row * 7) & (col < row * 7 + 7)).astype(f32)
    hsum = mm(gap, h2)                                                  # (N, 112)

    f = jnp.maximum(mm(hsum, wfc1_ref[...]) + bfc1_ref[...], 0.0)       # (N, 32)
    f = jnp.maximum(mm(f, wfc2_ref[...]) + bfc2_ref[...], 0.0)          # (N, 32)

    # fc_mu | fc_log_var as one matmul, split in-kernel
    mulv = mm(f, wmulv_ref[...]) + bmulv_ref[...]                       # (N, 32)
    mu = mulv[:, :LATENT]
    log_var = mulv[:, LATENT:]
    mu_ref[...] = mu
    lv_ref[...] = log_var

    # reparameterize (eps supplied as an input; TODO(synk): could use
    # pltpu.prng_seed/prng_random_bits to draw eps in-kernel instead)
    z = mu + eps_ref[...] * jnp.exp(0.5 * log_var)                      # (N, 16)

    # ---------------- decoder ----------------
    # fc_dec (columns pre-permuted to (h, w, c) order), ReLU
    d = jnp.maximum(mm(z, wdec_ref[...]) + bdec_ref[...], 0.0)          # (N, 392)
    # scatter sample rows to the (N*7, 7*8) spatial layout via tiny 0/1 matmuls
    d2 = None
    for h in range(7):
        t = mm(edec_ref[h], d[:, 56 * h:56 * (h + 1)])                  # (N*7, 56)
        d2 = t if d2 is None else d2 + t

    # convT1: (N*7, 56) -> (N*14, 14*8), ReLU
    g1 = jnp.maximum(conv_sum(d2.astype(bf16), st1_ref, ct1_ref, biast1_ref), 0.0)
    # convT2 with depth-to-space folded into its column operator:
    # (N*14, 112) -> (N*14, 56), lanes = (output-row parity)*28 + output col
    y = conv_sum(g1.astype(bf16), st2_ref, ct2_ref, biast2_ref)
    # exact sigmoid (EUP exp + exact reciprocal) -> recon guaranteed in [0, 1]
    recon_ref[...] = pl.reciprocal(1.0 + jnp.exp(-y), approx=False)


# ----------------------------------------------------------------------------
# Batch-dependent, weight-independent row operators (numpy, trace-time consts)
# ----------------------------------------------------------------------------

@functools.lru_cache(maxsize=None)
def _row_operators(n):
    eye = np.eye(n, dtype=np.float32)

    def batched(stack):
        return np.stack([np.kron(eye, s) for s in stack])

    def conv_rows(oh_dim, ih_dim, k, stride=2, pad=1):
        # S[kh, oh, ih] = 1  iff  ih == stride*oh - pad + kh   (Conv2d)
        s = np.zeros((k, oh_dim, ih_dim), np.float32)
        for kh in range(k):
            for oh in range(oh_dim):
                ih = stride * oh - pad + kh
                if 0 <= ih < ih_dim:
                    s[kh, oh, ih] = 1.0
        return s

    def convT_rows(oh_dim, ih_dim, k, stride=2, pad=1, pack=False):
        # S[kh, oh, ih] = 1  iff  oh == stride*ih - pad + kh   (ConvTranspose2d)
        rows = oh_dim // 2 if pack else oh_dim
        s = np.zeros((k, rows, ih_dim), np.float32)
        for kh in range(k):
            for ih in range(ih_dim):
                oh = stride * ih - pad + kh
                if 0 <= oh < oh_dim:
                    s[kh, oh // 2 if pack else oh, ih] = 1.0
        return s

    e_dec = np.stack(
        [np.kron(eye, np.eye(7, dtype=np.float32)[:, h:h + 1]) for h in range(7)])

    return {
        "s1": batched(conv_rows(14, 28, 3)),        # (3, 14n, 28n)
        "s2": batched(conv_rows(7, 14, 3)),         # (3, 7n, 14n)
        "st1": batched(convT_rows(14, 7, 4)),       # (4, 14n, 7n)
        "st2": batched(convT_rows(28, 14, 4, pack=True)),  # (4, 14n, 14n)
        "e_dec": e_dec,                             # (7, 7n, n)
    }


# ----------------------------------------------------------------------------
# One-time weight re-layout (host-side numpy; run once outside the hot path)
# ----------------------------------------------------------------------------

def prepare_params(P):
    Pn = {k: np.asarray(v, np.float32) for k, v in P.items()}

    def conv_col_ops(w, w_in, ow_dim, stride=2, pad=1):
        # Conv2d weight (Cout, Cin, K, K) -> per-kh (W*Cin, OW*Cout) operators
        cout, cin, k, _ = w.shape
        B = np.zeros((k, w_in * cin, ow_dim * cout), np.float32)
        for kh in range(k):
            for ow in range(ow_dim):
                for kw in range(k):
                    iw = stride * ow - pad + kw
                    if 0 <= iw < w_in:
                        B[kh, iw * cin:(iw + 1) * cin,
                          ow * cout:(ow + 1) * cout] = w[:, :, kh, kw].T
        return B

    def convT_col_ops(w, w_in, ow_dim, stride=2, pad=1):
        # ConvTranspose2d weight (Cin, Cout, K, K) -> per-kh (W*Cin, OW*Cout)
        cin, cout, k, _ = w.shape
        B = np.zeros((k, w_in * cin, ow_dim * cout), np.float32)
        for kh in range(k):
            for iw in range(w_in):
                for kw in range(k):
                    ow = stride * iw - pad + kw
                    if 0 <= ow < ow_dim:
                        B[kh, iw * cin:(iw + 1) * cin,
                          ow * cout:(ow + 1) * cout] = w[:, :, kh, kw]
        return B

    def convT_col_ops_packed(w, w_in, ow_dim, stride=2, pad=1):
        # Cout == 1; lane = a*ow_dim + ow, a = output-row parity of tap kh
        # (depth-to-space folded in -> final store is 56 lanes wide)
        cin, cout, k, _ = w.shape
        assert cout == 1
        B = np.zeros((k, w_in * cin, 2 * ow_dim), np.float32)
        for kh in range(k):
            a = (kh + 1) % 2
            for iw in range(w_in):
                for kw in range(k):
                    ow = stride * iw - pad + kw
                    if 0 <= ow < ow_dim:
                        B[kh, iw * cin:(iw + 1) * cin, a * ow_dim + ow] = w[:, 0, kh, kw]
        return B

    # fc_dec weight/bias permuted so its output columns are already (h, w, c)
    wd = Pn["fc_dec1_w"].reshape(LATENT, DEC_INPUT, 7, 7).transpose(0, 2, 3, 1)
    wd = wd.reshape(LATENT, 7 * 7 * DEC_INPUT)
    bd = Pn["fc_dec1_b"].reshape(DEC_INPUT, 7, 7).transpose(1, 2, 0).reshape(-1)

    def bf(a):
        return jnp.asarray(a, jnp.bfloat16)

    def f32row(a):
        return jnp.asarray(np.asarray(a, np.float32).reshape(1, -1))

    return {
        "c1": bf(conv_col_ops(Pn["enc_w1"], 28, 14)),
        "bias1": f32row(np.tile(Pn["enc_b1"], 14)),
        "c2": bf(conv_col_ops(Pn["enc_w2"], 14, 7)),
        "bias2": f32row(np.tile(Pn["enc_b2"], 7)),
        # GAP folded: 1/49 mean factor + sum over the 7 output columns
        "wfc1": jnp.asarray(np.tile(Pn["fc_enc1_w"], (7, 1)) / 49.0),
        "bfc1": f32row(Pn["fc_enc1_b"]),
        "wfc2": jnp.asarray(Pn["fc_enc2_w"]),
        "bfc2": f32row(Pn["fc_enc2_b"]),
        # fc_mu | fc_log_var concatenated into a single head
        "wmulv": jnp.asarray(np.concatenate([Pn["fc_mu_w"], Pn["fc_lv_w"]], axis=1)),
        "bmulv": f32row(np.concatenate([Pn["fc_mu_b"], Pn["fc_lv_b"]])),
        "wdec": jnp.asarray(wd),
        "bdec": f32row(bd),
        "ct1": bf(convT_col_ops(Pn["dec_t1_w"], 7, 14)),
        "biast1": f32row(np.tile(Pn["dec_t1_b"], 14)),
        "ct2": bf(convT_col_ops_packed(Pn["dec_t2_w"], 14, 28)),
        "biast2": f32row(np.tile(Pn["dec_t2_b"], 56)),
    }


# ----------------------------------------------------------------------------
# Forward pass: ONE pallas_call, no grid (everything VMEM-resident)
# ----------------------------------------------------------------------------

def conv_vae_forward(x, Pk, eps):
    """x: (N, 1, 28, 28) f32 (PyTorch layout) -> (recon, mu, log_var)."""
    n = x.shape[0]
    ops = _row_operators(n)               # numpy trace-time constants
    x2d = x.reshape(n * 28, 28).astype(jnp.bfloat16)   # NCHW->(N*H, W): free for C=1

    recon2d, mu, log_var = pl.pallas_call(
        _conv_vae_kernel,
        out_shape=(
            jax.ShapeDtypeStruct((n * 14, 56), jnp.float32),
            jax.ShapeDtypeStruct((n, LATENT), jnp.float32),
            jax.ShapeDtypeStruct((n, LATENT), jnp.float32),
        ),
    )(
        x2d, eps.astype(jnp.float32),
        jnp.asarray(ops["s1"], jnp.bfloat16), Pk["c1"], Pk["bias1"],
        jnp.asarray(ops["s2"], jnp.bfloat16), Pk["c2"], Pk["bias2"],
        Pk["wfc1"], Pk["bfc1"], Pk["wfc2"], Pk["bfc2"],
        Pk["wmulv"], Pk["bmulv"], Pk["wdec"], Pk["bdec"],
        jnp.asarray(ops["e_dec"], jnp.float32),
        jnp.asarray(ops["st1"], jnp.bfloat16), Pk["ct1"], Pk["biast1"],
        jnp.asarray(ops["st2"], jnp.bfloat16), Pk["ct2"], Pk["biast2"],
    )
    # rows = (n, oh//2), lanes = (oh%2)*28 + ow  ->  contiguous reshape, no copy
    recon = recon2d.reshape(n, 1, 28, 28)
    return recon, mu, log_var


# ----------------------------------------------------------------------------
# Deterministic synthetic weights (PyTorch layouts) and a pure-JAX reference
# ----------------------------------------------------------------------------

def init_weights(key):
    ks = jax.random.split(key, 10)
    s = 0.1
    return {
        "enc_w1": jax.random.normal(ks[0], (8, 1, 3, 3), jnp.float32) * s,
        "enc_b1": jnp.zeros((8,), jnp.float32),
        "enc_w2": jax.random.normal(ks[1], (16, 8, 3, 3), jnp.float32) * s,
        "enc_b2": jnp.zeros((16,), jnp.float32),
        "fc_enc1_w": jax.random.normal(ks[2], (16, 32), jnp.float32) * s,
        "fc_enc1_b": jnp.full((32,), 0.01, jnp.float32),
        "fc_enc2_w": jax.random.normal(ks[3], (32, 2 * LATENT), jnp.float32) * s,
        "fc_enc2_b": jnp.full((2 * LATENT,), 0.01, jnp.float32),
        "fc_mu_w": jax.random.normal(ks[4], (2 * LATENT, LATENT), jnp.float32) * s,
        "fc_mu_b": jnp.zeros((LATENT,), jnp.float32),
        "fc_lv_w": jax.random.normal(ks[5], (2 * LATENT, LATENT), jnp.float32) * s,
        "fc_lv_b": jnp.zeros((LATENT,), jnp.float32),
        "fc_dec1_w": jax.random.normal(ks[6], (LATENT, DEC_INPUT * 7 * 7), jnp.float32) * s,
        "fc_dec1_b": jnp.full((DEC_INPUT * 7 * 7,), 0.01, jnp.float32),
        "dec_t1_w": jax.random.normal(ks[7], (DEC_INPUT, 8, 4, 4), jnp.float32) * s,
        "dec_t1_b": jnp.zeros((8,), jnp.float32),
        "dec_t2_w": jax.random.normal(ks[8], (8, 1, 4, 4), jnp.float32) * s,
        "dec_t2_b": jnp.zeros((1,), jnp.float32),
    }


def reference_forward(x, P, eps):
    """Pure-JAX f32 reference of the same ConvVAE forward (correctness oracle)."""
    def conv(h, w, b, s, p):
        y = jax.lax.conv_general_dilated(
            h, w, window_strides=(s, s), padding=[(p, p), (p, p)],
            dimension_numbers=("NCHW", "OIHW", "NCHW"))
        return y + b[None, :, None, None]

    def conv_t(h, w, b, s, p):
        k = w.shape[2]
        w_eq = jnp.flip(w, (2, 3)).transpose(1, 0, 2, 3)
        y = jax.lax.conv_general_dilated(
            h, w_eq, window_strides=(1, 1),
            padding=[(k - 1 - p, k - 1 - p)] * 2, lhs_dilation=(s, s),
            dimension_numbers=("NCHW", "OIHW", "NCHW"))
        return y + b[None, :, None, None]

    relu = jax.nn.relu
    h = relu(conv(x, P["enc_w1"], P["enc_b1"], 2, 1))
    h = relu(conv(h, P["enc_w2"], P["enc_b2"], 2, 1))
    h = jnp.mean(h, axis=(2, 3))
    h = relu(h @ P["fc_enc1_w"] + P["fc_enc1_b"])
    h = relu(h @ P["fc_enc2_w"] + P["fc_enc2_b"])
    mu = h @ P["fc_mu_w"] + P["fc_mu_b"]
    log_var = h @ P["fc_lv_w"] + P["fc_lv_b"]
    z = mu + eps * jnp.exp(0.5 * log_var)
    d = relu(z @ P["fc_dec1_w"] + P["fc_dec1_b"])
    d = d.reshape(-1, DEC_INPUT, 7, 7)
    d = relu(conv_t(d, P["dec_t1_w"], P["dec_t1_b"], 2, 1))
    r = conv_t(d, P["dec_t2_w"], P["dec_t2_b"], 2, 1)
    return jax.nn.sigmoid(r), mu, log_var


if __name__ == "__main__":
    key = jax.random.PRNGKey(0)
    k_x, k_eps, k_p = jax.random.split(key, 3)

    x = jax.random.normal(k_x, (2, 1, 28, 28), jnp.float32)   # NCHW, like PyTorch
    P = init_weights(k_p)
    # torch.randn_like(std) in reparameterize -> deterministic eps supplied here
    eps = jax.random.normal(k_eps, (2, LATENT), jnp.float32)

    Pk = prepare_params(P)                 # one-time host-side weight re-layout
    fwd = jax.jit(conv_vae_forward)
    recon, mu, log_var = fwd(x, Pk, eps)
    jax.block_until_ready((recon, mu, log_var))

    # output-contract checks (mirrors the module)
    assert recon.shape == (2, 1, 28, 28)
    assert mu.shape == (2, LATENT) and log_var.shape == (2, LATENT)
    assert bool(jnp.all(jnp.isfinite(recon)))
    assert bool(jnp.all((recon >= 0.0) & (recon <= 1.0)))   # exact sigmoid

    # numerical check of the fused Pallas path against a pure-JAX f32 reference
    r_ref, mu_r, lv_r = jax.jit(reference_forward)(x, P, eps)
    for got, ref in ((recon, r_ref), (mu, mu_r), (log_var, lv_r)):
        err = float(jnp.max(jnp.abs(got - ref)))
        assert err < 5e-2, f"mismatch vs reference: max abs err {err}"

    print("KERNEL_OK")
</pallas_src>

<mosaic_0001>
module attributes {stable_mosaic.version = 11 : i64} {
  func.func @_conv_vae_kernel(%arg0: memref<56x28xbf16, #tpu.memory_space<vmem>>, %arg1: memref<2x16xf32, #tpu.memory_space<vmem>>, %arg2: memref<3x28x56xbf16, #tpu.memory_space<vmem>>, %arg3: memref<3x28x112xbf16, #tpu.memory_space<vmem>>, %arg4: memref<1x112xf32, #tpu.memory_space<vmem>>, %arg5: memref<3x14x28xbf16, #tpu.memory_space<vmem>>, %arg6: memref<3x112x112xbf16, #tpu.memory_space<vmem>>, %arg7: memref<1x112xf32, #tpu.memory_space<vmem>>, %arg8: memref<112x32xf32, #tpu.memory_space<vmem>>, %arg9: memref<1x32xf32, #tpu.memory_space<vmem>>, %arg10: memref<32x32xf32, #tpu.memory_space<vmem>>, %arg11: memref<1x32xf32, #tpu.memory_space<vmem>>, %arg12: memref<32x32xf32, #tpu.memory_space<vmem>>, %arg13: memref<1x32xf32, #tpu.memory_space<vmem>>, %arg14: memref<16x392xf32, #tpu.memory_space<vmem>>, %arg15: memref<1x392xf32, #tpu.memory_space<vmem>>, %arg16: memref<7x14x2xf32, #tpu.memory_space<vmem>>, %arg17: memref<4x28x14xbf16, #tpu.memory_space<vmem>>, %arg18: memref<4x56x112xbf16, #tpu.memory_space<vmem>>, %arg19: memref<1x112xf32, #tpu.memory_space<vmem>>, %arg20: memref<4x28x28xbf16, #tpu.memory_space<vmem>>, %arg21: memref<4x112x56xbf16, #tpu.memory_space<vmem>>, %arg22: memref<1x56xf32, #tpu.memory_space<vmem>>, %arg23: memref<28x56xf32, #tpu.memory_space<vmem>>, %arg24: memref<2x16xf32, #tpu.memory_space<vmem>>, %arg25: memref<2x16xf32, #tpu.memory_space<vmem>>) attributes {dimension_semantics = [], scalar_prefetch = 0 : i64, scratch_operands = 0 : i64, tpu.core_type = #tpu.core_type<tc>} {
    %c0 = arith.constant 0 : index
    %c0_0 = arith.constant 0 : index
    %0 = vector.load %arg0[%c0, %c0_0] : memref<56x28xbf16, #tpu.memory_space<vmem>>, vector<56x28xbf16>
    %c0_1 = arith.constant 0 : index
    %c0_2 = arith.constant 0 : index
    %c0_3 = arith.constant 0 : index
    %1 = vector.load %arg2[%c0_1, %c0_2, %c0_3] : memref<3x28x56xbf16, #tpu.memory_space<vmem>>, vector<1x28x56xbf16>
    %2 = vector.shape_cast %1 : vector<1x28x56xbf16> to vector<28x56xbf16>
    %cst = arith.constant dense<0.000000e+00> : vector<28x28xf32>
    %3 = tpu.matmul %2, %0, %cst {dimension_numbers = #tpu.dot_dimension_numbers<[1], [0], [0], [1], [0, 0, 1, 1], [], []>} : vector<28x56xbf16>, vector<56x28xbf16>, vector<28x28xf32> -> vector<28x28xf32>
    %4 = arith.truncf %3 : vector<28x28xf32> to vector<28x28xbf16>
    %c0_4 = arith.constant 0 : index
    %c0_5 = arith.constant 0 : index
    %c0_6 = arith.constant 0 : index
    %5 = vector.load %arg3[%c0_4, %c0_5, %c0_6] : memref<3x28x112xbf16, #tpu.memory_space<vmem>>, vector<1x28x112xbf16>
    %6 = vector.shape_cast %5 : vector<1x28x112xbf16> to vector<28x112xbf16>
    %cst_7 = arith.constant dense<0.000000e+00> : vector<28x112xf32>
    %7 = tpu.matmul %4, %6, %cst_7 {dimension_numbers = #tpu.dot_dimension_numbers<[1], [0], [0], [1], [0, 0, 1, 1], [], []>} : vector<28x28xbf16>, vector<28x112xbf16>, vector<28x112xf32> -> vector<28x112xf32>
    %c1 = arith.constant 1 : index
    %c0_8 = arith.constant 0 : index
    %c0_9 = arith.constant 0 : index
    %8 = vector.load %arg2[%c1, %c0_8, %c0_9] : memref<3x28x56xbf16, #tpu.memory_space<vmem>>, vector<1x28x56xbf16>
    %9 = vector.shape_cast %8 : vector<1x28x56xbf16> to vector<28x56xbf16>
    %cst_10 = arith.constant dense<0.000000e+00> : vector<28x28xf32>
    %10 = tpu.matmul %9, %0, %cst_10 {dimension_numbers = #tpu.dot_dimension_numbers<[1], [0], [0], [1], [0, 0, 1, 1], [], []>} : vector<28x56xbf16>, vector<56x28xbf16>, vector<28x28xf32> -> vector<28x28xf32>
    %11 = arith.truncf %10 : vector<28x28xf32> to vector<28x28xbf16>
    %c1_11 = arith.constant 1 : index
    %c0_12 = arith.constant 0 : index
    %c0_13 = arith.constant 0 : index
    %12 = vector.load %arg3[%c1_11, %c0_12, %c0_13] : memref<3x28x112xbf16, #tpu.memory_space<vmem>>, vector<1x28x112xbf16>
    %13 = vector.shape_cast %12 : vector<1x28x112xbf16> to vector<28x112xbf16>
    %cst_14 = arith.constant dense<0.000000e+00> : vector<28x112xf32>
    %14 = tpu.matmul %11, %13, %cst_14 {dimension_numbers = #tpu.dot_dimension_numbers<[1], [0], [0], [1], [0, 0, 1, 1], [], []>} : vector<28x28xbf16>, vector<28x112xbf16>, vector<28x112xf32> -> vector<28x112xf32>
    %15 = arith.addf %7, %14 : vector<28x112xf32>
    %c2 = arith.constant 2 : index
    %c0_15 = arith.constant 0 : index
    %c0_16 = arith.constant 0 : index
    %16 = vector.load %arg2[%c2, %c0_15, %c0_16] : memref<3x28x56xbf16, #tpu.memory_space<vmem>>, vector<1x28x56xbf16>
    %17 = vector.shape_cast %16 : vector<1x28x56xbf16> to vector<28x56xbf16>
    %cst_17 = arith.constant dense<0.000000e+00> : vector<28x28xf32>
    %18 = tpu.matmul %17, %0, %cst_17 {dimension_numbers = #tpu.dot_dimension_numbers<[1], [0], [0], [1], [0, 0, 1, 1], [], []>} : vector<28x56xbf16>, vector<56x28xbf16>, vector<28x28xf32> -> vector<28x28xf32>
    %19 = arith.truncf %18 : vector<28x28xf32> to vector<28x28xbf16>
    %c2_18 = arith.constant 2 : index
    %c0_19 = arith.constant 0 : index
    %c0_20 = arith.constant 0 : index
    %20 = vector.load %arg3[%c2_18, %c0_19, %c0_20] : memref<3x28x112xbf16, #tpu.memory_space<vmem>>, vector<1x28x112xbf16>
    %21 = vector.shape_cast %20 : vector<1x28x112xbf16> to vector<28x112xbf16>
    %cst_21 = arith.constant dense<0.000000e+00> : vector<28x112xf32>
    %22 = tpu.matmul %19, %21, %cst_21 {dimension_numbers = #tpu.dot_dimension_numbers<[1], [0], [0], [1], [0, 0, 1, 1], [], []>} : vector<28x28xbf16>, vector<28x112xbf16>, vector<28x112xf32> -> vector<28x112xf32>
    %23 = arith.addf %15, %22 : vector<28x112xf32>
    %c0_22 = arith.constant 0 : index
    %c0_23 = arith.constant 0 : index
    %24 = vector.load %arg4[%c0_22, %c0_23] : memref<1x112xf32, #tpu.memory_space<vmem>>, vector<1x112xf32>
    %25 = vector.broadcast %24 : vector<1x112xf32> to vector<28x112xf32>
    %26 = arith.addf %23, %25 : vector<28x112xf32>
    %cst_24 = arith.constant 0.000000e+00 : f32
    %27 = vector.broadcast %cst_24 : f32 to vector<28x112xf32>
    %28 = arith.maximumf %26, %27 : vector<28x112xf32>
    %29 = arith.truncf %28 : vector<28x112xf32> to vector<28x112xbf16>
    %c0_25 = arith.constant 0 : index
    %c0_26 = arith.constant 0 : index
    %c0_27 = arith.constant 0 : index
    %30 = vector.load %arg5[%c0_25, %c0_26, %c0_27] : memref<3x14x28xbf16, #tpu.memory_space<vmem>>, vector<1x14x28xbf16>
    %31 = vector.shape_cast %30 : vector<1x14x28xbf16> to vector<14x28xbf16>
    %cst_28 = arith.constant dense<0.000000e+00> : vector<14x112xf32>
    %32 = tpu.matmul %31, %29, %cst_28 {dimension_numbers = #tpu.dot_dimension_numbers<[1], [0], [0], [1], [0, 0, 1, 1], [], []>} : vector<14x28xbf16>, vector<28x112xbf16>, vector<14x112xf32> -> vector<14x112xf32>
    %33 = arith.truncf %32 : vector<14x112xf32> to vector<14x112xbf16>
    %c0_29 = arith.constant 0 : index
    %c0_30 = arith.constant 0 : index
    %c0_31 = arith.constant 0 : index
    %34 = vector.load %arg6[%c0_29, %c0_30, %c0_31] : memref<3x112x112xbf16, #tpu.memory_space<vmem>>, vector<1x112x112xbf16>
    %35 = vector.shape_cast %34 : vector<1x112x112xbf16> to vector<112x112xbf16>
    %cst_32 = arith.constant dense<0.000000e+00> : vector<14x112xf32>
    %36 = tpu.matmul %33, %35, %cst_32 {dimension_numbers = #tpu.dot_dimension_numbers<[1], [0], [0], [1], [0, 0, 1, 1], [], []>} : vector<14x112xbf16>, vector<112x112xbf16>, vector<14x112xf32> -> vector<14x112xf32>
    %c1_33 = arith.constant 1 : index
    %c0_34 = arith.constant 0 : index
    %c0_35 = arith.constant 0 : index
    %37 = vector.load %arg5[%c1_33, %c0_34, %c0_35] : memref<3x14x28xbf16, #tpu.memory_space<vmem>>, vector<1x14x28xbf16>
    %38 = vector.shape_cast %37 : vector<1x14x28xbf16> to vector<14x28xbf16>
    %cst_36 = arith.constant dense<0.000000e+00> : vector<14x112xf32>
    %39 = tpu.matmul %38, %29, %cst_36 {dimension_numbers = #tpu.dot_dimension_numbers<[1], [0], [0], [1], [0, 0, 1, 1], [], []>} : vector<14x28xbf16>, vector<28x112xbf16>, vector<14x112xf32> -> vector<14x112xf32>
    %40 = arith.truncf %39 : vector<14x112xf32> to vector<14x112xbf16>
    %c1_37 = arith.constant 1 : index
    %c0_38 = arith.constant 0 : index
    %c0_39 = arith.constant 0 : index
    %41 = vector.load %arg6[%c1_37, %c0_38, %c0_39] : memref<3x112x112xbf16, #tpu.memory_space<vmem>>, vector<1x112x112xbf16>
    %42 = vector.shape_cast %41 : vector<1x112x112xbf16> to vector<112x112xbf16>
    %cst_40 = arith.constant dense<0.000000e+00> : vector<14x112xf32>
    %43 = tpu.matmul %40, %42, %cst_40 {dimension_numbers = #tpu.dot_dimension_numbers<[1], [0], [0], [1], [0, 0, 1, 1], [], []>} : vector<14x112xbf16>, vector<112x112xbf16>, vector<14x112xf32> -> vector<14x112xf32>
    %44 = arith.addf %36, %43 : vector<14x112xf32>
    %c2_41 = arith.constant 2 : index
    %c0_42 = arith.constant 0 : index
    %c0_43 = arith.constant 0 : index
    %45 = vector.load %arg5[%c2_41, %c0_42, %c0_43] : memref<3x14x28xbf16, #tpu.memory_space<vmem>>, vector<1x14x28xbf16>
    %46 = vector.shape_cast %45 : vector<1x14x28xbf16> to vector<14x28xbf16>
    %cst_44 = arith.constant dense<0.000000e+00> : vector<14x112xf32>
    %47 = tpu.matmul %46, %29, %cst_44 {dimension_numbers = #tpu.dot_dimension_numbers<[1], [0], [0], [1], [0, 0, 1, 1], [], []>} : vector<14x28xbf16>, vector<28x112xbf16>, vector<14x112xf32> -> vector<14x112xf32>
    %48 = arith.truncf %47 : vector<14x112xf32> to vector<14x112xbf16>
    %c2_45 = arith.constant 2 : index
    %c0_46 = arith.constant 0 : index
    %c0_47 = arith.constant 0 : index
    %49 = vector.load %arg6[%c2_45, %c0_46, %c0_47] : memref<3x112x112xbf16, #tpu.memory_space<vmem>>, vector<1x112x112xbf16>
    %50 = vector.shape_cast %49 : vector<1x112x112xbf16> to vector<112x112xbf16>
    %cst_48 = arith.constant dense<0.000000e+00> : vector<14x112xf32>
    %51 = tpu.matmul %48, %50, %cst_48 {dimension_numbers = #tpu.dot_dimension_numbers<[1], [0], [0], [1], [0, 0, 1, 1], [], []>} : vector<14x112xbf16>, vector<112x112xbf16>, vector<14x112xf32> -> vector<14x112xf32>
    %52 = arith.addf %44, %51 : vector<14x112xf32>
    %c0_49 = arith.constant 0 : index
    %c0_50 = arith.constant 0 : index
    %53 = vector.load %arg7[%c0_49, %c0_50] : memref<1x112xf32, #tpu.memory_space<vmem>>, vector<1x112xf32>
    %54 = vector.broadcast %53 : vector<1x112xf32> to vector<14x112xf32>
    %55 = arith.addf %52, %54 : vector<14x112xf32>
    %cst_51 = arith.constant 0.000000e+00 : f32
    %56 = vector.broadcast %cst_51 : f32 to vector<14x112xf32>
    %57 = arith.maximumf %55, %56 : vector<14x112xf32>
    %58 = tpu.iota {dimensions = array<i32: 1>} : vector<2x14xi32>
    %59 = tpu.iota {dimensions = array<i32: 0>} : vector<2x14xi32>
    %c7_i32 = arith.constant 7 : i32
    %60 = vector.broadcast %c7_i32 : i32 to vector<2x14xi32>
    %61 = arith.muli %59, %60 : vector<2x14xi32>
    %62 = arith.cmpi sge, %58, %61 : vector<2x14xi32>
    %c7_i32_52 = arith.constant 7 : i32
    %63 = vector.broadcast %c7_i32_52 : i32 to vector<2x14xi32>
    %64 = arith.muli %59, %63 : vector<2x14xi32>
    %c7_i32_53 = arith.constant 7 : i32
    %65 = vector.broadcast %c7_i32_53 : i32 to vector<2x14xi32>
    %66 = arith.addi %64, %65 : vector<2x14xi32>
    %67 = arith.cmpi slt, %58, %66 : vector<2x14xi32>
    %68 = arith.andi %62, %67 : vector<2x14xi1>
    %69 = arith.extui %68 : vector<2x14xi1> to vector<2x14xi32>
    %70 = arith.sitofp %69 : vector<2x14xi32> to vector<2x14xf32>
    %cst_54 = arith.constant dense<0.000000e+00> : vector<2x112xf32>
    %71 = tpu.matmul %70, %57, %cst_54 {dimension_numbers = #tpu.dot_dimension_numbers<[1], [0], [0], [1], [0, 0, 1, 1], [], []>} : vector<2x14xf32>, vector<14x112xf32>, vector<2x112xf32> -> vector<2x112xf32>
    %c0_55 = arith.constant 0 : index
    %c0_56 = arith.constant 0 : index
    %72 = vector.load %arg8[%c0_55, %c0_56] : memref<112x32xf32, #tpu.memory_space<vmem>>, vector<112x32xf32>
    %cst_57 = arith.constant dense<0.000000e+00> : vector<2x32xf32>
    %73 = tpu.matmul %71, %72, %cst_57 {dimension_numbers = #tpu.dot_dimension_numbers<[1], [0], [0], [1], [0, 0, 1, 1], [], []>} : vector<2x112xf32>, vector<112x32xf32>, vector<2x32xf32> -> vector<2x32xf32>
    %c0_58 = arith.constant 0 : index
    %c0_59 = arith.constant 0 : index
    %74 = vector.load %arg9[%c0_58, %c0_59] : memref<1x32xf32, #tpu.memory_space<vmem>>, vector<1x32xf32>
    %75 = vector.broadcast %74 : vector<1x32xf32> to vector<2x32xf32>
    %76 = arith.addf %73, %75 : vector<2x32xf32>
    %cst_60 = arith.constant 0.000000e+00 : f32
    %77 = vector.broadcast %cst_60 : f32 to vector<2x32xf32>
    %78 = arith.maximumf %76, %77 : vector<2x32xf32>
    %c0_61 = arith.constant 0 : index
    %c0_62 = arith.constant 0 : index
    %79 = vector.load %arg10[%c0_61, %c0_62] : memref<32x32xf32, #tpu.memory_space<vmem>>, vector<32x32xf32>
    %cst_63 = arith.constant dense<0.000000e+00> : vector<2x32xf32>
    %80 = tpu.matmul %78, %79, %cst_63 {dimension_numbers = #tpu.dot_dimension_numbers<[1], [0], [0], [1], [0, 0, 1, 1], [], []>} : vector<2x32xf32>, vector<32x32xf32>, vector<2x32xf32> -> vector<2x32xf32>
    %c0_64 = arith.constant 0 : index
    %c0_65 = arith.constant 0 : index
    %81 = vector.load %arg11[%c0_64, %c0_65] : memref<1x32xf32, #tpu.memory_space<vmem>>, vector<1x32xf32>
    %82 = vector.broadcast %81 : vector<1x32xf32> to vector<2x32xf32>
    %83 = arith.addf %80, %82 : vector<2x32xf32>
    %cst_66 = arith.constant 0.000000e+00 : f32
    %84 = vector.broadcast %cst_66 : f32 to vector<2x32xf32>
    %85 = arith.maximumf %83, %84 : vector<2x32xf32>
    %c0_67 = arith.constant 0 : index
    %c0_68 = arith.constant 0 : index
    %86 = vector.load %arg12[%c0_67, %c0_68] : memref<32x32xf32, #tpu.memory_space<vmem>>, vector<32x32xf32>
    %cst_69 = arith.constant dense<0.000000e+00> : vector<2x32xf32>
    %87 = tpu.matmul %85, %86, %cst_69 {dimension_numbers = #tpu.dot_dimension_numbers<[1], [0], [0], [1], [0, 0, 1, 1], [], []>} : vector<2x32xf32>, vector<32x32xf32>, vector<2x32xf32> -> vector<2x32xf32>
    %c0_70 = arith.constant 0 : index
    %c0_71 = arith.constant 0 : index
    %88 = vector.load %arg13[%c0_70, %c0_71] : memref<1x32xf32, #tpu.memory_space<vmem>>, vector<1x32xf32>
    %89 = vector.broadcast %88 : vector<1x32xf32> to vector<2x32xf32>
    %90 = arith.addf %87, %89 : vector<2x32xf32>
    %91 = vector.extract_strided_slice %90 {offsets = [0, 0], sizes = [2, 16], strides = [1, 1]} : vector<2x32xf32> to vector<2x16xf32>
    %92 = vector.extract_strided_slice %90 {offsets = [0, 16], sizes = [2, 16], strides = [1, 1]} : vector<2x32xf32> to vector<2x16xf32>
    %c0_72 = arith.constant 0 : index
    %c0_73 = arith.constant 0 : index
    %93 = vector.load %arg24[%c0_72, %c0_73] : memref<2x16xf32, #tpu.memory_space<vmem>>, vector<2x16xf32>
    tpu.vector_store %arg24[%c0_72, %c0_73], %91 {strides = array<i32>} : memref<2x16xf32, #tpu.memory_space<vmem>>, vector<2x16xf32>,
    %c0_74 = arith.constant 0 : index
    %c0_75 = arith.constant 0 : index
    %94 = vector.load %arg25[%c0_74, %c0_75] : memref<2x16xf32, #tpu.memory_space<vmem>>, vector<2x16xf32>
    tpu.vector_store %arg25[%c0_74, %c0_75], %92 {strides = array<i32>} : memref<2x16xf32, #tpu.memory_space<vmem>>, vector<2x16xf32>,
    %c0_76 = arith.constant 0 : index
    %c0_77 = arith.constant 0 : index
    %95 = vector.load %arg1[%c0_76, %c0_77] : memref<2x16xf32, #tpu.memory_space<vmem>>, vector<2x16xf32>
    %cst_78 = arith.constant 5.000000e-01 : f32
    %96 = vector.broadcast %cst_78 : f32 to vector<2x16xf32>
    %97 = arith.mulf %96, %92 : vector<2x16xf32>
    %98 = math.exp %97 : vector<2x16xf32>
    %99 = arith.mulf %95, %98 : vector<2x16xf32>
    %100 = arith.addf %91, %99 : vector<2x16xf32>
    %c0_79 = arith.constant 0 : index
    %c0_80 = arith.constant 0 : index
    %101 = vector.load %arg14[%c0_79, %c0_80] : memref<16x392xf32, #tpu.memory_space<vmem>>, vector<16x392xf32>
    %cst_81 = arith.constant dense<0.000000e+00> : vector<2x392xf32>
    %102 = tpu.matmul %100, %101, %cst_81 {dimension_numbers = #tpu.dot_dimension_numbers<[1], [0], [0], [1], [0, 0, 1, 1], [], []>} : vector<2x16xf32>, vector<16x392xf32>, vector<2x392xf32> -> vector<2x392xf32>
    %c0_82 = arith.constant 0 : index
    %c0_83 = arith.constant 0 : index
    %103 = vector.load %arg15[%c0_82, %c0_83] : memref<1x392xf32, #tpu.memory_space<vmem>>, vector<1x392xf32>
    %104 = vector.broadcast %103 : vector<1x392xf32> to vector<2x392xf32>
    %105 = arith.addf %102, %104 : vector<2x392xf32>
    %cst_84 = arith.constant 0.000000e+00 : f32
    %106 = vector.broadcast %cst_84 : f32 to vector<2x392xf32>
    %107 = arith.maximumf %105, %106 : vector<2x392xf32>
    %c0_85 = arith.constant 0 : index
    %c0_86 = arith.constant 0 : index
    %c0_87 = arith.constant 0 : index
    %108 = vector.load %arg16[%c0_85, %c0_86, %c0_87] : memref<7x14x2xf32, #tpu.memory_space<vmem>>, vector<1x14x2xf32>
    %109 = vector.shape_cast %108 : vector<1x14x2xf32> to vector<14x2xf32>
    %110 = vector.extract_strided_slice %107 {offsets = [0, 0], sizes = [2, 56], strides = [1, 1]} : vector<2x392xf32> to vector<2x56xf32>
    %cst_88 = arith.constant dense<0.000000e+00> : vector<14x56xf32>
    %111 = tpu.matmul %109, %110, %cst_88 {dimension_numbers = #tpu.dot_dimension_numbers<[1], [0], [0], [1], [0, 0, 1, 1], [], []>} : vector<14x2xf32>, vector<2x56xf32>, vector<14x56xf32> -> vector<14x56xf32>
    %c1_89 = arith.constant 1 : index
    %c0_90 = arith.constant 0 : index
    %c0_91 = arith.constant 0 : index
    %112 = vector.load %arg16[%c1_89, %c0_90, %c0_91] : memref<7x14x2xf32, #tpu.memory_space<vmem>>, vector<1x14x2xf32>
    %113 = vector.shape_cast %112 : vector<1x14x2xf32> to vector<14x2xf32>
    %114 = vector.extract_strided_slice %107 {offsets = [0, 56], sizes = [2, 56], strides = [1, 1]} : vector<2x392xf32> to vector<2x56xf32>
    %cst_92 = arith.constant dense<0.000000e+00> : vector<14x56xf32>
    %115 = tpu.matmul %113, %114, %cst_92 {dimension_numbers = #tpu.dot_dimension_numbers<[1], [0], [0], [1], [0, 0, 1, 1], [], []>} : vector<14x2xf32>, vector<2x56xf32>, vector<14x56xf32> -> vector<14x56xf32>
    %116 = arith.addf %111, %115 : vector<14x56xf32>
    %c2_93 = arith.constant 2 : index
    %c0_94 = arith.constant 0 : index
    %c0_95 = arith.constant 0 : index
    %117 = vector.load %arg16[%c2_93, %c0_94, %c0_95] : memref<7x14x2xf32, #tpu.memory_space<vmem>>, vector<1x14x2xf32>
    %118 = vector.shape_cast %117 : vector<1x14x2xf32> to vector<14x2xf32>
    %119 = vector.extract_strided_slice %107 {offsets = [0, 112], sizes = [2, 56], strides = [1, 1]} : vector<2x392xf32> to vector<2x56xf32>
    %cst_96 = arith.constant dense<0.000000e+00> : vector<14x56xf32>
    %120 = tpu.matmul %118, %119, %cst_96 {dimension_numbers = #tpu.dot_dimension_numbers<[1], [0], [0], [1], [0, 0, 1, 1], [], []>} : vector<14x2xf32>, vector<2x56xf32>, vector<14x56xf32> -> vector<14x56xf32>
    %121 = arith.addf %116, %120 : vector<14x56xf32>
    %c3 = arith.constant 3 : index
    %c0_97 = arith.constant 0 : index
    %c0_98 = arith.constant 0 : index
    %122 = vector.load %arg16[%c3, %c0_97, %c0_98] : memref<7x14x2xf32, #tpu.memory_space<vmem>>, vector<1x14x2xf32>
    %123 = vector.shape_cast %122 : vector<1x14x2xf32> to vector<14x2xf32>
    %124 = vector.extract_strided_slice %107 {offsets = [0, 168], sizes = [2, 56], strides = [1, 1]} : vector<2x392xf32> to vector<2x56xf32>
    %cst_99 = arith.constant dense<0.000000e+00> : vector<14x56xf32>
    %125 = tpu.matmul %123, %124, %cst_99 {dimension_numbers = #tpu.dot_dimension_numbers<[1], [0], [0], [1], [0, 0, 1, 1], [], []>} : vector<14x2xf32>, vector<2x56xf32>, vector<14x56xf32> -> vector<14x56xf32>
    %126 = arith.addf %121, %125 : vector<14x56xf32>
    %c4 = arith.constant 4 : index
    %c0_100 = arith.constant 0 : index
    %c0_101 = arith.constant 0 : index
    %127 = vector.load %arg16[%c4, %c0_100, %c0_101] : memref<7x14x2xf32, #tpu.memory_space<vmem>>, vector<1x14x2xf32>
    %128 = vector.shape_cast %127 : vector<1x14x2xf32> to vector<14x2xf32>
    %129 = vector.extract_strided_slice %107 {offsets = [0, 224], sizes = [2, 56], strides = [1, 1]} : vector<2x392xf32> to vector<2x56xf32>
    %cst_102 = arith.constant dense<0.000000e+00> : vector<14x56xf32>
    %130 = tpu.matmul %128, %129, %cst_102 {dimension_numbers = #tpu.dot_dimension_numbers<[1], [0], [0], [1], [0, 0, 1, 1], [], []>} : vector<14x2xf32>, vector<2x56xf32>, vector<14x56xf32> -> vector<14x56xf32>
    %131 = arith.addf %126, %130 : vector<14x56xf32>
    %c5 = arith.constant 5 : index
    %c0_103 = arith.constant 0 : index
    %c0_104 = arith.constant 0 : index
    %132 = vector.load %arg16[%c5, %c0_103, %c0_104] : memref<7x14x2xf32, #tpu.memory_space<vmem>>, vector<1x14x2xf32>
    %133 = vector.shape_cast %132 : vector<1x14x2xf32> to vector<14x2xf32>
    %134 = vector.extract_strided_slice %107 {offsets = [0, 280], sizes = [2, 56], strides = [1, 1]} : vector<2x392xf32> to vector<2x56xf32>
    %cst_105 = arith.constant dense<0.000000e+00> : vector<14x56xf32>
    %135 = tpu.matmul %133, %134, %cst_105 {dimension_numbers = #tpu.dot_dimension_numbers<[1], [0], [0], [1], [0, 0, 1, 1], [], []>} : vector<14x2xf32>, vector<2x56xf32>, vector<14x56xf32> -> vector<14x56xf32>
    %136 = arith.addf %131, %135 : vector<14x56xf32>
    %c6 = arith.constant 6 : index
    %c0_106 = arith.constant 0 : index
    %c0_107 = arith.constant 0 : index
    %137 = vector.load %arg16[%c6, %c0_106, %c0_107] : memref<7x14x2xf32, #tpu.memory_space<vmem>>, vector<1x14x2xf32>
    %138 = vector.shape_cast %137 : vector<1x14x2xf32> to vector<14x2xf32>
    %139 = vector.extract_strided_slice %107 {offsets = [0, 336], sizes = [2, 56], strides = [1, 1]} : vector<2x392xf32> to vector<2x56xf32>
    %cst_108 = arith.constant dense<0.000000e+00> : vector<14x56xf32>
    %140 = tpu.matmul %138, %139, %cst_108 {dimension_numbers = #tpu.dot_dimension_numbers<[1], [0], [0], [1], [0, 0, 1, 1], [], []>} : vector<14x2xf32>, vector<2x56xf32>, vector<14x56xf32> -> vector<14x56xf32>
    %141 = arith.addf %136, %140 : vector<14x56xf32>
    %142 = arith.truncf %141 : vector<14x56xf32> to vector<14x56xbf16>
    %c0_109 = arith.constant 0 : index
    %c0_110 = arith.constant 0 : index
    %c0_111 = arith.constant 0 : index
    %143 = vector.load %arg17[%c0_109, %c0_110, %c0_111] : memref<4x28x14xbf16, #tpu.memory_space<vmem>>, vector<1x28x14xbf16>
    %144 = vector.shape_cast %143 : vector<1x28x14xbf16> to vector<28x14xbf16>
    %cst_112 = arith.constant dense<0.000000e+00> : vector<28x56xf32>
    %145 = tpu.matmul %144, %142, %cst_112 {dimension_numbers = #tpu.dot_dimension_numbers<[1], [0], [0], [1], [0, 0, 1, 1], [], []>} : vector<28x14xbf16>, vector<14x56xbf16>, vector<28x56xf32> -> vector<28x56xf32>
    %146 = arith.truncf %145 : vector<28x56xf32> to vector<28x56xbf16>
    %c0_113 = arith.constant 0 : index
    %c0_114 = arith.constant 0 : index
    %c0_115 = arith.constant 0 : index
    %147 = vector.load %arg18[%c0_113, %c0_114, %c0_115] : memref<4x56x112xbf16, #tpu.memory_space<vmem>>, vector<1x56x112xbf16>
    %148 = vector.shape_cast %147 : vector<1x56x112xbf16> to vector<56x112xbf16>
    %cst_116 = arith.constant dense<0.000000e+00> : vector<28x112xf32>
    %149 = tpu.matmul %146, %148, %cst_116 {dimension_numbers = #tpu.dot_dimension_numbers<[1], [0], [0], [1], [0, 0, 1, 1], [], []>} : vector<28x56xbf16>, vector<56x112xbf16>, vector<28x112xf32> -> vector<28x112xf32>
    %c1_117 = arith.constant 1 : index
    %c0_118 = arith.constant 0 : index
    %c0_119 = arith.constant 0 : index
    %150 = vector.load %arg17[%c1_117, %c0_118, %c0_119] : memref<4x28x14xbf16, #tpu.memory_space<vmem>>, vector<1x28x14xbf16>
    %151 = vector.shape_cast %150 : vector<1x28x14xbf16> to vector<28x14xbf16>
    %cst_120 = arith.constant dense<0.000000e+00> : vector<28x56xf32>
    %152 = tpu.matmul %151, %142, %cst_120 {dimension_numbers = #tpu.dot_dimension_numbers<[1], [0], [0], [1], [0, 0, 1, 1], [], []>} : vector<28x14xbf16>, vector<14x56xbf16>, vector<28x56xf32> -> vector<28x56xf32>
    %153 = arith.truncf %152 : vector<28x56xf32> to vector<28x56xbf16>
    %c1_121 = arith.constant 1 : index
    %c0_122 = arith.constant 0 : index
    %c0_123 = arith.constant 0 : index
    %154 = vector.load %arg18[%c1_121, %c0_122, %c0_123] : memref<4x56x112xbf16, #tpu.memory_space<vmem>>, vector<1x56x112xbf16>
    %155 = vector.shape_cast %154 : vector<1x56x112xbf16> to vector<56x112xbf16>
    %cst_124 = arith.constant dense<0.000000e+00> : vector<28x112xf32>
    %156 = tpu.matmul %153, %155, %cst_124 {dimension_numbers = #tpu.dot_dimension_numbers<[1], [0], [0], [1], [0, 0, 1, 1], [], []>} : vector<28x56xbf16>, vector<56x112xbf16>, vector<28x112xf32> -> vector<28x112xf32>
    %157 = arith.addf %149, %156 : vector<28x112xf32>
    %c2_125 = arith.constant 2 : index
    %c0_126 = arith.constant 0 : index
    %c0_127 = arith.constant 0 : index
    %158 = vector.load %arg17[%c2_125, %c0_126, %c0_127] : memref<4x28x14xbf16, #tpu.memory_space<vmem>>, vector<1x28x14xbf16>
    %159 = vector.shape_cast %158 : vector<1x28x14xbf16> to vector<28x14xbf16>
    %cst_128 = arith.constant dense<0.000000e+00> : vector<28x56xf32>
    %160 = tpu.matmul %159, %142, %cst_128 {dimension_numbers = #tpu.dot_dimension_numbers<[1], [0], [0], [1], [0, 0, 1, 1], [], []>} : vector<28x14xbf16>, vector<14x56xbf16>, vector<28x56xf32> -> vector<28x56xf32>
    %161 = arith.truncf %160 : vector<28x56xf32> to vector<28x56xbf16>
    %c2_129 = arith.constant 2 : index
    %c0_130 = arith.constant 0 : index
    %c0_131 = arith.constant 0 : index
    %162 = vector.load %arg18[%c2_129, %c0_130, %c0_131] : memref<4x56x112xbf16, #tpu.memory_space<vmem>>, vector<1x56x112xbf16>
    %163 = vector.shape_cast %162 : vector<1x56x112xbf16> to vector<56x112xbf16>
    %cst_132 = arith.constant dense<0.000000e+00> : vector<28x112xf32>
    %164 = tpu.matmul %161, %163, %cst_132 {dimension_numbers = #tpu.dot_dimension_numbers<[1], [0], [0], [1], [0, 0, 1, 1], [], []>} : vector<28x56xbf16>, vector<56x112xbf16>, vector<28x112xf32> -> vector<28x112xf32>
    %165 = arith.addf %157, %164 : vector<28x112xf32>
    %c3_133 = arith.constant 3 : index
    %c0_134 = arith.constant 0 : index
    %c0_135 = arith.constant 0 : index
    %166 = vector.load %arg17[%c3_133, %c0_134, %c0_135] : memref<4x28x14xbf16, #tpu.memory_space<vmem>>, vector<1x28x14xbf16>
    %167 = vector.shape_cast %166 : vector<1x28x14xbf16> to vector<28x14xbf16>
    %cst_136 = arith.constant dense<0.000000e+00> : vector<28x56xf32>
    %168 = tpu.matmul %167, %142, %cst_136 {dimension_numbers = #tpu.dot_dimension_numbers<[1], [0], [0], [1], [0, 0, 1, 1], [], []>} : vector<28x14xbf16>, vector<14x56xbf16>, vector<28x56xf32> -> vector<28x56xf32>
    %169 = arith.truncf %168 : vector<28x56xf32> to vector<28x56xbf16>
    %c3_137 = arith.constant 3 : index
    %c0_138 = arith.constant 0 : index
    %c0_139 = arith.constant 0 : index
    %170 = vector.load %arg18[%c3_137, %c0_138, %c0_139] : memref<4x56x112xbf16, #tpu.memory_space<vmem>>, vector<1x56x112xbf16>
    %171 = vector.shape_cast %170 : vector<1x56x112xbf16> to vector<56x112xbf16>
    %cst_140 = arith.constant dense<0.000000e+00> : vector<28x112xf32>
    %172 = tpu.matmul %169, %171, %cst_140 {dimension_numbers = #tpu.dot_dimension_numbers<[1], [0], [0], [1], [0, 0, 1, 1], [], []>} : vector<28x56xbf16>, vector<56x112xbf16>, vector<28x112xf32> -> vector<28x112xf32>
    %173 = arith.addf %165, %172 : vector<28x112xf32>
    %c0_141 = arith.constant 0 : index
    %c0_142 = arith.constant 0 : index
    %174 = vector.load %arg19[%c0_141, %c0_142] : memref<1x112xf32, #tpu.memory_space<vmem>>, vector<1x112xf32>
    %175 = vector.broadcast %174 : vector<1x112xf32> to vector<28x112xf32>
    %176 = arith.addf %173, %175 : vector<28x112xf32>
    %cst_143 = arith.constant 0.000000e+00 : f32
    %177 = vector.broadcast %cst_143 : f32 to vector<28x112xf32>
    %178 = arith.maximumf %176, %177 : vector<28x112xf32>
    %179 = arith.truncf %178 : vector<28x112xf32> to vector<28x112xbf16>
    %c0_144 = arith.constant 0 : index
    %c0_145 = arith.constant 0 : index
    %c0_146 = arith.constant 0 : index
    %180 = vector.load %arg20[%c0_144, %c0_145, %c0_146] : memref<4x28x28xbf16, #tpu.memory_space<vmem>>, vector<1x28x28xbf16>
    %181 = vector.shape_cast %180 : vector<1x28x28xbf16> to vector<28x28xbf16>
    %cst_147 = arith.constant dense<0.000000e+00> : vector<28x112xf32>
    %182 = tpu.matmul %181, %179, %cst_147 {dimension_numbers = #tpu.dot_dimension_numbers<[1], [0], [0], [1], [0, 0, 1, 1], [], []>} : vector<28x28xbf16>, vector<28x112xbf16>, vector<28x112xf32> -> vector<28x112xf32>
    %183 = arith.truncf %182 : vector<28x112xf32> to vector<28x112xbf16>
    %c0_148 = arith.constant 0 : index
    %c0_149 = arith.constant 0 : index
    %c0_150 = arith.constant 0 : index
    %184 = vector.load %arg21[%c0_148, %c0_149, %c0_150] : memref<4x112x56xbf16, #tpu.memory_space<vmem>>, vector<1x112x56xbf16>
    %185 = vector.shape_cast %184 : vector<1x112x56xbf16> to vector<112x56xbf16>
    %cst_151 = arith.constant dense<0.000000e+00> : vector<28x56xf32>
    %186 = tpu.matmul %183, %185, %cst_151 {dimension_numbers = #tpu.dot_dimension_numbers<[1], [0], [0], [1], [0, 0, 1, 1], [], []>} : vector<28x112xbf16>, vector<112x56xbf16>, vector<28x56xf32> -> vector<28x56xf32>
    %c1_152 = arith.constant 1 : index
    %c0_153 = arith.constant 0 : index
    %c0_154 = arith.constant 0 : index
    %187 = vector.load %arg20[%c1_152, %c0_153, %c0_154] : memref<4x28x28xbf16, #tpu.memory_space<vmem>>, vector<1x28x28xbf16>
    %188 = vector.shape_cast %187 : vector<1x28x28xbf16> to vector<28x28xbf16>
    %cst_155 = arith.constant dense<0.000000e+00> : vector<28x112xf32>
    %189 = tpu.matmul %188, %179, %cst_155 {dimension_numbers = #tpu.dot_dimension_numbers<[1], [0], [0], [1], [0, 0, 1, 1], [], []>} : vector<28x28xbf16>, vector<28x112xbf16>, vector<28x112xf32> -> vector<28x112xf32>
    %190 = arith.truncf %189 : vector<28x112xf32> to vector<28x112xbf16>
    %c1_156 = arith.constant 1 : index
    %c0_157 = arith.constant 0 : index
    %c0_158 = arith.constant 0 : index
    %191 = vector.load %arg21[%c1_156, %c0_157, %c0_158] : memref<4x112x56xbf16, #tpu.memory_space<vmem>>, vector<1x112x56xbf16>
    %192 = vector.shape_cast %191 : vector<1x112x56xbf16> to vector<112x56xbf16>
    %cst_159 = arith.constant dense<0.000000e+00> : vector<28x56xf32>
    %193 = tpu.matmul %190, %192, %cst_159 {dimension_numbers = #tpu.dot_dimension_numbers<[1], [0], [0], [1], [0, 0, 1, 1], [], []>} : vector<28x112xbf16>, vector<112x56xbf16>, vector<28x56xf32> -> vector<28x56xf32>
    %194 = arith.addf %186, %193 : vector<28x56xf32>
    %c2_160 = arith.constant 2 : index
    %c0_161 = arith.constant 0 : index
    %c0_162 = arith.constant 0 : index
    %195 = vector.load %arg20[%c2_160, %c0_161, %c0_162] : memref<4x28x28xbf16, #tpu.memory_space<vmem>>, vector<1x28x28xbf16>
    %196 = vector.shape_cast %195 : vector<1x28x28xbf16> to vector<28x28xbf16>
    %cst_163 = arith.constant dense<0.000000e+00> : vector<28x112xf32>
    %197 = tpu.matmul %196, %179, %cst_163 {dimension_numbers = #tpu.dot_dimension_numbers<[1], [0], [0], [1], [0, 0, 1, 1], [], []>} : vector<28x28xbf16>, vector<28x112xbf16>, vector<28x112xf32> -> vector<28x112xf32>
    %198 = arith.truncf %197 : vector<28x112xf32> to vector<28x112xbf16>
    %c2_164 = arith.constant 2 : index
    %c0_165 = arith.constant 0 : index
    %c0_166 = arith.constant 0 : index
    %199 = vector.load %arg21[%c2_164, %c0_165, %c0_166] : memref<4x112x56xbf16, #tpu.memory_space<vmem>>, vector<1x112x56xbf16>
    %200 = vector.shape_cast %199 : vector<1x112x56xbf16> to vector<112x56xbf16>
    %cst_167 = arith.constant dense<0.000000e+00> : vector<28x56xf32>
    %201 = tpu.matmul %198, %200, %cst_167 {dimension_numbers = #tpu.dot_dimension_numbers<[1], [0], [0], [1], [0, 0, 1, 1], [], []>} : vector<28x112xbf16>, vector<112x56xbf16>, vector<28x56xf32> -> vector<28x56xf32>
    %202 = arith.addf %194, %201 : vector<28x56xf32>
    %c3_168 = arith.constant 3 : index
    %c0_169 = arith.constant 0 : index
    %c0_170 = arith.constant 0 : index
    %203 = vector.load %arg20[%c3_168, %c0_169, %c0_170] : memref<4x28x28xbf16, #tpu.memory_space<vmem>>, vector<1x28x28xbf16>
    %204 = vector.shape_cast %203 : vector<1x28x28xbf16> to vector<28x28xbf16>
    %cst_171 = arith.constant dense<0.000000e+00> : vector<28x112xf32>
    %205 = tpu.matmul %204, %179, %cst_171 {dimension_numbers = #tpu.dot_dimension_numbers<[1], [0], [0], [1], [0, 0, 1, 1], [], []>} : vector<28x28xbf16>, vector<28x112xbf16>, vector<28x112xf32> -> vector<28x112xf32>
    %206 = arith.truncf %205 : vector<28x112xf32> to vector<28x112xbf16>
    %c3_172 = arith.constant 3 : index
    %c0_173 = arith.constant 0 : index
    %c0_174 = arith.constant 0 : index
    %207 = vector.load %arg21[%c3_172, %c0_173, %c0_174] : memref<4x112x56xbf16, #tpu.memory_space<vmem>>, vector<1x112x56xbf16>
    %208 = vector.shape_cast %207 : vector<1x112x56xbf16> to vector<112x56xbf16>
    %cst_175 = arith.constant dense<0.000000e+00> : vector<28x56xf32>
    %209 = tpu.matmul %206, %208, %cst_175 {dimension_numbers = #tpu.dot_dimension_numbers<[1], [0], [0], [1], [0, 0, 1, 1], [], []>} : vector<28x112xbf16>, vector<112x56xbf16>, vector<28x56xf32> -> vector<28x56xf32>
    %210 = arith.addf %202, %209 : vector<28x56xf32>
    %c0_176 = arith.constant 0 : index
    %c0_177 = arith.constant 0 : index
    %211 = vector.load %arg22[%c0_176, %c0_177] : memref<1x56xf32, #tpu.memory_space<vmem>>, vector<1x56xf32>
    %212 = vector.broadcast %211 : vector<1x56xf32> to vector<28x56xf32>
    %213 = arith.addf %210, %212 : vector<28x56xf32>
    %cst_178 = arith.constant 0.000000e+00 : f32
    %214 = vector.broadcast %cst_178 : f32 to vector<28x56xf32>
    %215 = arith.subf %214, %213 : vector<28x56xf32>
    %216 = math.exp %215 : vector<28x56xf32>
    %cst_179 = arith.constant 1.000000e+00 : f32
    %217 = vector.broadcast %cst_179 : f32 to vector<28x56xf32>
    %218 = arith.addf %217, %216 : vector<28x56xf32>
    %219 = tpu.reciprocal %218 : vector<28x56xf32> -> vector<28x56xf32>
    %c0_180 = arith.constant 0 : index
    %c0_181 = arith.constant 0 : index
    %220 = vector.load %arg23[%c0_180, %c0_181] : memref<28x56xf32, #tpu.memory_space<vmem>>, vector<28x56xf32>
    tpu.vector_store %arg23[%c0_180, %c0_181], %219 {strides = array<i32>} : memref<28x56xf32, #tpu.memory_space<vmem>>, vector<28x56xf32>,
    return
  }
}

</mosaic_0001>

<llo_original>
// kernel: conv_vae_forward.1
$region0: #{conv_vae_forward.1}
  #allocation0 [shape = 'u32[]', space=smem, size = 0x4, offset = 0x4, fixed_abs, tag = 'smem constant byte address 0x4 - core index']
  #allocation1 [shape = 'u32[144,128]{1,0:T(1,128)}', space=vmem, size = 0x12000, scoped, tag = 'internal scratch']
  %s0 = inlined_call_operand.vmem [shape: bf16[56,28], index: 0, kind: input, shape index: {}]
  %s1 = inlined_call_operand.hbm [shape: f32[2,16], index: 1, kind: input, shape index: {}]
  %s2 = inlined_call_operand.hbm [shape: bf16[3,28,56], index: 2, kind: input, shape index: {}]
  %s3 = inlined_call_operand.hbm [shape: bf16[3,28,112], index: 3, kind: input, shape index: {}]
  %s4 = inlined_call_operand.hbm [shape: f32[1,112], index: 4, kind: input, shape index: {}]
  %s5 = inlined_call_operand.hbm [shape: bf16[3,14,28], index: 5, kind: input, shape index: {}]
  %s6 = inlined_call_operand.vmem [shape: bf16[3,112,112], index: 6, kind: input, shape index: {}]
  %s7 = inlined_call_operand.hbm [shape: f32[1,112], index: 7, kind: input, shape index: {}]
  %s8 = inlined_call_operand.vmem [shape: f32[112,32], index: 8, kind: input, shape index: {}]
  %s9 = inlined_call_operand.hbm [shape: f32[1,32], index: 9, kind: input, shape index: {}]
  %s10 = inlined_call_operand.hbm [shape: f32[32,32], index: 10, kind: input, shape index: {}]
  %s11 = inlined_call_operand.hbm [shape: f32[1,32], index: 11, kind: input, shape index: {}]
  %s12 = inlined_call_operand.hbm [shape: f32[32,32], index: 12, kind: input, shape index: {}]
  %s13 = inlined_call_operand.hbm [shape: f32[1,32], index: 13, kind: input, shape index: {}]
  %s14 = inlined_call_operand.vmem [shape: f32[16,392], index: 14, kind: input, shape index: {}]
  %s15 = inlined_call_operand.hbm [shape: f32[1,392], index: 15, kind: input, shape index: {}]
  %s16 = inlined_call_operand.vmem [shape: f32[7,14,2], index: 16, kind: input, shape index: {}]
  %s17 = inlined_call_operand.vmem [shape: bf16[4,28,14], index: 17, kind: input, shape index: {}]
  %s18 = inlined_call_operand.vmem [shape: bf16[4,56,112], index: 18, kind: input, shape index: {}]
  %s19 = inlined_call_operand.hbm [shape: f32[1,112], index: 19, kind: input, shape index: {}]
  %s20 = inlined_call_operand.vmem [shape: bf16[4,28,28], index: 20, kind: input, shape index: {}]
  %s21 = inlined_call_operand.vmem [shape: bf16[4,112,56], index: 21, kind: input, shape index: {}]
  %s22 = inlined_call_operand.hbm [shape: f32[1,56], index: 22, kind: input, shape index: {}]
  %s23 = inlined_call_operand.vmem [shape: f32[28,56], index: 23, kind: output, shape index: {0}]
  %s24 = inlined_call_operand.hbm [shape: f32[2,16], index: 24, kind: output, shape index: {1}]
  %s25 = inlined_call_operand.hbm [shape: f32[2,16], index: 25, kind: output, shape index: {2}]
  %26 = xla_tuple %s23, %s24, %s25
  %s27 = sld [smem:[#allocation0]]
  $region174: #{conv_vae_forward.1} parent=0
    _
  %s29 = ssub.s32 1, %s27
  %s30 = scalar_select 0, %s29, %s27
  $region1: #{conv_vae_forward.1} parent=0
    #allocation2 [shape = 'u8[1024]{0}', space=vmem, size = 0x400, scoped, tag = 'input window, operand 1, single buffered']
    #allocation3 [shape = 's32[1]{0}', space=sflag, size = 0x4, scoped, tag = 'scoped memory for conv_vae_forward.1']
    #allocation4 [shape = 's32[1]{0}', space=sflag, size = 0x4, scoped, tag = 'scoped memory for conv_vae_forward.1']
    #allocation5 [shape = 'u8[24576]{0}', space=vmem, size = 0x6000, scoped, tag = 'input window, operand 2, single buffered']
    #allocation6 [shape = 's32[1]{0}', space=sflag, size = 0x4, scoped, tag = 'scoped memory for conv_vae_forward.1']
    #allocation7 [shape = 'u8[24576]{0}', space=vmem, size = 0x6000, scoped, tag = 'input window, operand 3, single buffered']
    #allocation8 [shape = 'u8[512]{0}', space=vmem, size = 0x400, scoped, tag = 'input window, operand 4, single buffered']
    #allocation9 [shape = 's32[1]{0}', space=sflag, size = 0x4, scoped, tag = 'scoped memory for conv_vae_forward.1']
    #allocation10 [shape = 'u8[12288]{0}', space=vmem, size = 0x3000, scoped, tag = 'input window, operand 5, single buffered']
    #allocation11 [shape = 'u8[512]{0}', space=vmem, size = 0x400, scoped, tag = 'input window, operand 7, single buffered']
    #allocation12 [shape = 's32[1]{0}', space=sflag, size = 0x4, scoped, tag = 'scoped memory for conv_vae_forward.1']
    #allocation13 [shape = 'u8[512]{0}', space=vmem, size = 0x400, scoped, tag = 'input window, operand 9, single buffered']
    #allocation14 [shape = 'u8[16384]{0}', space=vmem, size = 0x4000, scoped, tag = 'input window, operand 10, single buffered']
    #allocation15 [shape = 's32[1]{0}', space=sflag, size = 0x4, scoped, tag = 'scoped memory for conv_vae_forward.1']
    #allocation16 [shape = 'u8[512]{0}', space=vmem, size = 0x400, scoped, tag = 'input window, operand 11, single buffered']
    #allocation17 [shape = 'u8[16384]{0}', space=vmem, size = 0x4000, scoped, tag = 'input window, operand 12, single buffered']
    #allocation18 [shape = 's32[1]{0}', space=sflag, size = 0x4, scoped, tag = 'scoped memory for conv_vae_forward.1']
    #allocation19 [shape = 'u8[512]{0}', space=vmem, size = 0x400, scoped, tag = 'input window, operand 13, single buffered']
    #allocation20 [shape = 'u8[2048]{0}', space=vmem, size = 0x800, scoped, tag = 'input window, operand 15, single buffered']
    #allocation21 [shape = 's32[1]{0}', space=sflag, size = 0x4, scoped, tag = 'scoped memory for conv_vae_forward.1']
    #allocation22 [shape = 'u8[512]{0}', space=vmem, size = 0x400, scoped, tag = 'input window, operand 19, single buffered']
    #allocation23 [shape = 'u8[512]{0}', space=vmem, size = 0x400, scoped, tag = 'input window, operand 22, single buffered']
    #allocation24 [shape = 's32[1]{0}', space=sflag, size = 0x4, scoped, tag = 'scoped memory for conv_vae_forward.1']
    #allocation25 [shape = 'u8[1024]{0}', space=vmem, size = 0x400, scoped, tag = 'output window, operand 1, single buffered']
    #allocation26 [shape = 'u8[1024]{0}', space=vmem, size = 0x400, scoped, tag = 'output window, operand 2, single buffered']
    #allocation27 [shape = 's32[1]{0}', space=sflag, size = 0x4, scoped, tag = 'scoped memory for conv_vae_forward.1']
    %31 = vsyncpa [#allocation3], 0
    %32 = vsyncpa [#allocation6], 0
    %33 = vsyncpa [#allocation9], 0
    %34 = vsyncpa [#allocation12], 0
    %35 = vsyncpa [#allocation15], 0
    %36 = vsyncpa [#allocation18], 0
    %37 = vsyncpa [#allocation21], 0
    %38 = vsyncpa [#allocation24], 0
    %39 = vsyncpa [#allocation4], 0
    %40 = vsyncpa [#allocation27], 0
    // Predicated region
    $region2: #{conv_vae_forward.1} parent=1 // pred_check
      _
    $region3: #{conv_vae_forward.1} parent=1 // pred_check_branch
      %42 = sbr.rel (0) target = $region5
    $region4: #{conv_vae_forward.1} parent=1 // pred_region
      _
    $region5: #{conv_vae_forward.1} parent=1 // pred_fallthru
      _
    // Predicated region
    $region6: #{conv_vae_forward.1} parent=1 // pred_check
      _
    $region7: #{conv_vae_forward.1} parent=1 // pred_check_branch
      %44 = sbr.rel (0) target = $region9
    $region8: #{conv_vae_forward.1} parent=1 // pred_region
      %s46 = ssub.s32 32, 32
      %47 = vsyncadd [#allocation3], %s46
      %s49 = sshll.u32 [#allocation2], 4
      %s50 = int_to_ptr.vmem [resolvable:$true] %s49
      %52 = dma.hbm_to_vmem [thread:$0]  %s1, 32, %s50, [#allocation3]
    $region9: #{conv_vae_forward.1} parent=1 // pred_fallthru
      _
    // Predicated region
    $region10: #{conv_vae_forward.1} parent=1 // pred_check
      _
    $region11: #{conv_vae_forward.1} parent=1 // pred_check_branch
      %54 = sbr.rel (0) target = $region13
    $region12: #{conv_vae_forward.1} parent=1 // pred_region
      %s56 = ssub.s32 768, 768
      %57 = vsyncadd [#allocation6], %s56
      %s58 = sshll.u32 [#allocation5], 4
      %s59 = int_to_ptr.vmem [resolvable:$true] %s58
      %64 = dma.hbm_to_vmem [thread:$0]  %s2, 768, %s59, [#allocation6], 64, 64, 4
    $region13: #{conv_vae_forward.1} parent=1 // pred_fallthru
      _
    // Predicated region
    $region14: #{conv_vae_forward.1} parent=1 // pred_check
      _
    $region15: #{conv_vae_forward.1} parent=1 // pred_check_branch
      %66 = sbr.rel (0) target = $region17
    $region16: #{conv_vae_forward.1} parent=1 // pred_region
      %s68 = ssub.s32 768, 768
      %69 = vsyncadd [#allocation6], %s68
      %s70 = sshll.u32 [#allocation7], 4
      %s71 = int_to_ptr.vmem [resolvable:$true] %s70
      %76 = dma.hbm_to_vmem [thread:$0]  %s3, 768, %s71, [#allocation6], 64, 64, 4
    $region17: #{conv_vae_forward.1} parent=1 // pred_fallthru
      _
    // Predicated region
    $region18: #{conv_vae_forward.1} parent=1 // pred_check
      _
    $region19: #{conv_vae_forward.1} parent=1 // pred_check_branch
      %78 = sbr.rel (0) target = $region21
    $region20: #{conv_vae_forward.1} parent=1 // pred_region
      %s80 = ssub.s32 16, 16
      %81 = vsyncadd [#allocation9], %s80
      %s83 = sshll.u32 [#allocation8], 4
      %s84 = int_to_ptr.vmem [resolvable:$true] %s83
      %86 = dma.hbm_to_vmem [thread:$0]  %s4, 16, %s84, [#allocation9]
    $region21: #{conv_vae_forward.1} parent=1 // pred_fallthru
      _
    // Predicated region
    $region22: #{conv_vae_forward.1} parent=1 // pred_check
      _
    $region23: #{conv_vae_forward.1} parent=1 // pred_check_branch
      %88 = sbr.rel (0) target = $region25
    $region24: #{conv_vae_forward.1} parent=1 // pred_region
      %s90 = ssub.s32 384, 384
      %91 = vsyncadd [#allocation9], %s90
      %s92 = sshll.u32 [#allocation10], 4
      %s93 = int_to_ptr.vmem [resolvable:$true] %s92
      %98 = dma.hbm_to_vmem [thread:$0]  %s5, 384, %s93, [#allocation9], 64, 64, 4
    $region25: #{conv_vae_forward.1} parent=1 // pred_fallthru
      _
    // Predicated region
    $region26: #{conv_vae_forward.1} parent=1 // pred_check
      _
    $region27: #{conv_vae_forward.1} parent=1 // pred_check_branch
      %100 = sbr.rel (0) target = $region29
    $region28: #{conv_vae_forward.1} parent=1 // pred_region
      _
    $region29: #{conv_vae_forward.1} parent=1 // pred_fallthru
      _
    // Predicated region
    $region30: #{conv_vae_forward.1} parent=1 // pred_check
      _
    $region31: #{conv_vae_forward.1} parent=1 // pred_check_branch
      %102 = sbr.rel (0) target = $region33
    $region32: #{conv_vae_forward.1} parent=1 // pred_region
      %s104 = ssub.s32 16, 16
      %105 = vsyncadd [#allocation12], %s104
      %s107 = sshll.u32 [#allocation11], 4
      %s108 = int_to_ptr.vmem [resolvable:$true] %s107
      %110 = dma.hbm_to_vmem [thread:$0]  %s7, 16, %s108, [#allocation12]
    $region33: #{conv_vae_forward.1} parent=1 // pred_fallthru
      _
    // Predicated region
    $region34: #{conv_vae_forward.1} parent=1 // pred_check
      _
    $region35: #{conv_vae_forward.1} parent=1 // pred_check_branch
      %112 = sbr.rel (0) target = $region37
    $region36: #{conv_vae_forward.1} parent=1 // pred_region
      _
    $region37: #{conv_vae_forward.1} parent=1 // pred_fallthru
      _
    // Predicated region
    $region38: #{conv_vae_forward.1} parent=1 // pred_check
      _
    $region39: #{conv_vae_forward.1} parent=1 // pred_check_branch
      %114 = sbr.rel (0) target = $region41
    $region40: #{conv_vae_forward.1} parent=1 // pred_region
      %s116 = ssub.s32 16, 16
      %117 = vsyncadd [#allocation12], %s116
      %s119 = sshll.u32 [#allocation13], 4
      %s120 = int_to_ptr.vmem [resolvable:$true] %s119
      %122 = dma.hbm_to_vmem [thread:$0]  %s9, 16, %s120, [#allocation12]
    $region41: #{conv_vae_forward.1} parent=1 // pred_fallthru
      _
    // Predicated region
    $region42: #{conv_vae_forward.1} parent=1 // pred_check
      _
    $region43: #{conv_vae_forward.1} parent=1 // pred_check_branch
      %124 = sbr.rel (0) target = $region45
    $region44: #{conv_vae_forward.1} parent=1 // pred_region
      %s126 = ssub.s32 512, 512
      %127 = vsyncadd [#allocation15], %s126
      %s128 = sshll.u32 [#allocation14], 4
      %s129 = int_to_ptr.vmem [resolvable:$true] %s128
      %134 = dma.hbm_to_vmem [thread:$0]  %s10, 512, %s129, [#allocation15], 128, 128, 8
    $region45: #{conv_vae_forward.1} parent=1 // pred_fallthru
      _
    // Predicated region
    $region46: #{conv_vae_forward.1} parent=1 // pred_check
      _
    $region47: #{conv_vae_forward.1} parent=1 // pred_check_branch
      %136 = sbr.rel (0) target = $region49
    $region48: #{conv_vae_forward.1} parent=1 // pred_region
      %s138 = ssub.s32 16, 16
      %139 = vsyncadd [#allocation15], %s138
      %s141 = sshll.u32 [#allocation16], 4
      %s142 = int_to_ptr.vmem [resolvable:$true] %s141
      %144 = dma.hbm_to_vmem [thread:$0]  %s11, 16, %s142, [#allocation15]
    $region49: #{conv_vae_forward.1} parent=1 // pred_fallthru
      _
    // Predicated region
    $region50: #{conv_vae_forward.1} parent=1 // pred_check
      _
    $region51: #{conv_vae_forward.1} parent=1 // pred_check_branch
      %146 = sbr.rel (0) target = $region53
    $region52: #{conv_vae_forward.1} parent=1 // pred_region
      %s148 = ssub.s32 512, 512
      %149 = vsyncadd [#allocation18], %s148
      %s150 = sshll.u32 [#allocation17], 4
      %s151 = int_to_ptr.vmem [resolvable:$true] %s150
      %156 = dma.hbm_to_vmem [thread:$0]  %s12, 512, %s151, [#allocation18], 128, 128, 8
    $region53: #{conv_vae_forward.1} parent=1 // pred_fallthru
      _
    // Predicated region
    $region54: #{conv_vae_forward.1} parent=1 // pred_check
      _
    $region55: #{conv_vae_forward.1} parent=1 // pred_check_branch
      %158 = sbr.rel (0) target = $region57
    $region56: #{conv_vae_forward.1} parent=1 // pred_region
      %s160 = ssub.s32 16, 16
      %161 = vsyncadd [#allocation18], %s160
      %s163 = sshll.u32 [#allocation19], 4
      %s164 = int_to_ptr.vmem [resolvable:$true] %s163
      %166 = dma.hbm_to_vmem [thread:$0]  %s13, 16, %s164, [#allocation18]
    $region57: #{conv_vae_forward.1} parent=1 // pred_fallthru
      _
    // Predicated region
    $region58: #{conv_vae_forward.1} parent=1 // pred_check
      _
    $region59: #{conv_vae_forward.1} parent=1 // pred_check_branch
      %168 = sbr.rel (0) target = $region61
    $region60: #{conv_vae_forward.1} parent=1 // pred_region
      _
    $region61: #{conv_vae_forward.1} parent=1 // pred_fallthru
      _
    // Predicated region
    $region62: #{conv_vae_forward.1} parent=1 // pred_check
      _
    $region63: #{conv_vae_forward.1} parent=1 // pred_check_branch
      %170 = sbr.rel (0) target = $region65
    $region64: #{conv_vae_forward.1} parent=1 // pred_region
      %s172 = ssub.s32 64, 64
      %173 = vsyncadd [#allocation21], %s172
      %s175 = sshll.u32 [#allocation20], 4
      %s176 = int_to_ptr.vmem [resolvable:$true] %s175
      %178 = dma.hbm_to_vmem [thread:$0]  %s15, 64, %s176, [#allocation21]
    $region65: #{conv_vae_forward.1} parent=1 // pred_fallthru
      _
    // Predicated region
    $region66: #{conv_vae_forward.1} parent=1 // pred_check
      _
    $region67: #{conv_vae_forward.1} parent=1 // pred_check_branch
      %180 = sbr.rel (0) target = $region69
    $region68: #{conv_vae_forward.1} parent=1 // pred_region
      _
    $region69: #{conv_vae_forward.1} parent=1 // pred_fallthru
      _
    // Predicated region
    $region70: #{conv_vae_forward.1} parent=1 // pred_check
      _
    $region71: #{conv_vae_forward.1} parent=1 // pred_check_branch
      %182 = sbr.rel (0) target = $region73
    $region72: #{conv_vae_forward.1} parent=1 // pred_region
      _
    $region73: #{conv_vae_forward.1} parent=1 // pred_fallthru
      _
    // Predicated region
    $region74: #{conv_vae_forward.1} parent=1 // pred_check
      _
    $region75: #{conv_vae_forward.1} parent=1 // pred_check_branch
      %184 = sbr.rel (0) target = $region77
    $region76: #{conv_vae_forward.1} parent=1 // pred_region
      _
    $region77: #{conv_vae_forward.1} parent=1 // pred_fallthru
      _
    // Predicated region
    $region78: #{conv_vae_forward.1} parent=1 // pred_check
      _
    $region79: #{conv_vae_forward.1} parent=1 // pred_check_branch
      %186 = sbr.rel (0) target = $region81
    $region80: #{conv_vae_forward.1} parent=1 // pred_region
      %s188 = ssub.s32 16, 16
      %189 = vsyncadd [#allocation21], %s188
      %s191 = sshll.u32 [#allocation22], 4
      %s192 = int_to_ptr.vmem [resolvable:$true] %s191
      %194 = dma.hbm_to_vmem [thread:$0]  %s19, 16, %s192, [#allocation21]
    $region81: #{conv_vae_forward.1} parent=1 // pred_fallthru
      _
    // Predicated region
    $region82: #{conv_vae_forward.1} parent=1 // pred_check
      _
    $region83: #{conv_vae_forward.1} parent=1 // pred_check_branch
      %196 = sbr.rel (0) target = $region85
    $region84: #{conv_vae_forward.1} parent=1 // pred_region
      _
    $region85: #{conv_vae_forward.1} parent=1 // pred_fallthru
      _
    // Predicated region
    $region86: #{conv_vae_forward.1} parent=1 // pred_check
      _
    $region87: #{conv_vae_forward.1} parent=1 // pred_check_branch
      %198 = sbr.rel (0) target = $region89
    $region88: #{conv_vae_forward.1} parent=1 // pred_region
      _
    $region89: #{conv_vae_forward.1} parent=1 // pred_fallthru
      _
    // Predicated region
    $region90: #{conv_vae_forward.1} parent=1 // pred_check
      _
    $region91: #{conv_vae_forward.1} parent=1 // pred_check_branch
      %200 = sbr.rel (0) target = $region93
    $region92: #{conv_vae_forward.1} parent=1 // pred_region
      %s202 = ssub.s32 16, 16
      %203 = vsyncadd [#allocation24], %s202
      %s205 = sshll.u32 [#allocation23], 4
      %s206 = int_to_ptr.vmem [resolvable:$true] %s205
      %208 = dma.hbm_to_vmem [thread:$0]  %s22, 16, %s206, [#allocation24]
    $region93: #{conv_vae_forward.1} parent=1 // pred_fallthru
      _
    // Predicated region
    $region94: #{conv_vae_forward.1} parent=1 // pred_check
      _
    $region95: #{conv_vae_forward.1} parent=1 // pred_check_branch
      %210 = sbr.rel (0) target = $region97
    $region96: #{conv_vae_forward.1} parent=1 // pred_region
      %211 = dma.done [#allocation3], 32
    $region97: #{conv_vae_forward.1} parent=1 // pred_fallthru
      _
    // Predicated region
    $region98: #{conv_vae_forward.1} parent=1 // pred_check
      _
    $region99: #{conv_vae_forward.1} parent=1 // pred_check_branch
      %213 = sbr.rel (0) target = $region101
    $region100: #{conv_vae_forward.1} parent=1 // pred_region
      %214 = dma.done [#allocation6], 768
    $region101: #{conv_vae_forward.1} parent=1 // pred_fallthru
      _
    // Predicated region
    $region102: #{conv_vae_forward.1} parent=1 // pred_check
      _
    $region103: #{conv_vae_forward.1} parent=1 // pred_check_branch
      %216 = sbr.rel (0) target = $region105
    $region104: #{conv_vae_forward.1} parent=1 // pred_region
      %217 = dma.done [#allocation6], 768
    $region105: #{conv_vae_forward.1} parent=1 // pred_fallthru
      _
    // Predicated region
    $region106: #{conv_vae_forward.1} parent=1 // pred_check
      _
    $region107: #{conv_vae_forward.1} parent=1 // pred_check_branch
      %219 = sbr.rel (0) target = $region109
    $region108: #{conv_vae_forward.1} parent=1 // pred_region
      %220 = dma.done [#allocation9], 16
    $region109: #{conv_vae_forward.1} parent=1 // pred_fallthru
      _
    // Predicated region
    $region110: #{conv_vae_forward.1} parent=1 // pred_check
      _
    $region111: #{conv_vae_forward.1} parent=1 // pred_check_branch
      %222 = sbr.rel (0) target = $region113
    $region112: #{conv_vae_forward.1} parent=1 // pred_region
      %223 = dma.done [#allocation9], 384
    $region113: #{conv_vae_forward.1} parent=1 // pred_fallthru
      _
    // Predicated region
    $region114: #{conv_vae_forward.1} parent=1 // pred_check
      _
    $region115: #{conv_vae_forward.1} parent=1 // pred_check_branch
      %225 = sbr.rel (0) target = $region117
    $region116: #{conv_vae_forward.1} parent=1 // pred_region
      %226 = dma.done [#allocation12], 16
    $region117: #{conv_vae_forward.1} parent=1 // pred_fallthru
      _
    // Predicated region
    $region118: #{conv_vae_forward.1} parent=1 // pred_check
      _
    $region119: #{conv_vae_forward.1} parent=1 // pred_check_branch
      %228 = sbr.rel (0) target = $region121
    $region120: #{conv_vae_forward.1} parent=1 // pred_region
      %229 = dma.done [#allocation12], 16
    $region121: #{conv_vae_forward.1} parent=1 // pred_fallthru
      _
    // Predicated region
    $region122: #{conv_vae_forward.1} parent=1 // pred_check
      _
    $region123: #{conv_vae_forward.1} parent=1 // pred_check_branch
      %231 = sbr.rel (0) target = $region125
    $region124: #{conv_vae_forward.1} parent=1 // pred_region
      %232 = dma.done [#allocation15], 512
    $region125: #{conv_vae_forward.1} parent=1 // pred_fallthru
      _
    // Predicated region
    $region126: #{conv_vae_forward.1} parent=1 // pred_check
      _
    $region127: #{conv_vae_forward.1} parent=1 // pred_check_branch
      %234 = sbr.rel (0) target = $region129
    $region128: #{conv_vae_forward.1} parent=1 // pred_region
      %235 = dma.done [#allocation15], 16
    $region129: #{conv_vae_forward.1} parent=1 // pred_fallthru
      _
    // Predicated region
    $region130: #{conv_vae_forward.1} parent=1 // pred_check
      _
    $region131: #{conv_vae_forward.1} parent=1 // pred_check_branch
      %237 = sbr.rel (0) target = $region133
    $region132: #{conv_vae_forward.1} parent=1 // pred_region
      %238 = dma.done [#allocation18], 512
    $region133: #{conv_vae_forward.1} parent=1 // pred_fallthru
      _
    // Predicated region
    $region134: #{conv_vae_forward.1} parent=1 // pred_check
      _
    $region135: #{conv_vae_forward.1} parent=1 // pred_check_branch
      %240 = sbr.rel (0) target = $region137
    $region136: #{conv_vae_forward.1} parent=1 // pred_region
      %241 = dma.done [#allocation18], 16
    $region137: #{conv_vae_forward.1} parent=1 // pred_fallthru
      _
    // Predicated region
    $region138: #{conv_vae_forward.1} parent=1 // pred_check
      _
    $region139: #{conv_vae_forward.1} parent=1 // pred_check_branch
      %243 = sbr.rel (0) target = $region141
    $region140: #{conv_vae_forward.1} parent=1 // pred_region
      %244 = dma.done [#allocation21], 64
    $region141: #{conv_vae_forward.1} parent=1 // pred_fallthru
      _
    // Predicated region
    $region142: #{conv_vae_forward.1} parent=1 // pred_check
      _
    $region143: #{conv_vae_forward.1} parent=1 // pred_check_branch
      %246 = sbr.rel (0) target = $region145
    $region144: #{conv_vae_forward.1} parent=1 // pred_region
      %247 = dma.done [#allocation21], 16
    $region145: #{conv_vae_forward.1} parent=1 // pred_fallthru
      _
    // Predicated region
    $region146: #{conv_vae_forward.1} parent=1 // pred_check
      _
    $region147: #{conv_vae_forward.1} parent=1 // pred_check_branch
      %249 = sbr.rel (0) target = $region149
    $region148: #{conv_vae_forward.1} parent=1 // pred_region
      %250 = dma.done [#allocation24], 16
    $region149: #{conv_vae_forward.1} parent=1 // pred_fallthru
      _
    %v252 = vld [vmem:[%s0] sm:$0xf]
    %v253 = vld [vmem:[%s0 + $0x4] sm:$0xf]
    %v254 = vld [vmem:[%s0 + $0x8] sm:$0xf]
    %v255 = vld [vmem:[%s0 + $0xc] sm:$0xf]
    %v256 = vld [vmem:[%s0 + $0x10] sm:$0xf]
    %v257 = vld [vmem:[%s0 + $0x14] sm:$0xf]
    %v258 = vld [vmem:[%s0 + $0x18] sm:$0xf]
    %v259 = vld [vmem:[#allocation5] sm:$0xf]
    %v260 = vld [vmem:[#allocation5 + $0x4] sm:$0xf]
    %v261 = vld [vmem:[#allocation5 + $0x8] sm:$0xf]
    %v262 = vld [vmem:[#allocation5 + $0xc] sm:$0x3]
    %v267 = vunpack.c.l.b16 %v259
    %v268 = vunpack.c.l.b16 %v260
    %v269 = vunpack.c.l.b16 %v261
    %v270 = vunpack.c.l.b16 %v262
    %v271 = vpack.c.b16 %v268, %v267
    %v272 = vpack.c.b16 %v270, %v269
    %v280 = vunpack.c.l.b16 %v252
    %v281 = vunpack.c.l.b16 %v253
    %v282 = vunpack.c.l.b16 %v254
    %v283 = vunpack.c.l.b16 %v255
    %v284 = vunpack.c.l.b16 %v256
    %v285 = vunpack.c.l.b16 %v257
    %v286 = vunpack.c.l.b16 %v258
    %v287 = vpack.c.b16 %v281, %v280
    %v288 = vpack.c.b16 %v283, %v282
    %v289 = vpack.c.b16 %v285, %v284
    %v290 = vpack.c.b16 %v286, %v286
    %vm294 = vcmask 457728
    %v296 = vsel %vm294, %v271, 0
    %v299 = vsel %vm294, %v272, 0
    %vm301 = vcmask 1043456
    %v303 = vsel %vm301, %v290, 0
    %305 = vmatprep.subr.bf16.mxu0 0
    %306 = vmatpush1.bf16.msra.mxu0 %v287
    %307 = vmatprep.subr.bf16.mxu0 0
    %308 = vmatpush1.bf16.msra.mxu0 %v288
    %309 = vmatprep.subr.bf16.mxu0 0
    %310 = vmatpush1.bf16.msra.mxu0 %v289
    %311 = vmatprep.subr.bf16.mxu0 0
    %312 = vmatpush1.bf16.msra.mxu0 %v303
    %313 = vmatprep.subr.bf16.mxu0 0
    %314 = vmatpush1.bf16.msra.mxu0 0
    %315 = vmatprep.subr.bf16.mxu0 0
    %316 = vmatpush1.bf16.msra.mxu0 0
    %317 = vmatprep.subr.bf16.mxu0 0
    %318 = vmatpush1.bf16.msra.mxu0 0
    %319 = vmatprep.subr.bf16.mxu0 0
    %320 = vmatpush1.bf16.msra.mxu0 0
    %321 = vmatprep.subr.bf16.mxu0 0
    %322 = vmatpush1.bf16.msra.mxu0 0
    %323 = vmatprep.subr.bf16.mxu0 0
    %324 = vmatpush1.bf16.msra.mxu0 0
    %325 = vmatprep.subr.bf16.mxu0 0
    %326 = vmatpush1.bf16.msra.mxu0 0
    %327 = vmatprep.subr.bf16.mxu0 0
    %328 = vmatpush1.bf16.msra.mxu0 0
    %329 = vmatprep.subr.bf16.mxu0 0
    %330 = vmatpush1.bf16.msra.mxu0 0
    %331 = vmatprep.subr.bf16.mxu0 0
    %332 = vmatpush1.bf16.msra.mxu0 0
    %333 = vmatprep.subr.bf16.mxu0 0
    %334 = vmatpush1.bf16.msra.mxu0 0
    %335 = vmatprep.subr.bf16.mxu0 0
    %336 = vmatpush1.bf16.msra.mxu0 0
    %337 = vmatprep.mubr.bf16.mxu0 0
    %338 = vmatmul.mubr.bf16.gmra.mrb[0].mxu0 %v296
    %v339 = vpop.f32.mrb[0].mxu0
    %v340 = vadd.f32 0.0, %v339
    %v341 = vpop.f32.mrb[0].mxu0
    %v342 = vpop.f32.mrb[0].mxu0
    %v343 = vadd.f32 0.0, %v342
    %v344 = vpop.f32.mrb[0].mxu0
    %345 = vmatprep.mubr.bf16.mxu0 0
    %346 = vmatmul.mubr.bf16.gmra.mrb[0].mxu0 %v299
    %v347 = vpop.f32.mrb[0].mxu0
    %v348 = vadd.f32 0.0, %v347
    %v349 = vpop.f32.mrb[0].mxu0
    %v350 = vpop.f32.mrb[0].mxu0
    %v351 = vadd.f32 0.0, %v350
    %v352 = vpop.f32.mrb[0].mxu0
    %353 = vdwg.mxu0
    %v354 = vpack.c.bf16 %v343, %v340
    %v355 = vpack.c.bf16 %v351, %v348
    %v356 = vld [vmem:[#allocation7] sm:$0xf]
    %v357 = vld [vmem:[#allocation7 + $0x4] sm:$0xf]
    %v358 = vld [vmem:[#allocation7 + $0x8] sm:$0xf]
    %v359 = vld [vmem:[#allocation7 + $0xc] sm:$0x3]
    %s360 = scalar_lea.vmem [#allocation5], 16
    %v361 = vld [vmem:[%s360] sm:$0xf]
    %v362 = vld [vmem:[%s360 + $0x4] sm:$0xf]
    %v363 = vld [vmem:[%s360 + $0x8] sm:$0xf]
    %v364 = vld [vmem:[%s360 + $0xc] sm:$0x3]
    %v369 = vunpack.c.l.b16 %v361
    %v370 = vunpack.c.l.b16 %v362
    %v371 = vunpack.c.l.b16 %v363
    %v372 = vunpack.c.l.b16 %v364
    %v373 = vpack.c.b16 %v370, %v369
    %v374 = vpack.c.b16 %v372, %v371
    %v376 = vsel %vm294, %v373, 0
    %v379 = vsel %vm294, %v374, 0
    %381 = vmatprep.subr.bf16.mxu0 0
    %382 = vmatpush1.bf16.msra.mxu0 %v287
    %383 = vmatprep.subr.bf16.mxu0 0
    %384 = vmatpush1.bf16.msra.mxu0 %v288
    %385 = vmatprep.subr.bf16.mxu0 0
    %386 = vmatpush1.bf16.msra.mxu0 %v289
    %387 = vmatprep.subr.bf16.mxu0 0
    %388 = vmatpush1.bf16.msra.mxu0 %v303
    %389 = vmatprep.subr.bf16.mxu0 0
    %390 = vmatpush1.bf16.msra.mxu0 0
    %391 = vmatprep.subr.bf16.mxu0 0
    %392 = vmatpush1.bf16.msra.mxu0 0
    %393 = vmatprep.subr.bf16.mxu0 0
    %394 = vmatpush1.bf16.msra.mxu0 0
    %395 = vmatprep.subr.bf16.mxu0 0
    %396 = vmatpush1.bf16.msra.mxu0 0
    %397 = vmatprep.subr.bf16.mxu0 0
    %398 = vmatpush1.bf16.msra.mxu0 0
    %399 = vmatprep.subr.bf16.mxu0 0
    %400 = vmatpush1.bf16.msra.mxu0 0
    %401 = vmatprep.subr.bf16.mxu0 0
    %402 = vmatpush1.bf16.msra.mxu0 0
    %403 = vmatprep.subr.bf16.mxu0 0
    %404 = vmatpush1.bf16.msra.mxu0 0
    %405 = vmatprep.subr.bf16.mxu0 0
    %406 = vmatpush1.bf16.msra.mxu0 0
    %407 = vmatprep.subr.bf16.mxu0 0
    %408 = vmatpush1.bf16.msra.mxu0 0
    %409 = vmatprep.subr.bf16.mxu0 0
    %410 = vmatpush1.bf16.msra.mxu0 0
    %411 = vmatprep.subr.bf16.mxu0 0
    %412 = vmatpush1.bf16.msra.mxu0 0
    %413 = vmatprep.mubr.bf16.mxu0 0
    %414 = vmatmul.mubr.bf16.gmra.mrb[0].mxu0 %v376
    %v415 = vpop.f32.mrb[0].mxu0
    %v416 = vadd.f32 0.0, %v415
    %v417 = vpop.f32.mrb[0].mxu0
    %v418 = vpop.f32.mrb[0].mxu0
    %v419 = vadd.f32 0.0, %v418
    %v420 = vpop.f32.mrb[0].mxu0
    %421 = vmatprep.mubr.bf16.mxu0 0
    %422 = vmatmul.mubr.bf16.gmra.mrb[0].mxu0 %v379
    %v423 = vpop.f32.mrb[0].mxu0
    %v424 = vadd.f32 0.0, %v423
    %v425 = vpop.f32.mrb[0].mxu0
    %v426 = vpop.f32.mrb[0].mxu0
    %v427 = vadd.f32 0.0, %v426
    %v428 = vpop.f32.mrb[0].mxu0
    %429 = vdwg.mxu0
    %v430 = vpack.c.bf16 %v419, %v416
    %v431 = vpack.c.bf16 %v427, %v424
    %s432 = scalar_lea.vmem [#allocation7], 16
    %v433 = vld [vmem:[%s432] sm:$0xf]
    %v434 = vld [vmem:[%s432 + $0x4] sm:$0xf]
    %v435 = vld [vmem:[%s432 + $0x8] sm:$0xf]
    %v436 = vld [vmem:[%s432 + $0xc] sm:$0x3]
    %v441 = vunpack.c.l.b16 %v433
    %v442 = vunpack.c.l.b16 %v434
    %v443 = vunpack.c.l.b16 %v435
    %v444 = vunpack.c.l.b16 %v436
    %v445 = vpack.c.b16 %v442, %v441
    %v446 = vpack.c.b16 %v444, %v443
    %vm448 = vcmask 228352
    %v450 = vsel %vm448, %v430, 0
    %v453 = vsel %vm448, %v431, 0
    %vm455 = vcmask 1045504
    %v457 = vsel %vm455, %v446, 0
    %459 = vmatprep.subr.bf16.mxu0 0
    %460 = vmatpush1.bf16.msra.mxu0 %v445
    %461 = vmatprep.subr.bf16.mxu0 0
    %462 = vmatpush1.bf16.msra.mxu0 %v457
    %463 = vmatprep.subr.bf16.mxu0 0
    %464 = vmatpush1.bf16.msra.mxu0 0
    %465 = vmatprep.subr.bf16.mxu0 0
    %466 = vmatpush1.bf16.msra.mxu0 0
    %467 = vmatprep.subr.bf16.mxu0 0
    %468 = vmatpush1.bf16.msra.mxu0 0
    %469 = vmatprep.subr.bf16.mxu0 0
    %470 = vmatpush1.bf16.msra.mxu0 0
    %471 = vmatprep.subr.bf16.mxu0 0
    %472 = vmatpush1.bf16.msra.mxu0 0
    %473 = vmatprep.subr.bf16.mxu0 0
    %474 = vmatpush1.bf16.msra.mxu0 0
    %475 = vmatprep.subr.bf16.mxu0 0
    %476 = vmatpush1.bf16.msra.mxu0 0
    %477 = vmatprep.subr.bf16.mxu0 0
    %478 = vmatpush1.bf16.msra.mxu0 0
    %479 = vmatprep.subr.bf16.mxu0 0
    %480 = vmatpush1.bf16.msra.mxu0 0
    %481 = vmatprep.subr.bf16.mxu0 0
    %482 = vmatpush1.bf16.msra.mxu0 0
    %483 = vmatprep.subr.bf16.mxu0 0
    %484 = vmatpush1.bf16.msra.mxu0 0
    %485 = vmatprep.subr.bf16.mxu0 0
    %486 = vmatpush1.bf16.msra.mxu0 0
    %487 = vmatprep.subr.bf16.mxu0 0
    %488 = vmatpush1.bf16.msra.mxu0 0
    %489 = vmatprep.subr.bf16.mxu0 0
    %490 = vmatpush1.bf16.msra.mxu0 0
    %491 = vmatprep.mubr.bf16.mxu0 0
    %492 = vmatmul.mubr.bf16.gmra.mrb[0].mxu0 %v450
    %v493 = vpop.f32.mrb[0].mxu0
    %v494 = vadd.f32 0.0, %v493
    %v495 = vpop.f32.mrb[0].mxu0
    %v496 = vpop.f32.mrb[0].mxu0
    %v497 = vadd.f32 0.0, %v496
    %v498 = vpop.f32.mrb[0].mxu0
    %499 = vmatprep.mubr.bf16.mxu0 0
    %500 = vmatmul.mubr.bf16.gmra.mrb[0].mxu0 %v453
    %v501 = vpop.f32.mrb[0].mxu0
    %v502 = vadd.f32 0.0, %v501
    %v503 = vpop.f32.mrb[0].mxu0
    %v504 = vpop.f32.mrb[0].mxu0
    %v505 = vadd.f32 0.0, %v504
    %v506 = vpop.f32.mrb[0].mxu0
    %507 = vdwg.mxu0
    %v512 = vunpack.c.l.b16 %v356
    %v513 = vunpack.c.l.b16 %v357
    %v514 = vunpack.c.l.b16 %v358
    %v515 = vunpack.c.l.b16 %v359
    %v516 = vpack.c.b16 %v513, %v512
    %v517 = vpack.c.b16 %v515, %v514
    %v520 = vsel %vm448, %v354, 0
    %v523 = vsel %vm448, %v355, 0
    %v526 = vsel %vm455, %v517, 0
    %528 = vmatprep.subr.bf16.mxu0 0
    %529 = vmatpush1.bf16.msra.mxu0 %v516
    %530 = vmatprep.subr.bf16.mxu0 0
    %531 = vmatpush1.bf16.msra.mxu0 %v526
    %532 = vmatprep.subr.bf16.mxu0 0
    %533 = vmatpush1.bf16.msra.mxu0 0
    %534 = vmatprep.subr.bf16.mxu0 0
    %535 = vmatpush1.bf16.msra.mxu0 0
    %536 = vmatprep.subr.bf16.mxu0 0
    %537 = vmatpush1.bf16.msra.mxu0 0
    %538 = vmatprep.subr.bf16.mxu0 0
    %539 = vmatpush1.bf16.msra.mxu0 0
    %540 = vmatprep.subr.bf16.mxu0 0
    %541 = vmatpush1.bf16.msra.mxu0 0
    %542 = vmatprep.subr.bf16.mxu0 0
    %543 = vmatpush1.bf16.msra.mxu0 0
    %544 = vmatprep.subr.bf16.mxu0 0
    %545 = vmatpush1.bf16.msra.mxu0 0
    %546 = vmatprep.subr.bf16.mxu0 0
    %547 = vmatpush1.bf16.msra.mxu0 0
    %548 = vmatprep.subr.bf16.mxu0 0
    %549 = vmatpush1.bf16.msra.mxu0 0
    %550 = vmatprep.subr.bf16.mxu0 0
    %551 = vmatpush1.bf16.msra.mxu0 0
    %552 = vmatprep.subr.bf16.mxu0 0
    %553 = vmatpush1.bf16.msra.mxu0 0
    %554 = vmatprep.subr.bf16.mxu0 0
    %555 = vmatpush1.bf16.msra.mxu0 0
    %556 = vmatprep.subr.bf16.mxu0 0
    %557 = vmatpush1.bf16.msra.mxu0 0
    %558 = vmatprep.subr.bf16.mxu0 0
    %559 = vmatpush1.bf16.msra.mxu0 0
    %560 = vmatprep.mubr.bf16.mxu0 0
    %561 = vmatmul.mubr.bf16.gmra.mrb[0].mxu0 %v520
    %v562 = vpop.f32.mrb[0].mxu0
    %v563 = vadd.f32 %v494, %v562
    %v564 = vpop.f32.mrb[0].mxu0
    %v565 = vpop.f32.mrb[0].mxu0
    %v566 = vadd.f32 %v497, %v565
    %v567 = vpop.f32.mrb[0].mxu0
    %568 = vmatprep.mubr.bf16.mxu0 0
    %569 = vmatmul.mubr.bf16.gmra.mrb[0].mxu0 %v523
    %v570 = vpop.f32.mrb[0].mxu0
    %v571 = vadd.f32 %v502, %v570
    %v572 = vpop.f32.mrb[0].mxu0
    %v573 = vpop.f32.mrb[0].mxu0
    %v574 = vadd.f32 %v505, %v573
    %v575 = vpop.f32.mrb[0].mxu0
    %576 = vdwg.mxu0
    %s577 = scalar_lea.vmem [#allocation5], 32
    %v578 = vld [vmem:[%s577] sm:$0xf]
    %v579 = vld [vmem:[%s577 + $0x4] sm:$0xf]
    %v580 = vld [vmem:[%s577 + $0x8] sm:$0xf]
    %v581 = vld [vmem:[%s577 + $0xc] sm:$0x3]
    %v586 = vunpack.c.l.b16 %v578
    %v587 = vunpack.c.l.b16 %v579
    %v588 = vunpack.c.l.b16 %v580
    %v589 = vunpack.c.l.b16 %v581
    %v590 = vpack.c.b16 %v587, %v586
    %v591 = vpack.c.b16 %v589, %v588
    %v593 = vsel %vm294, %v590, 0
    %v596 = vsel %vm294, %v591, 0
    %598 = vmatprep.subr.bf16.mxu0 0
    %599 = vmatpush1.bf16.msra.mxu0 %v287
    %600 = vmatprep.subr.bf16.mxu0 0
    %601 = vmatpush1.bf16.msra.mxu0 %v288
    %602 = vmatprep.subr.bf16.mxu0 0
    %603 = vmatpush1.bf16.msra.mxu0 %v289
    %604 = vmatprep.subr.bf16.mxu0 0
    %605 = vmatpush1.bf16.msra.mxu0 %v303
    %606 = vmatprep.subr.bf16.mxu0 0
    %607 = vmatpush1.bf16.msra.mxu0 0
    %608 = vmatprep.subr.bf16.mxu0 0
    %609 = vmatpush1.bf16.msra.mxu0 0
    %610 = vmatprep.subr.bf16.mxu0 0
    %611 = vmatpush1.bf16.msra.mxu0 0
    %612 = vmatprep.subr.bf16.mxu0 0
    %613 = vmatpush1.bf16.msra.mxu0 0
    %614 = vmatprep.subr.bf16.mxu0 0
    %615 = vmatpush1.bf16.msra.mxu0 0
    %616 = vmatprep.subr.bf16.mxu0 0
    %617 = vmatpush1.bf16.msra.mxu0 0
    %618 = vmatprep.subr.bf16.mxu0 0
    %619 = vmatpush1.bf16.msra.mxu0 0
    %620 = vmatprep.subr.bf16.mxu0 0
    %621 = vmatpush1.bf16.msra.mxu0 0
    %622 = vmatprep.subr.bf16.mxu0 0
    %623 = vmatpush1.bf16.msra.mxu0 0
    %624 = vmatprep.subr.bf16.mxu0 0
    %625 = vmatpush1.bf16.msra.mxu0 0
    %626 = vmatprep.subr.bf16.mxu0 0
    %627 = vmatpush1.bf16.msra.mxu0 0
    %628 = vmatprep.subr.bf16.mxu0 0
    %629 = vmatpush1.bf16.msra.mxu0 0
    %630 = vmatprep.mubr.bf16.mxu0 0
    %631 = vmatmul.mubr.bf16.gmra.mrb[0].mxu0 %v593
    %v632 = vpop.f32.mrb[0].mxu0
    %v633 = vadd.f32 0.0, %v632
    %v634 = vpop.f32.mrb[0].mxu0
    %v635 = vpop.f32.mrb[0].mxu0
    %v636 = vadd.f32 0.0, %v635
    %v637 = vpop.f32.mrb[0].mxu0
    %638 = vmatprep.mubr.bf16.mxu0 0
    %639 = vmatmul.mubr.bf16.gmra.mrb[0].mxu0 %v596
    %v640 = vpop.f32.mrb[0].mxu0
    %v641 = vadd.f32 0.0, %v640
    %v642 = vpop.f32.mrb[0].mxu0
    %v643 = vpop.f32.mrb[0].mxu0
    %v644 = vadd.f32 0.0, %v643
    %v645 = vpop.f32.mrb[0].mxu0
    %646 = vdwg.mxu0
    %v647 = vpack.c.bf16 %v636, %v633
    %v648 = vpack.c.bf16 %v644, %v641
    %s649 = scalar_lea.vmem [#allocation7], 32
    %v650 = vld [vmem:[%s649] sm:$0xf]
    %v651 = vld [vmem:[%s649 + $0x4] sm:$0xf]
    %v652 = vld [vmem:[%s649 + $0x8] sm:$0xf]
    %v653 = vld [vmem:[%s649 + $0xc] sm:$0x3]
    %v658 = vunpack.c.l.b16 %v650
    %v659 = vunpack.c.l.b16 %v651
    %v660 = vunpack.c.l.b16 %v652
    %v661 = vunpack.c.l.b16 %v653
    %v662 = vpack.c.b16 %v659, %v658
    %v663 = vpack.c.b16 %v661, %v660
    %v666 = vsel %vm448, %v647, 0
    %v669 = vsel %vm448, %v648, 0
    %v672 = vsel %vm455, %v663, 0
    %674 = vmatprep.subr.bf16.mxu0 0
    %675 = vmatpush1.bf16.msra.mxu0 %v662
    %676 = vmatprep.subr.bf16.mxu0 0
    %677 = vmatpush1.bf16.msra.mxu0 %v672
    %678 = vmatprep.subr.bf16.mxu0 0
    %679 = vmatpush1.bf16.msra.mxu0 0
    %680 = vmatprep.subr.bf16.mxu0 0
    %681 = vmatpush1.bf16.msra.mxu0 0
    %682 = vmatprep.subr.bf16.mxu0 0
    %683 = vmatpush1.bf16.msra.mxu0 0
    %684 = vmatprep.subr.bf16.mxu0 0
    %685 = vmatpush1.bf16.msra.mxu0 0
    %686 = vmatprep.subr.bf16.mxu0 0
    %687 = vmatpush1.bf16.msra.mxu0 0
    %688 = vmatprep.subr.bf16.mxu0 0
    %689 = vmatpush1.bf16.msra.mxu0 0
    %690 = vmatprep.subr.bf16.mxu0 0
    %691 = vmatpush1.bf16.msra.mxu0 0
    %692 = vmatprep.subr.bf16.mxu0 0
    %693 = vmatpush1.bf16.msra.mxu0 0
    %694 = vmatprep.subr.bf16.mxu0 0
    %695 = vmatpush1.bf16.msra.mxu0 0
    %696 = vmatprep.subr.bf16.mxu0 0
    %697 = vmatpush1.bf16.msra.mxu0 0
    %698 = vmatprep.subr.bf16.mxu0 0
    %699 = vmatpush1.bf16.msra.mxu0 0
    %700 = vmatprep.subr.bf16.mxu0 0
    %701 = vmatpush1.bf16.msra.mxu0 0
    %702 = vmatprep.subr.bf16.mxu0 0
    %703 = vmatpush1.bf16.msra.mxu0 0
    %704 = vmatprep.subr.bf16.mxu0 0
    %705 = vmatpush1.bf16.msra.mxu0 0
    %706 = vmatprep.mubr.bf16.mxu0 0
    %707 = vmatmul.mubr.bf16.gmra.mrb[0].mxu0 %v666
    %v708 = vpop.f32.mrb[0].mxu0
    %v709 = vadd.f32 0.0, %v708
    %v710 = vpop.f32.mrb[0].mxu0
    %v711 = vpop.f32.mrb[0].mxu0
    %v712 = vadd.f32 0.0, %v711
    %v713 = vpop.f32.mrb[0].mxu0
    %714 = vmatprep.mubr.bf16.mxu0 0
    %715 = vmatmul.mubr.bf16.gmra.mrb[0].mxu0 %v669
    %v716 = vpop.f32.mrb[0].mxu0
    %v717 = vadd.f32 0.0, %v716
    %v718 = vpop.f32.mrb[0].mxu0
    %v719 = vpop.f32.mrb[0].mxu0
    %v720 = vadd.f32 0.0, %v719
    %v721 = vpop.f32.mrb[0].mxu0
    %722 = vdwg.mxu0
    %v723 = vadd.f32 %v563, %v709
    %v724 = vadd.f32 %v566, %v712
    %v725 = vadd.f32 %v571, %v717
    %v726 = vadd.f32 %v574, %v720
    %v727 = vld [vmem:[#allocation8] sm:$0x1]
    %v729 = vlaneseq
    %v730 = vshrl.u32 %v729, 7
    %v731 = vsub.s32 0, %v730
    %v732 = vrot.slane %v727, %v731
    %v734 = vadd.f32 %v723, %v732
    %v735 = vadd.f32 %v724, %v732
    %v736 = vadd.f32 %v725, %v732
    %v737 = vadd.f32 %v726, %v732
    %v738 = vmax.f32 %v734, 0.0
    %v739 = vmax.f32 %v735, 0.0
    %v740 = vmax.f32 %v736, 0.0
    %v741 = vmax.f32 %v737, 0.0
    %v742 = vpack.c.bf16 %v739, %v738
    %v743 = vpack.c.bf16 %v741, %v740
    %v744 = vld [vmem:[#allocation10] sm:$0xf]
    %v745 = vld [vmem:[#allocation10 + $0x4] sm:$0x7]
    %v748 = vunpack.c.l.b16 %v744
    %v749 = vunpack.c.l.b16 %v745
    %v750 = vpack.c.b16 %v749, %v748
    %v752 = vsel %vm448, %v750, 0
    %v755 = vsel %vm455, %v743, 0
    %757 = vmatprep.subr.bf16.mxu0 0
    %758 = vmatpush1.bf16.msra.mxu0 %v742
    %759 = vmatprep.subr.bf16.mxu0 0
    %760 = vmatpush1.bf16.msra.mxu0 %v755
    %761 = vmatprep.subr.bf16.mxu0 0
    %762 = vmatpush1.bf16.msra.mxu0 0
    %763 = vmatprep.subr.bf16.mxu0 0
    %764 = vmatpush1.bf16.msra.mxu0 0
    %765 = vmatprep.subr.bf16.mxu0 0
    %766 = vmatpush1.bf16.msra.mxu0 0
    %767 = vmatprep.subr.bf16.mxu0 0
    %768 = vmatpush1.bf16.msra.mxu0 0
    %769 = vmatprep.subr.bf16.mxu0 0
    %770 = vmatpush1.bf16.msra.mxu0 0
    %771 = vmatprep.subr.bf16.mxu0 0
    %772 = vmatpush1.bf16.msra.mxu0 0
    %773 = vmatprep.subr.bf16.mxu0 0
    %774 = vmatpush1.bf16.msra.mxu0 0
    %775 = vmatprep.subr.bf16.mxu0 0
    %776 = vmatpush1.bf16.msra.mxu0 0
    %777 = vmatprep.subr.bf16.mxu0 0
    %778 = vmatpush1.bf16.msra.mxu0 0
    %779 = vmatprep.subr.bf16.mxu0 0
    %780 = vmatpush1.bf16.msra.mxu0 0
    %781 = vmatprep.subr.bf16.mxu0 0
    %782 = vmatpush1.bf16.msra.mxu0 0
    %783 = vmatprep.subr.bf16.mxu0 0
    %784 = vmatpush1.bf16.msra.mxu0 0
    %785 = vmatprep.subr.bf16.mxu0 0
    %786 = vmatpush1.bf16.msra.mxu0 0
    %787 = vmatprep.subr.bf16.mxu0 0
    %788 = vmatpush1.bf16.msra.mxu0 0
    %789 = vmatprep.mubr.bf16.mxu0 0
    %790 = vmatmul.mubr.bf16.gmra.mrb[0].mxu0 %v752
    %v791 = vpop.f32.mrb[0].mxu0
    %v792 = vadd.f32 0.0, %v791
    %v793 = vpop.f32.mrb[0].mxu0
    %v794 = vpop.f32.mrb[0].mxu0
    %v795 = vadd.f32 0.0, %v794
    %v796 = vpop.f32.mrb[0].mxu0
    %797 = vdwg.mxu0
    %v798 = vpack.c.bf16 %v795, %v792
    %v799 = vld [vmem:[%s6] sm:$0xf]
    %v800 = vld [vmem:[%s6 + $0x4] sm:$0xf]
    %v801 = vld [vmem:[%s6 + $0x8] sm:$0xf]
    %v802 = vld [vmem:[%s6 + $0xc] sm:$0xf]
    %v803 = vld [vmem:[%s6 + $0x10] sm:$0xf]
    %v804 = vld [vmem:[%s6 + $0x14] sm:$0xf]
    %v805 = vld [vmem:[%s6 + $0x18] sm:$0xf]
    %v806 = vld [vmem:[%s6 + $0x1c] sm:$0xf]
    %v807 = vld [vmem:[%s6 + $0x20] sm:$0xf]
    %v808 = vld [vmem:[%s6 + $0x24] sm:$0xf]
    %v809 = vld [vmem:[%s6 + $0x28] sm:$0xf]
    %v810 = vld [vmem:[%s6 + $0x2c] sm:$0xf]
    %v811 = vld [vmem:[%s6 + $0x30] sm:$0xf]
    %v812 = vld [vmem:[%s6 + $0x34] sm:$0xf]
    %s813 = scalar_lea.vmem [#allocation10], 8
    %v814 = vld [vmem:[%s813] sm:$0xf]
    %v815 = vld [vmem:[%s813 + $0x4] sm:$0x7]
    %v818 = vunpack.c.l.b16 %v814
    %v819 = vunpack.c.l.b16 %v815
    %v820 = vpack.c.b16 %v819, %v818
    %v822 = vsel %vm448, %v820, 0
    %824 = vmatprep.subr.bf16.mxu0 0
    %825 = vmatpush1.bf16.msra.mxu0 %v742
    %826 = vmatprep.subr.bf16.mxu0 0
    %827 = vmatpush1.bf16.msra.mxu0 %v755
    %828 = vmatprep.subr.bf16.mxu0 0
    %829 = vmatpush1.bf16.msra.mxu0 0
    %830 = vmatprep.subr.bf16.mxu0 0
    %831 = vmatpush1.bf16.msra.mxu0 0
    %832 = vmatprep.subr.bf16.mxu0 0
    %833 = vmatpush1.bf16.msra.mxu0 0
    %834 = vmatprep.subr.bf16.mxu0 0
    %835 = vmatpush1.bf16.msra.mxu0 0
    %836 = vmatprep.subr.bf16.mxu0 0
    %837 = vmatpush1.bf16.msra.mxu0 0
    %838 = vmatprep.subr.bf16.mxu0 0
    %839 = vmatpush1.bf16.msra.mxu0 0
    %840 = vmatprep.subr.bf16.mxu0 0
    %841 = vmatpush1.bf16.msra.mxu0 0
    %842 = vmatprep.subr.bf16.mxu0 0
    %843 = vmatpush1.bf16.msra.mxu0 0
    %844 = vmatprep.subr.bf16.mxu0 0
    %845 = vmatpush1.bf16.msra.mxu0 0
    %846 = vmatprep.subr.bf16.mxu0 0
    %847 = vmatpush1.bf16.msra.mxu0 0
    %848 = vmatprep.subr.bf16.mxu0 0
    %849 = vmatpush1.bf16.msra.mxu0 0
    %850 = vmatprep.subr.bf16.mxu0 0
    %851 = vmatpush1.bf16.msra.mxu0 0
    %852 = vmatprep.subr.bf16.mxu0 0
    %853 = vmatpush1.bf16.msra.mxu0 0
    %854 = vmatprep.subr.bf16.mxu0 0
    %855 = vmatpush1.bf16.msra.mxu0 0
    %856 = vmatprep.mubr.bf16.mxu0 0
    %857 = vmatmul.mubr.bf16.gmra.mrb[0].mxu0 %v822
    %v858 = vpop.f32.mrb[0].mxu0
    %v859 = vadd.f32 0.0, %v858
    %v860 = vpop.f32.mrb[0].mxu0
    %v861 = vpop.f32.mrb[0].mxu0
    %v862 = vadd.f32 0.0, %v861
    %v863 = vpop.f32.mrb[0].mxu0
    %864 = vdwg.mxu0
    %v865 = vpack.c.bf16 %v862, %v859
    %s866 = scalar_lea.vmem %s6, 56
    %v867 = vld [vmem:[%s866] sm:$0xf]
    %v868 = vld [vmem:[%s866 + $0x4] sm:$0xf]
    %v869 = vld [vmem:[%s866 + $0x8] sm:$0xf]
    %v870 = vld [vmem:[%s866 + $0xc] sm:$0xf]
    %v871 = vld [vmem:[%s866 + $0x10] sm:$0xf]
    %v872 = vld [vmem:[%s866 + $0x14] sm:$0xf]
    %v873 = vld [vmem:[%s866 + $0x18] sm:$0xf]
    %v874 = vld [vmem:[%s866 + $0x1c] sm:$0xf]
    %v875 = vld [vmem:[%s866 + $0x20] sm:$0xf]
    %v876 = vld [vmem:[%s866 + $0x24] sm:$0xf]
    %v877 = vld [vmem:[%s866 + $0x28] sm:$0xf]
    %v878 = vld [vmem:[%s866 + $0x2c] sm:$0xf]
    %v879 = vld [vmem:[%s866 + $0x30] sm:$0xf]
    %v880 = vld [vmem:[%s866 + $0x34] sm:$0xf]
    %v895 = vunpack.c.l.b16 %v867
    %v896 = vunpack.c.l.b16 %v868
    %v897 = vunpack.c.l.b16 %v869
    %v898 = vunpack.c.l.b16 %v870
    %v899 = vunpack.c.l.b16 %v871
    %v900 = vunpack.c.l.b16 %v872
    %v901 = vunpack.c.l.b16 %v873
    %v902 = vunpack.c.l.b16 %v874
    %v903 = vunpack.c.l.b16 %v875
    %v904 = vunpack.c.l.b16 %v876
    %v905 = vunpack.c.l.b16 %v877
    %v906 = vunpack.c.l.b16 %v878
    %v907 = vunpack.c.l.b16 %v879
    %v908 = vunpack.c.l.b16 %v880
    %v909 = vpack.c.b16 %v896, %v895
    %v910 = vpack.c.b16 %v898, %v897
    %v911 = vpack.c.b16 %v900, %v899
    %v912 = vpack.c.b16 %v902, %v901
    %v913 = vpack.c.b16 %v904, %v903
    %v914 = vpack.c.b16 %v906, %v905
    %v915 = vpack.c.b16 %v908, %v907
    %vm923 = vcmask 916480
    %v925 = vsel %vm923, %v865, 0
    %927 = vmatprep.subr.bf16.mxu0 0
    %928 = vmatpush1.bf16.msra.mxu0 %v909
    %929 = vmatprep.subr.bf16.mxu0 0
    %930 = vmatpush1.bf16.msra.mxu0 %v910
    %931 = vmatprep.subr.bf16.mxu0 0
    %932 = vmatpush1.bf16.msra.mxu0 %v911
    %933 = vmatprep.subr.bf16.mxu0 0
    %934 = vmatpush1.bf16.msra.mxu0 %v912
    %935 = vmatprep.subr.bf16.mxu0 0
    %936 = vmatpush1.bf16.msra.mxu0 %v913
    %937 = vmatprep.subr.bf16.mxu0 0
    %938 = vmatpush1.bf16.msra.mxu0 %v914
    %939 = vmatprep.subr.bf16.mxu0 0
    %940 = vmatpush1.bf16.msra.mxu0 %v915
    %941 = vmatprep.subr.bf16.mxu0 0
    %942 = vmatpush1.bf16.msra.mxu0 0
    %943 = vmatprep.subr.bf16.mxu0 0
    %944 = vmatpush1.bf16.msra.mxu0 0
    %945 = vmatprep.subr.bf16.mxu0 0
    %946 = vmatpush1.bf16.msra.mxu0 0
    %947 = vmatprep.subr.bf16.mxu0 0
    %948 = vmatpush1.bf16.msra.mxu0 0
    %949 = vmatprep.subr.bf16.mxu0 0
    %950 = vmatpush1.bf16.msra.mxu0 0
    %951 = vmatprep.subr.bf16.mxu0 0
    %952 = vmatpush1.bf16.msra.mxu0 0
    %953 = vmatprep.subr.bf16.mxu0 0
    %954 = vmatpush1.bf16.msra.mxu0 0
    %955 = vmatprep.subr.bf16.mxu0 0
    %956 = vmatpush1.bf16.msra.mxu0 0
    %957 = vmatprep.subr.bf16.mxu0 0
    %958 = vmatpush1.bf16.msra.mxu0 0
    %959 = vmatprep.mubr.bf16.mxu0 0
    %960 = vmatmul.mubr.bf16.gmra.mrb[0].mxu0 %v925
    %v961 = vpop.f32.mrb[0].mxu0
    %v962 = vadd.f32 0.0, %v961
    %v963 = vpop.f32.mrb[0].mxu0
    %v964 = vpop.f32.mrb[0].mxu0
    %v965 = vadd.f32 0.0, %v964
    %v966 = vpop.f32.mrb[0].mxu0
    %967 = vdwg.mxu0
    %v982 = vunpack.c.l.b16 %v799
    %v983 = vunpack.c.l.b16 %v800
    %v984 = vunpack.c.l.b16 %v801
    %v985 = vunpack.c.l.b16 %v802
    %v986 = vunpack.c.l.b16 %v803
    %v987 = vunpack.c.l.b16 %v804
    %v988 = vunpack.c.l.b16 %v805
    %v989 = vunpack.c.l.b16 %v806
    %v990 = vunpack.c.l.b16 %v807
    %v991 = vunpack.c.l.b16 %v808
    %v992 = vunpack.c.l.b16 %v809
    %v993 = vunpack.c.l.b16 %v810
    %v994 = vunpack.c.l.b16 %v811
    %v995 = vunpack.c.l.b16 %v812
    %v996 = vpack.c.b16 %v983, %v982
    %v997 = vpack.c.b16 %v985, %v984
    %v998 = vpack.c.b16 %v987, %v986
    %v999 = vpack.c.b16 %v989, %v988
    %v1000 = vpack.c.b16 %v991, %v990
    %v1001 = vpack.c.b16 %v993, %v992
    %v1002 = vpack.c.b16 %v995, %v994
    %v1011 = vsel %vm923, %v798, 0
    %1013 = vmatprep.subr.bf16.mxu0 0
    %1014 = vmatpush1.bf16.msra.mxu0 %v996
    %1015 = vmatprep.subr.bf16.mxu0 0
    %1016 = vmatpush1.bf16.msra.mxu0 %v997
    %1017 = vmatprep.subr.bf16.mxu0 0
    %1018 = vmatpush1.bf16.msra.mxu0 %v998
    %1019 = vmatprep.subr.bf16.mxu0 0
    %1020 = vmatpush1.bf16.msra.mxu0 %v999
    %1021 = vmatprep.subr.bf16.mxu0 0
    %1022 = vmatpush1.bf16.msra.mxu0 %v1000
    %1023 = vmatprep.subr.bf16.mxu0 0
    %1024 = vmatpush1.bf16.msra.mxu0 %v1001
    %1025 = vmatprep.subr.bf16.mxu0 0
    %1026 = vmatpush1.bf16.msra.mxu0 %v1002
    %1027 = vmatprep.subr.bf16.mxu0 0
    %1028 = vmatpush1.bf16.msra.mxu0 0
    %1029 = vmatprep.subr.bf16.mxu0 0
    %1030 = vmatpush1.bf16.msra.mxu0 0
    %1031 = vmatprep.subr.bf16.mxu0 0
    %1032 = vmatpush1.bf16.msra.mxu0 0
    %1033 = vmatprep.subr.bf16.mxu0 0
    %1034 = vmatpush1.bf16.msra.mxu0 0
    %1035 = vmatprep.subr.bf16.mxu0 0
    %1036 = vmatpush1.bf16.msra.mxu0 0
    %1037 = vmatprep.subr.bf16.mxu0 0
    %1038 = vmatpush1.bf16.msra.mxu0 0
    %1039 = vmatprep.subr.bf16.mxu0 0
    %1040 = vmatpush1.bf16.msra.mxu0 0
    %1041 = vmatprep.subr.bf16.mxu0 0
    %1042 = vmatpush1.bf16.msra.mxu0 0
    %1043 = vmatprep.subr.bf16.mxu0 0
    %1044 = vmatpush1.bf16.msra.mxu0 0
    %1045 = vmatprep.mubr.bf16.mxu0 0
    %1046 = vmatmul.mubr.bf16.gmra.mrb[0].mxu0 %v1011
    %v1047 = vpop.f32.mrb[0].mxu0
    %v1048 = vadd.f32 %v962, %v1047
    %v1049 = vpop.f32.mrb[0].mxu0
    %v1050 = vpop.f32.mrb[0].mxu0
    %v1051 = vadd.f32 %v965, %v1050
    %v1052 = vpop.f32.mrb[0].mxu0
    %1053 = vdwg.mxu0
    %s1054 = scalar_lea.vmem [#allocation10], 16
    %v1055 = vld [vmem:[%s1054] sm:$0xf]
    %v1056 = vld [vmem:[%s1054 + $0x4] sm:$0x7]
    %v1059 = vunpack.c.l.b16 %v1055
    %v1060 = vunpack.c.l.b16 %v1056
    %v1061 = vpack.c.b16 %v1060, %v1059
    %v1063 = vsel %vm448, %v1061, 0
    %1065 = vmatprep.subr.bf16.mxu0 0
    %1066 = vmatpush1.bf16.msra.mxu0 %v742
    %1067 = vmatprep.subr.bf16.mxu0 0
    %1068 = vmatpush1.bf16.msra.mxu0 %v755
    %1069 = vmatprep.subr.bf16.mxu0 0
    %1070 = vmatpush1.bf16.msra.mxu0 0
    %1071 = vmatprep.subr.bf16.mxu0 0
    %1072 = vmatpush1.bf16.msra.mxu0 0
    %1073 = vmatprep.subr.bf16.mxu0 0
    %1074 = vmatpush1.bf16.msra.mxu0 0
    %1075 = vmatprep.subr.bf16.mxu0 0
    %1076 = vmatpush1.bf16.msra.mxu0 0
    %1077 = vmatprep.subr.bf16.mxu0 0
    %1078 = vmatpush1.bf16.msra.mxu0 0
    %1079 = vmatprep.subr.bf16.mxu0 0
    %1080 = vmatpush1.bf16.msra.mxu0 0
    %1081 = vmatprep.subr.bf16.mxu0 0
    %1082 = vmatpush1.bf16.msra.mxu0 0
    %1083 = vmatprep.subr.bf16.mxu0 0
    %1084 = vmatpush1.bf16.msra.mxu0 0
    %1085 = vmatprep.subr.bf16.mxu0 0
    %1086 = vmatpush1.bf16.msra.mxu0 0
    %1087 = vmatprep.subr.bf16.mxu0 0
    %1088 = vmatpush1.bf16.msra.mxu0 0
    %1089 = vmatprep.subr.bf16.mxu0 0
    %1090 = vmatpush1.bf16.msra.mxu0 0
    %1091 = vmatprep.subr.bf16.mxu0 0
    %1092 = vmatpush1.bf16.msra.mxu0 0
    %1093 = vmatprep.subr.bf16.mxu0 0
    %1094 = vmatpush1.bf16.msra.mxu0 0
    %1095 = vmatprep.subr.bf16.mxu0 0
    %1096 = vmatpush1.bf16.msra.mxu0 0
    %1097 = vmatprep.mubr.bf16.mxu0 0
    %1098 = vmatmul.mubr.bf16.gmra.mrb[0].mxu0 %v1063
    %v1099 = vpop.f32.mrb[0].mxu0
    %v1100 = vadd.f32 0.0, %v1099
    %v1101 = vpop.f32.mrb[0].mxu0
    %v1102 = vpop.f32.mrb[0].mxu0
    %v1103 = vadd.f32 0.0, %v1102
    %v1104 = vpop.f32.mrb[0].mxu0
    %1105 = vdwg.mxu0
    %v1106 = vpack.c.bf16 %v1103, %v1100
    %s1107 = scalar_lea.vmem %s6, 112
    %v1108 = vld [vmem:[%s1107] sm:$0xf]
    %v1109 = vld [vmem:[%s1107 + $0x4] sm:$0xf]
    %v1110 = vld [vmem:[%s1107 + $0x8] sm:$0xf]
    %v1111 = vld [vmem:[%s1107 + $0xc] sm:$0xf]
    %v1112 = vld [vmem:[%s1107 + $0x10] sm:$0xf]
    %v1113 = vld [vmem:[%s1107 + $0x14] sm:$0xf]
    %v1114 = vld [vmem:[%s1107 + $0x18] sm:$0xf]
    %v1115 = vld [vmem:[%s1107 + $0x1c] sm:$0xf]
    %v1116 = vld [vmem:[%s1107 + $0x20] sm:$0xf]
    %v1117 = vld [vmem:[%s1107 + $0x24] sm:$0xf]
    %v1118 = vld [vmem:[%s1107 + $0x28] sm:$0xf]
    %v1119 = vld [vmem:[%s1107 + $0x2c] sm:$0xf]
    %v1120 = vld [vmem:[%s1107 + $0x30] sm:$0xf]
    %v1121 = vld [vmem:[%s1107 + $0x34] sm:$0xf]
    %v1136 = vunpack.c.l.b16 %v1108
    %v1137 = vunpack.c.l.b16 %v1109
    %v1138 = vunpack.c.l.b16 %v1110
    %v1139 = vunpack.c.l.b16 %v1111
    %v1140 = vunpack.c.l.b16 %v1112
    %v1141 = vunpack.c.l.b16 %v1113
    %v1142 = vunpack.c.l.b16 %v1114
    %v1143 = vunpack.c.l.b16 %v1115
    %v1144 = vunpack.c.l.b16 %v1116
    %v1145 = vunpack.c.l.b16 %v1117
    %v1146 = vunpack.c.l.b16 %v1118
    %v1147 = vunpack.c.l.b16 %v1119
    %v1148 = vunpack.c.l.b16 %v1120
    %v1149 = vunpack.c.l.b16 %v1121
    %v1150 = vpack.c.b16 %v1137, %v1136
    %v1151 = vpack.c.b16 %v1139, %v1138
    %v1152 = vpack.c.b16 %v1141, %v1140
    %v1153 = vpack.c.b16 %v1143, %v1142
    %v1154 = vpack.c.b16 %v1145, %v1144
    %v1155 = vpack.c.b16 %v1147, %v1146
    %v1156 = vpack.c.b16 %v1149, %v1148
    %v1165 = vsel %vm923, %v1106, 0
    %1167 = vmatprep.subr.bf16.mxu0 0
    %1168 = vmatpush1.bf16.msra.mxu0 %v1150
    %1169 = vmatprep.subr.bf16.mxu0 0
    %1170 = vmatpush1.bf16.msra.mxu0 %v1151
    %1171 = vmatprep.subr.bf16.mxu0 0
    %1172 = vmatpush1.bf16.msra.mxu0 %v1152
    %1173 = vmatprep.subr.bf16.mxu0 0
    %1174 = vmatpush1.bf16.msra.mxu0 %v1153
    %1175 = vmatprep.subr.bf16.mxu0 0
    %1176 = vmatpush1.bf16.msra.mxu0 %v1154
    %1177 = vmatprep.subr.bf16.mxu0 0
    %1178 = vmatpush1.bf16.msra.mxu0 %v1155
    %1179 = vmatprep.subr.bf16.mxu0 0
    %1180 = vmatpush1.bf16.msra.mxu0 %v1156
    %1181 = vmatprep.subr.bf16.mxu0 0
    %1182 = vmatpush1.bf16.msra.mxu0 0
    %1183 = vmatprep.subr.bf16.mxu0 0
    %1184 = vmatpush1.bf16.msra.mxu0 0
    %1185 = vmatprep.subr.bf16.mxu0 0
    %1186 = vmatpush1.bf16.msra.mxu0 0
    %1187 = vmatprep.subr.bf16.mxu0 0
    %1188 = vmatpush1.bf16.msra.mxu0 0
    %1189 = vmatprep.subr.bf16.mxu0 0
    %1190 = vmatpush1.bf16.msra.mxu0 0
    %1191 = vmatprep.subr.bf16.mxu0 0
    %1192 = vmatpush1.bf16.msra.mxu0 0
    %1193 = vmatprep.subr.bf16.mxu0 0
    %1194 = vmatpush1.bf16.msra.mxu0 0
    %1195 = vmatprep.subr.bf16.mxu0 0
    %1196 = vmatpush1.bf16.msra.mxu0 0
    %1197 = vmatprep.subr.bf16.mxu0 0
    %1198 = vmatpush1.bf16.msra.mxu0 0
    %1199 = vmatprep.mubr.bf16.mxu0 0
    %1200 = vmatmul.mubr.bf16.gmra.mrb[0].mxu0 %v1165
    %v1201 = vpop.f32.mrb[0].mxu0
    %v1202 = vadd.f32 0.0, %v1201
    %v1203 = vpop.f32.mrb[0].mxu0
    %v1204 = vpop.f32.mrb[0].mxu0
    %v1205 = vadd.f32 0.0, %v1204
    %v1206 = vpop.f32.mrb[0].mxu0
    %1207 = vdwg.mxu0
    %v1208 = vadd.f32 %v1048, %v1202
    %v1209 = vadd.f32 %v1051, %v1205
    %v1210 = vld [vmem:[#allocation11] sm:$0x1]
    %v1212 = vlaneseq
    %v1213 = vshrl.u32 %v1212, 7
    %v1214 = vsub.s32 0, %v1213
    %v1215 = vrot.slane %v1210, %v1214
    %v1217 = vadd.f32 %v1208, %v1215
    %v1218 = vadd.f32 %v1209, %v1215
    %v1219 = vmax.f32 %v1217, 0.0
    %v1220 = vmax.f32 %v1218, 0.0
    %v1221 = vlaneseq
    %v1222 = vand.u32 %v1221, 127
    %v1223 = vlaneseq
    %v1224 = vshrl.u32 %v1223, 7
    %v1225 = vmul.u32 %v1224, 7
    %vm1226 = vcmp.ge.s32.totalorder %v1222, %v1225
    %v1227 = vadd.s32 %v1225, 7
    %vm1228 = vcmp.lt.s32.totalorder %v1222, %v1227
    %vm1229 = vmand %vm1226, %vm1228
    %v1230 = vsel %vm1229, 1, 0
    %v1231 = vcvt.s32.f32 %v1230
    %vm1232 = vcmask 113664
    %v1234 = vsel %vm1232, %v1231, 0
    %v1237 = vsel %vm455, %v1220, 0
    %1239 = vmatprep.subr.mxu0 0.0
    %1240 = vmatpush1.msra.mxu0 %v1219
    %1241 = vmatprep.subr.mxu0 0.0
    %1242 = vmatpush1.msra.mxu0 %v1237
    %1243 = vmatprep.subr.mxu0 0.0
    %1244 = vmatpush1.msra.mxu0 0.0
    %1245 = vmatprep.subr.mxu0 0.0
    %1246 = vmatpush1.msra.mxu0 0.0
    %1247 = vmatprep.subr.mxu0 0.0
    %1248 = vmatpush1.msra.mxu0 0.0
    %1249 = vmatprep.subr.mxu0 0.0
    %1250 = vmatpush1.msra.mxu0 0.0
    %1251 = vmatprep.subr.mxu0 0.0
    %1252 = vmatpush1.msra.mxu0 0.0
    %1253 = vmatprep.subr.mxu0 0.0
    %1254 = vmatpush1.msra.mxu0 0.0
    %1255 = vmatprep.subr.mxu0 0.0
    %1256 = vmatpush1.msra.mxu0 0.0
    %1257 = vmatprep.subr.mxu0 0.0
    %1258 = vmatpush1.msra.mxu0 0.0
    %1259 = vmatprep.subr.mxu0 0.0
    %1260 = vmatpush1.msra.mxu0 0.0
    %1261 = vmatprep.subr.mxu0 0.0
    %1262 = vmatpush1.msra.mxu0 0.0
    %1263 = vmatprep.subr.mxu0 0.0
    %1264 = vmatpush1.msra.mxu0 0.0
    %1265 = vmatprep.subr.mxu0 0.0
    %1266 = vmatpush1.msra.mxu0 0.0
    %1267 = vmatprep.subr.mxu0 0.0
    %1268 = vmatpush1.msra.mxu0 0.0
    %1269 = vmatprep.subr.mxu0 0.0
    %1270 = vmatpush1.msra.mxu0 0.0
    %1271 = vmatprep.subr.mxu0 0.0
    %1272 = vmatpush1.msra.mxu0 0.0
    %1273 = vmatprep.subr.mxu0 0.0
    %1274 = vmatpush1.msra.mxu0 0.0
    %1275 = vmatprep.subr.mxu0 0.0
    %1276 = vmatpush1.msra.mxu0 0.0
    %1277 = vmatprep.subr.mxu0 0.0
    %1278 = vmatpush1.msra.mxu0 0.0
    %1279 = vmatprep.subr.mxu0 0.0
    %1280 = vmatpush1.msra.mxu0 0.0
    %1281 = vmatprep.subr.mxu0 0.0
    %1282 = vmatpush1.msra.mxu0 0.0
    %1283 = vmatprep.subr.mxu0 0.0
    %1284 = vmatpush1.msra.mxu0 0.0
    %1285 = vmatprep.subr.mxu0 0.0
    %1286 = vmatpush1.msra.mxu0 0.0
    %1287 = vmatprep.subr.mxu0 0.0
    %1288 = vmatpush1.msra.mxu0 0.0
    %1289 = vmatprep.subr.mxu0 0.0
    %1290 = vmatpush1.msra.mxu0 0.0
    %1291 = vmatprep.subr.mxu0 0.0
    %1292 = vmatpush1.msra.mxu0 0.0
    %1293 = vmatprep.subr.mxu0 0.0
    %1294 = vmatpush1.msra.mxu0 0.0
    %1295 = vmatprep.subr.mxu0 0.0
    %1296 = vmatpush1.msra.mxu0 0.0
    %1297 = vmatprep.subr.mxu0 0.0
    %1298 = vmatpush1.msra.mxu0 0.0
    %1299 = vmatprep.subr.mxu0 0.0
    %1300 = vmatpush1.msra.mxu0 0.0
    %1301 = vmatprep.subr.mxu0 0.0
    %1302 = vmatpush1.msra.mxu0 0.0
    %1303 = vmatprep.mubr.f32.mxu0 0.0
    %1304 = vmatmul.mubr.f32.gmra.mrb[0].mxu0 %v1234
    %v1305 = vpop.f32.mrb[0].mxu0
    %v1306 = vadd.f32 0.0, %v1305
    %v1307 = vpop.f32.mrb[0].mxu0
    %1308 = vdwg.mxu0
    %v1309 = vld [vmem:[%s8] sm:$0xff]
    %v1310 = vld [vmem:[%s8 + $0x8] sm:$0xff]
    %v1311 = vld [vmem:[%s8 + $0x10] sm:$0xff]
    %v1312 = vld [vmem:[%s8 + $0x18] sm:$0xff]
    %v1313 = vld [vmem:[%s8 + $0x20] sm:$0xff]
    %v1314 = vld [vmem:[%s8 + $0x28] sm:$0xff]
    %v1315 = vld [vmem:[%s8 + $0x30] sm:$0xff]
    %v1316 = vld [vmem:[%s8 + $0x38] sm:$0xff]
    %v1317 = vld [vmem:[%s8 + $0x40] sm:$0xff]
    %v1318 = vld [vmem:[%s8 + $0x48] sm:$0xff]
    %v1319 = vld [vmem:[%s8 + $0x50] sm:$0xff]
    %v1320 = vld [vmem:[%s8 + $0x58] sm:$0xff]
    %v1321 = vld [vmem:[%s8 + $0x60] sm:$0xff]
    %v1322 = vld [vmem:[%s8 + $0x68] sm:$0xff]
    %v1323 = vld [vmem:[#allocation13] sm:$0x1]
    %v1325 = vlaneseq
    %v1326 = vshrl.u32 %v1325, 7
    %v1327 = vsub.s32 0, %v1326
    %v1328 = vrot.slane %v1323, %v1327
    %v1331 = vsel %vm923, %v1306, 0
    %1333 = vmatprep.subr.mxu0 0.0
    %1334 = vmatpush1.msra.mxu0 %v1309
    %1335 = vmatprep.subr.mxu0 0.0
    %1336 = vmatpush1.msra.mxu0 %v1310
    %1337 = vmatprep.subr.mxu0 0.0
    %1338 = vmatpush1.msra.mxu0 %v1311
    %1339 = vmatprep.subr.mxu0 0.0
    %1340 = vmatpush1.msra.mxu0 %v1312
    %1341 = vmatprep.subr.mxu0 0.0
    %1342 = vmatpush1.msra.mxu0 %v1313
    %1343 = vmatprep.subr.mxu0 0.0
    %1344 = vmatpush1.msra.mxu0 %v1314
    %1345 = vmatprep.subr.mxu0 0.0
    %1346 = vmatpush1.msra.mxu0 %v1315
    %1347 = vmatprep.subr.mxu0 0.0
    %1348 = vmatpush1.msra.mxu0 %v1316
    %1349 = vmatprep.subr.mxu0 0.0
    %1350 = vmatpush1.msra.mxu0 %v1317
    %1351 = vmatprep.subr.mxu0 0.0
    %1352 = vmatpush1.msra.mxu0 %v1318
    %1353 = vmatprep.subr.mxu0 0.0
    %1354 = vmatpush1.msra.mxu0 %v1319
    %1355 = vmatprep.subr.mxu0 0.0
    %1356 = vmatpush1.msra.mxu0 %v1320
    %1357 = vmatprep.subr.mxu0 0.0
    %1358 = vmatpush1.msra.mxu0 %v1321
    %1359 = vmatprep.subr.mxu0 0.0
    %1360 = vmatpush1.msra.mxu0 %v1322
    %1361 = vmatprep.subr.mxu0 0.0
    %1362 = vmatpush1.msra.mxu0 0.0
    %1363 = vmatprep.subr.mxu0 0.0
    %1364 = vmatpush1.msra.mxu0 0.0
    %1365 = vmatprep.subr.mxu0 0.0
    %1366 = vmatpush1.msra.mxu0 0.0
    %1367 = vmatprep.subr.mxu0 0.0
    %1368 = vmatpush1.msra.mxu0 0.0
    %1369 = vmatprep.subr.mxu0 0.0
    %1370 = vmatpush1.msra.mxu0 0.0
    %1371 = vmatprep.subr.mxu0 0.0
    %1372 = vmatpush1.msra.mxu0 0.0
    %1373 = vmatprep.subr.mxu0 0.0
    %1374 = vmatpush1.msra.mxu0 0.0
    %1375 = vmatprep.subr.mxu0 0.0
    %1376 = vmatpush1.msra.mxu0 0.0
    %1377 = vmatprep.subr.mxu0 0.0
    %1378 = vmatpush1.msra.mxu0 0.0
    %1379 = vmatprep.subr.mxu0 0.0
    %1380 = vmatpush1.msra.mxu0 0.0
    %1381 = vmatprep.subr.mxu0 0.0
    %1382 = vmatpush1.msra.mxu0 0.0
    %1383 = vmatprep.subr.mxu0 0.0
    %1384 = vmatpush1.msra.mxu0 0.0
    %1385 = vmatprep.subr.mxu0 0.0
    %1386 = vmatpush1.msra.mxu0 0.0
    %1387 = vmatprep.subr.mxu0 0.0
    %1388 = vmatpush1.msra.mxu0 0.0
    %1389 = vmatprep.subr.mxu0 0.0
    %1390 = vmatpush1.msra.mxu0 0.0
    %1391 = vmatprep.subr.mxu0 0.0
    %1392 = vmatpush1.msra.mxu0 0.0
    %1393 = vmatprep.subr.mxu0 0.0
    %1394 = vmatpush1.msra.mxu0 0.0
    %1395 = vmatprep.subr.mxu0 0.0
    %1396 = vmatpush1.msra.mxu0 0.0
    %1397 = vmatprep.mubr.f32.mxu0 0.0
    %1398 = vmatmul.mubr.f32.gmra.mrb[0].mxu0 %v1331
    %v1399 = vpop.f32.mrb[0].mxu0
    %v1400 = vadd.f32 %v1328, %v1399
    %v1401 = vpop.f32.mrb[0].mxu0
    %1402 = vdwg.mxu0
    %v1403 = vmax.f32 %v1400, 0.0
    %v1404 = vld [vmem:[#allocation14] sm:$0xff]
    %v1405 = vld [vmem:[#allocation14 + $0x8] sm:$0xff]
    %v1406 = vld [vmem:[#allocation14 + $0x10] sm:$0xff]
    %v1407 = vld [vmem:[#allocation14 + $0x18] sm:$0xff]
    %v1408 = vld [vmem:[#allocation16] sm:$0x1]
    %v1410 = vlaneseq
    %v1411 = vshrl.u32 %v1410, 7
    %v1412 = vsub.s32 0, %v1411
    %v1413 = vrot.slane %v1408, %v1412
    %vm1415 = vcmask 261120
    %v1417 = vsel %vm1415, %v1403, 0
    %1419 = vmatprep.subr.mxu0 0.0
    %1420 = vmatpush1.msra.mxu0 %v1404
    %1421 = vmatprep.subr.mxu0 0.0
    %1422 = vmatpush1.msra.mxu0 %v1405
    %1423 = vmatprep.subr.mxu0 0.0
    %1424 = vmatpush1.msra.mxu0 %v1406
    %1425 = vmatprep.subr.mxu0 0.0
    %1426 = vmatpush1.msra.mxu0 %v1407
    %1427 = vmatprep.subr.mxu0 0.0
    %1428 = vmatpush1.msra.mxu0 0.0
    %1429 = vmatprep.subr.mxu0 0.0
    %1430 = vmatpush1.msra.mxu0 0.0
    %1431 = vmatprep.subr.mxu0 0.0
    %1432 = vmatpush1.msra.mxu0 0.0
    %1433 = vmatprep.subr.mxu0 0.0
    %1434 = vmatpush1.msra.mxu0 0.0
    %1435 = vmatprep.subr.mxu0 0.0
    %1436 = vmatpush1.msra.mxu0 0.0
    %1437 = vmatprep.subr.mxu0 0.0
    %1438 = vmatpush1.msra.mxu0 0.0
    %1439 = vmatprep.subr.mxu0 0.0
    %1440 = vmatpush1.msra.mxu0 0.0
    %1441 = vmatprep.subr.mxu0 0.0
    %1442 = vmatpush1.msra.mxu0 0.0
    %1443 = vmatprep.subr.mxu0 0.0
    %1444 = vmatpush1.msra.mxu0 0.0
    %1445 = vmatprep.subr.mxu0 0.0
    %1446 = vmatpush1.msra.mxu0 0.0
    %1447 = vmatprep.subr.mxu0 0.0
    %1448 = vmatpush1.msra.mxu0 0.0
    %1449 = vmatprep.subr.mxu0 0.0
    %1450 = vmatpush1.msra.mxu0 0.0
    %1451 = vmatprep.subr.mxu0 0.0
    %1452 = vmatpush1.msra.mxu0 0.0
    %1453 = vmatprep.subr.mxu0 0.0
    %1454 = vmatpush1.msra.mxu0 0.0
    %1455 = vmatprep.subr.mxu0 0.0
    %1456 = vmatpush1.msra.mxu0 0.0
    %1457 = vmatprep.subr.mxu0 0.0
    %1458 = vmatpush1.msra.mxu0 0.0
    %1459 = vmatprep.subr.mxu0 0.0
    %1460 = vmatpush1.msra.mxu0 0.0
    %1461 = vmatprep.subr.mxu0 0.0
    %1462 = vmatpush1.msra.mxu0 0.0
    %1463 = vmatprep.subr.mxu0 0.0
    %1464 = vmatpush1.msra.mxu0 0.0
    %1465 = vmatprep.subr.mxu0 0.0
    %1466 = vmatpush1.msra.mxu0 0.0
    %1467 = vmatprep.subr.mxu0 0.0
    %1468 = vmatpush1.msra.mxu0 0.0
    %1469 = vmatprep.subr.mxu0 0.0
    %1470 = vmatpush1.msra.mxu0 0.0
    %1471 = vmatprep.subr.mxu0 0.0
    %1472 = vmatpush1.msra.mxu0 0.0
    %1473 = vmatprep.subr.mxu0 0.0
    %1474 = vmatpush1.msra.mxu0 0.0
    %1475 = vmatprep.subr.mxu0 0.0
    %1476 = vmatpush1.msra.mxu0 0.0
    %1477 = vmatprep.subr.mxu0 0.0
    %1478 = vmatpush1.msra.mxu0 0.0
    %1479 = vmatprep.subr.mxu0 0.0
    %1480 = vmatpush1.msra.mxu0 0.0
    %1481 = vmatprep.subr.mxu0 0.0
    %1482 = vmatpush1.msra.mxu0 0.0
    %1483 = vmatprep.mubr.f32.mxu0 0.0
    %1484 = vmatmul.mubr.f32.gmra.mrb[0].mxu0 %v1417
    %v1485 = vpop.f32.mrb[0].mxu0
    %v1486 = vadd.f32 %v1413, %v1485
    %v1487 = vpop.f32.mrb[0].mxu0
    %1488 = vdwg.mxu0
    %v1489 = vmax.f32 %v1486, 0.0
    %v1490 = vld [vmem:[#allocation17] sm:$0xff]
    %v1491 = vld [vmem:[#allocation17 + $0x8] sm:$0xff]
    %v1492 = vld [vmem:[#allocation17 + $0x10] sm:$0xff]
    %v1493 = vld [vmem:[#allocation17 + $0x18] sm:$0xff]
    %v1494 = vld [vmem:[#allocation19] sm:$0x1]
    %v1496 = vlaneseq
    %v1497 = vshrl.u32 %v1496, 7
    %v1498 = vsub.s32 0, %v1497
    %v1499 = vrot.slane %v1494, %v1498
    %v1502 = vsel %vm1415, %v1489, 0
    %1504 = vmatprep.subr.mxu0 0.0
    %1505 = vmatpush1.msra.mxu0 %v1490
    %1506 = vmatprep.subr.mxu0 0.0
    %1507 = vmatpush1.msra.mxu0 %v1491
    %1508 = vmatprep.subr.mxu0 0.0
    %1509 = vmatpush1.msra.mxu0 %v1492
    %1510 = vmatprep.subr.mxu0 0.0
    %1511 = vmatpush1.msra.mxu0 %v1493
    %1512 = vmatprep.subr.mxu0 0.0
    %1513 = vmatpush1.msra.mxu0 0.0
    %1514 = vmatprep.subr.mxu0 0.0
    %1515 = vmatpush1.msra.mxu0 0.0
    %1516 = vmatprep.subr.mxu0 0.0
    %1517 = vmatpush1.msra.mxu0 0.0
    %1518 = vmatprep.subr.mxu0 0.0
    %1519 = vmatpush1.msra.mxu0 0.0
    %1520 = vmatprep.subr.mxu0 0.0
    %1521 = vmatpush1.msra.mxu0 0.0
    %1522 = vmatprep.subr.mxu0 0.0
    %1523 = vmatpush1.msra.mxu0 0.0
    %1524 = vmatprep.subr.mxu0 0.0
    %1525 = vmatpush1.msra.mxu0 0.0
    %1526 = vmatprep.subr.mxu0 0.0
    %1527 = vmatpush1.msra.mxu0 0.0
    %1528 = vmatprep.subr.mxu0 0.0
    %1529 = vmatpush1.msra.mxu0 0.0
    %1530 = vmatprep.subr.mxu0 0.0
    %1531 = vmatpush1.msra.mxu0 0.0
    %1532 = vmatprep.subr.mxu0 0.0
    %1533 = vmatpush1.msra.mxu0 0.0
    %1534 = vmatprep.subr.mxu0 0.0
    %1535 = vmatpush1.msra.mxu0 0.0
    %1536 = vmatprep.subr.mxu0 0.0
    %1537 = vmatpush1.msra.mxu0 0.0
    %1538 = vmatprep.subr.mxu0 0.0
    %1539 = vmatpush1.msra.mxu0 0.0
    %1540 = vmatprep.subr.mxu0 0.0
    %1541 = vmatpush1.msra.mxu0 0.0
    %1542 = vmatprep.subr.mxu0 0.0
    %1543 = vmatpush1.msra.mxu0 0.0
    %1544 = vmatprep.subr.mxu0 0.0
    %1545 = vmatpush1.msra.mxu0 0.0
    %1546 = vmatprep.subr.mxu0 0.0
    %1547 = vmatpush1.msra.mxu0 0.0
    %1548 = vmatprep.subr.mxu0 0.0
    %1549 = vmatpush1.msra.mxu0 0.0
    %1550 = vmatprep.subr.mxu0 0.0
    %1551 = vmatpush1.msra.mxu0 0.0
    %1552 = vmatprep.subr.mxu0 0.0
    %1553 = vmatpush1.msra.mxu0 0.0
    %1554 = vmatprep.subr.mxu0 0.0
    %1555 = vmatpush1.msra.mxu0 0.0
    %1556 = vmatprep.subr.mxu0 0.0
    %1557 = vmatpush1.msra.mxu0 0.0
    %1558 = vmatprep.subr.mxu0 0.0
    %1559 = vmatpush1.msra.mxu0 0.0
    %1560 = vmatprep.subr.mxu0 0.0
    %1561 = vmatpush1.msra.mxu0 0.0
    %1562 = vmatprep.subr.mxu0 0.0
    %1563 = vmatpush1.msra.mxu0 0.0
    %1564 = vmatprep.subr.mxu0 0.0
    %1565 = vmatpush1.msra.mxu0 0.0
    %1566 = vmatprep.subr.mxu0 0.0
    %1567 = vmatpush1.msra.mxu0 0.0
    %1568 = vmatprep.mubr.f32.mxu0 0.0
    %1569 = vmatmul.mubr.f32.gmra.mrb[0].mxu0 %v1502
    %v1570 = vpop.f32.mrb[0].mxu0
    %v1571 = vadd.f32 %v1499, %v1570
    %v1572 = vpop.f32.mrb[0].mxu0
    %1573 = vdwg.mxu0
    %vm1574 = vcmask 123904
    %1575 = vst.msk [vmem:[#allocation25] sm:$0x3] %vm1574, %v1571
    %1577 = vrot.lane.b32.xlu0 %v1571, 112
    %v1578 = vpop.permute.xlu0 %1577
    %1580 = vst.msk [vmem:[#allocation26] sm:$0x3] %vm1574, %v1578
    %v1581 = vld [vmem:[#allocation2] sm:$0x3]
    %v1582 = vmul.f32 %v1571, 0.5
    %v1583 = vmul.f32 %v1582, 1.442695
    %v1584 = vpow.pop %v1583
    %1586 = vrot.lane.b32.xlu0 %v1584, 112
    %v1587 = vpop.permute.xlu0 %1586
    %v1589 = vmul.f32 %v1581, %v1587
    %v1590 = vadd.f32 %v1571, %v1589
    %v1591 = vld [vmem:[%s14] sm:$0xff]
    %v1592 = vld [vmem:[%s14 + $0x8] sm:$0xff]
    %v1593 = vld [vmem:[%s14 + $0x10] sm:$0xff]
    %v1594 = vld [vmem:[%s14 + $0x18] sm:$0xff]
    %v1595 = vld [vmem:[%s14 + $0x20] sm:$0xff]
    %v1596 = vld [vmem:[%s14 + $0x28] sm:$0xff]
    %v1597 = vld [vmem:[%s14 + $0x30] sm:$0xff]
    %v1598 = vld [vmem:[%s14 + $0x38] sm:$0xff]
    %v1599 = vld [vmem:[#allocation20] sm:$0xf]
    %v1601 = vlaneseq
    %v1602 = vshrl.u32 %v1601, 7
    %v1603 = vsub.s32 0, %v1602
    %v1604 = vrot.slane %v1599, %v1603
    %v1605 = vlaneseq
    %v1606 = vshrl.u32 %v1605, 7
    %v1607 = vsub.s32 1, %v1606
    %v1608 = vrot.slane %v1599, %v1607
    %v1609 = vlaneseq
    %v1610 = vshrl.u32 %v1609, 7
    %v1611 = vsub.s32 2, %v1610
    %v1612 = vrot.slane %v1599, %v1611
    %v1613 = vlaneseq
    %v1614 = vshrl.u32 %v1613, 7
    %v1615 = vsub.s32 3, %v1614
    %v1616 = vrot.slane %v1599, %v1615
    %vm1621 = vcmask 130048
    %v1623 = vsel %vm1621, %v1590, 0
    %1625 = vmatprep.subr.mxu0 %v1592
    %1626 = vmatpush1.msra.mxu0 %v1591
    %1627 = vmatprep.subr.mxu0 %v1596
    %1628 = vmatpush1.msra.mxu0 %v1595
    %1629 = vmatprep.subr.mxu0 0.0
    %1630 = vmatpush1.msra.mxu0 0.0
    %1631 = vmatprep.subr.mxu0 0.0
    %1632 = vmatpush1.msra.mxu0 0.0
    %1633 = vmatprep.subr.mxu0 0.0
    %1634 = vmatpush1.msra.mxu0 0.0
    %1635 = vmatprep.subr.mxu0 0.0
    %1636 = vmatpush1.msra.mxu0 0.0
    %1637 = vmatprep.subr.mxu0 0.0
    %1638 = vmatpush1.msra.mxu0 0.0
    %1639 = vmatprep.subr.mxu0 0.0
    %1640 = vmatpush1.msra.mxu0 0.0
    %1641 = vmatprep.subr.mxu0 0.0
    %1642 = vmatpush1.msra.mxu0 0.0
    %1643 = vmatprep.subr.mxu0 0.0
    %1644 = vmatpush1.msra.mxu0 0.0
    %1645 = vmatprep.subr.mxu0 0.0
    %1646 = vmatpush1.msra.mxu0 0.0
    %1647 = vmatprep.subr.mxu0 0.0
    %1648 = vmatpush1.msra.mxu0 0.0
    %1649 = vmatprep.subr.mxu0 0.0
    %1650 = vmatpush1.msra.mxu0 0.0
    %1651 = vmatprep.subr.mxu0 0.0
    %1652 = vmatpush1.msra.mxu0 0.0
    %1653 = vmatprep.subr.mxu0 0.0
    %1654 = vmatpush1.msra.mxu0 0.0
    %1655 = vmatprep.subr.mxu0 0.0
    %1656 = vmatpush1.msra.mxu0 0.0
    %1657 = vmatprep.subr.mxu0 0.0
    %1658 = vmatpush1.msra.mxu0 0.0
    %1659 = vmatprep.subr.mxu0 0.0
    %1660 = vmatpush1.msra.mxu0 0.0
    %1661 = vmatprep.subr.mxu0 0.0
    %1662 = vmatpush1.msra.mxu0 0.0
    %1663 = vmatprep.subr.mxu0 0.0
    %1664 = vmatpush1.msra.mxu0 0.0
    %1665 = vmatprep.subr.mxu0 0.0
    %1666 = vmatpush1.msra.mxu0 0.0
    %1667 = vmatprep.subr.mxu0 0.0
    %1668 = vmatpush1.msra.mxu0 0.0
    %1669 = vmatprep.subr.mxu0 0.0
    %1670 = vmatpush1.msra.mxu0 0.0
    %1671 = vmatprep.subr.mxu0 0.0
    %1672 = vmatpush1.msra.mxu0 0.0
    %1673 = vmatprep.subr.mxu0 0.0
    %1674 = vmatpush1.msra.mxu0 0.0
    %1675 = vmatprep.subr.mxu0 0.0
    %1676 = vmatpush1.msra.mxu0 0.0
    %1677 = vmatprep.subr.mxu0 0.0
    %1678 = vmatpush1.msra.mxu0 0.0
    %1679 = vmatprep.subr.mxu0 0.0
    %1680 = vmatpush1.msra.mxu0 0.0
    %1681 = vmatprep.subr.mxu0 0.0
    %1682 = vmatpush1.msra.mxu0 0.0
    %1683 = vmatprep.subr.mxu0 0.0
    %1684 = vmatpush1.msra.mxu0 0.0
    %1685 = vmatprep.subr.mxu0 0.0
    %1686 = vmatpush1.msra.mxu0 0.0
    %1687 = vmatprep.subr.mxu0 0.0
    %1688 = vmatpush1.msra.mxu0 0.0
    %1689 = vmatprep.mubr.f32.mxu0 0.0
    %1690 = vmatmul.mubr.f32.gmra.mrb[0].mxu0 %v1623
    %v1691 = vpop.f32.mrb[0].mxu0
    %v1692 = vadd.f32 %v1604, %v1691
    %v1693 = vpop.f32.mrb[0].mxu0
    %v1694 = vadd.f32 %v1608, %v1693
    %1695 = vdwg.mxu0
    %1696 = vmatprep.subr.mxu0 %v1594
    %1697 = vmatpush1.msra.mxu0 %v1593
    %1698 = vmatprep.subr.mxu0 %v1598
    %1699 = vmatpush1.msra.mxu0 %v1597
    %1700 = vmatprep.subr.mxu0 0.0
    %1701 = vmatpush1.msra.mxu0 0.0
    %1702 = vmatprep.subr.mxu0 0.0
    %1703 = vmatpush1.msra.mxu0 0.0
    %1704 = vmatprep.subr.mxu0 0.0
    %1705 = vmatpush1.msra.mxu0 0.0
    %1706 = vmatprep.subr.mxu0 0.0
    %1707 = vmatpush1.msra.mxu0 0.0
    %1708 = vmatprep.subr.mxu0 0.0
    %1709 = vmatpush1.msra.mxu0 0.0
    %1710 = vmatprep.subr.mxu0 0.0
    %1711 = vmatpush1.msra.mxu0 0.0
    %1712 = vmatprep.subr.mxu0 0.0
    %1713 = vmatpush1.msra.mxu0 0.0
    %1714 = vmatprep.subr.mxu0 0.0
    %1715 = vmatpush1.msra.mxu0 0.0
    %1716 = vmatprep.subr.mxu0 0.0
    %1717 = vmatpush1.msra.mxu0 0.0
    %1718 = vmatprep.subr.mxu0 0.0
    %1719 = vmatpush1.msra.mxu0 0.0
    %1720 = vmatprep.subr.mxu0 0.0
    %1721 = vmatpush1.msra.mxu0 0.0
    %1722 = vmatprep.subr.mxu0 0.0
    %1723 = vmatpush1.msra.mxu0 0.0
    %1724 = vmatprep.subr.mxu0 0.0
    %1725 = vmatpush1.msra.mxu0 0.0
    %1726 = vmatprep.subr.mxu0 0.0
    %1727 = vmatpush1.msra.mxu0 0.0
    %1728 = vmatprep.subr.mxu0 0.0
    %1729 = vmatpush1.msra.mxu0 0.0
    %1730 = vmatprep.subr.mxu0 0.0
    %1731 = vmatpush1.msra.mxu0 0.0
    %1732 = vmatprep.subr.mxu0 0.0
    %1733 = vmatpush1.msra.mxu0 0.0
    %1734 = vmatprep.subr.mxu0 0.0
    %1735 = vmatpush1.msra.mxu0 0.0
    %1736 = vmatprep.subr.mxu0 0.0
    %1737 = vmatpush1.msra.mxu0 0.0
    %1738 = vmatprep.subr.mxu0 0.0
    %1739 = vmatpush1.msra.mxu0 0.0
    %1740 = vmatprep.subr.mxu0 0.0
    %1741 = vmatpush1.msra.mxu0 0.0
    %1742 = vmatprep.subr.mxu0 0.0
    %1743 = vmatpush1.msra.mxu0 0.0
    %1744 = vmatprep.subr.mxu0 0.0
    %1745 = vmatpush1.msra.mxu0 0.0
    %1746 = vmatprep.subr.mxu0 0.0
    %1747 = vmatpush1.msra.mxu0 0.0
    %1748 = vmatprep.subr.mxu0 0.0
    %1749 = vmatpush1.msra.mxu0 0.0
    %1750 = vmatprep.subr.mxu0 0.0
    %1751 = vmatpush1.msra.mxu0 0.0
    %1752 = vmatprep.subr.mxu0 0.0
    %1753 = vmatpush1.msra.mxu0 0.0
    %1754 = vmatprep.subr.mxu0 0.0
    %1755 = vmatpush1.msra.mxu0 0.0
    %1756 = vmatprep.subr.mxu0 0.0
    %1757 = vmatpush1.msra.mxu0 0.0
    %1758 = vmatprep.subr.mxu0 0.0
    %1759 = vmatpush1.msra.mxu0 0.0
    %1760 = vmatprep.mubr.f32.mxu0 0.0
    %1761 = vmatmul.mubr.f32.gmra.mrb[0].mxu0 %v1623
    %v1762 = vpop.f32.mrb[0].mxu0
    %v1763 = vadd.f32 %v1612, %v1762
    %v1764 = vpop.f32.mrb[0].mxu0
    %v1765 = vadd.f32 %v1616, %v1764
    %1766 = vdwg.mxu0
    %v1767 = vmax.f32 %v1692, 0.0
    %v1768 = vmax.f32 %v1694, 0.0
    %v1769 = vmax.f32 %v1763, 0.0
    %v1770 = vmax.f32 %v1765, 0.0
    %v1771 = vld [vmem:[%s16] sm:$0xff]
    %v1772 = vld [vmem:[%s16 + $0x8] sm:$0x3f]
    %s1773 = scalar_lea.vmem %s16, 16
    %v1774 = vld [vmem:[%s1773] sm:$0xff]
    %v1775 = vld [vmem:[%s1773 + $0x8] sm:$0x3f]
    %1777 = vrot.lane.b32.xlu0 %v1767, 72
    %v1778 = vpop.permute.xlu0 %1777
    %vm1779 = vcmask 15360
    %v1781 = vsel %vm1779, %v1774, 0
    %v1784 = vsel %vm1779, %v1775, 0
    %vm1786 = vcmask 1041408
    %v1787 = vsel %vm1786, %v1778, 0
    %1789 = vmatprep.subr.mxu0 0.0
    %1790 = vmatpush1.msra.mxu0 %v1787
    %1791 = vmatprep.subr.mxu0 0.0
    %1792 = vmatpush1.msra.mxu0 0.0
    %1793 = vmatprep.subr.mxu0 0.0
    %1794 = vmatpush1.msra.mxu0 0.0
    %1795 = vmatprep.subr.mxu0 0.0
    %1796 = vmatpush1.msra.mxu0 0.0
    %1797 = vmatprep.subr.mxu0 0.0
    %1798 = vmatpush1.msra.mxu0 0.0
    %1799 = vmatprep.subr.mxu0 0.0
    %1800 = vmatpush1.msra.mxu0 0.0
    %1801 = vmatprep.subr.mxu0 0.0
    %1802 = vmatpush1.msra.mxu0 0.0
    %1803 = vmatprep.subr.mxu0 0.0
    %1804 = vmatpush1.msra.mxu0 0.0
    %1805 = vmatprep.subr.mxu0 0.0
    %1806 = vmatpush1.msra.mxu0 0.0
    %1807 = vmatprep.subr.mxu0 0.0
    %1808 = vmatpush1.msra.mxu0 0.0
    %1809 = vmatprep.subr.mxu0 0.0
    %1810 = vmatpush1.msra.mxu0 0.0
    %1811 = vmatprep.subr.mxu0 0.0
    %1812 = vmatpush1.msra.mxu0 0.0
    %1813 = vmatprep.subr.mxu0 0.0
    %1814 = vmatpush1.msra.mxu0 0.0
    %1815 = vmatprep.subr.mxu0 0.0
    %1816 = vmatpush1.msra.mxu0 0.0
    %1817 = vmatprep.subr.mxu0 0.0
    %1818 = vmatpush1.msra.mxu0 0.0
    %1819 = vmatprep.subr.mxu0 0.0
    %1820 = vmatpush1.msra.mxu0 0.0
    %1821 = vmatprep.subr.mxu0 0.0
    %1822 = vmatpush1.msra.mxu0 0.0
    %1823 = vmatprep.subr.mxu0 0.0
    %1824 = vmatpush1.msra.mxu0 0.0
    %1825 = vmatprep.subr.mxu0 0.0
    %1826 = vmatpush1.msra.mxu0 0.0
    %1827 = vmatprep.subr.mxu0 0.0
    %1828 = vmatpush1.msra.mxu0 0.0
    %1829 = vmatprep.subr.mxu0 0.0
    %1830 = vmatpush1.msra.mxu0 0.0
    %1831 = vmatprep.subr.mxu0 0.0
    %1832 = vmatpush1.msra.mxu0 0.0
    %1833 = vmatprep.subr.mxu0 0.0
    %1834 = vmatpush1.msra.mxu0 0.0
    %1835 = vmatprep.subr.mxu0 0.0
    %1836 = vmatpush1.msra.mxu0 0.0
    %1837 = vmatprep.subr.mxu0 0.0
    %1838 = vmatpush1.msra.mxu0 0.0
    %1839 = vmatprep.subr.mxu0 0.0
    %1840 = vmatpush1.msra.mxu0 0.0
    %1841 = vmatprep.subr.mxu0 0.0
    %1842 = vmatpush1.msra.mxu0 0.0
    %1843 = vmatprep.subr.mxu0 0.0
    %1844 = vmatpush1.msra.mxu0 0.0
    %1845 = vmatprep.subr.mxu0 0.0
    %1846 = vmatpush1.msra.mxu0 0.0
    %1847 = vmatprep.subr.mxu0 0.0
    %1848 = vmatpush1.msra.mxu0 0.0
    %1849 = vmatprep.subr.mxu0 0.0
    %1850 = vmatpush1.msra.mxu0 0.0
    %1851 = vmatprep.subr.mxu0 0.0
    %1852 = vmatpush1.msra.mxu0 0.0
    %1853 = vmatprep.mubr.f32.mxu0 0.0
    %1854 = vmatmul.mubr.f32.gmra.mrb[0].mxu0 %v1781
    %v1855 = vpop.f32.mrb[0].mxu0
    %v1856 = vadd.f32 0.0, %v1855
    %v1857 = vpop.f32.mrb[0].mxu0
    %1858 = vmatprep.mubr.f32.mxu0 0.0
    %1859 = vmatmul.mubr.f32.gmra.mrb[0].mxu0 %v1784
    %v1860 = vpop.f32.mrb[0].mxu0
    %v1861 = vadd.f32 0.0, %v1860
    %v1862 = vpop.f32.mrb[0].mxu0
    %1863 = vdwg.mxu0
    %v1865 = vsel %vm1779, %v1771, 0
    %v1868 = vsel %vm1779, %v1772, 0
    %v1870 = vsel %vm1786, %v1767, 0
    %1872 = vmatprep.subr.mxu0 0.0
    %1873 = vmatpush1.msra.mxu0 %v1870
    %1874 = vmatprep.subr.mxu0 0.0
    %1875 = vmatpush1.msra.mxu0 0.0
    %1876 = vmatprep.subr.mxu0 0.0
    %1877 = vmatpush1.msra.mxu0 0.0
    %1878 = vmatprep.subr.mxu0 0.0
    %1879 = vmatpush1.msra.mxu0 0.0
    %1880 = vmatprep.subr.mxu0 0.0
    %1881 = vmatpush1.msra.mxu0 0.0
    %1882 = vmatprep.subr.mxu0 0.0
    %1883 = vmatpush1.msra.mxu0 0.0
    %1884 = vmatprep.subr.mxu0 0.0
    %1885 = vmatpush1.msra.mxu0 0.0
    %1886 = vmatprep.subr.mxu0 0.0
    %1887 = vmatpush1.msra.mxu0 0.0
    %1888 = vmatprep.subr.mxu0 0.0
    %1889 = vmatpush1.msra.mxu0 0.0
    %1890 = vmatprep.subr.mxu0 0.0
    %1891 = vmatpush1.msra.mxu0 0.0
    %1892 = vmatprep.subr.mxu0 0.0
    %1893 = vmatpush1.msra.mxu0 0.0
    %1894 = vmatprep.subr.mxu0 0.0
    %1895 = vmatpush1.msra.mxu0 0.0
    %1896 = vmatprep.subr.mxu0 0.0
    %1897 = vmatpush1.msra.mxu0 0.0
    %1898 = vmatprep.subr.mxu0 0.0
    %1899 = vmatpush1.msra.mxu0 0.0
    %1900 = vmatprep.subr.mxu0 0.0
    %1901 = vmatpush1.msra.mxu0 0.0
    %1902 = vmatprep.subr.mxu0 0.0
    %1903 = vmatpush1.msra.mxu0 0.0
    %1904 = vmatprep.subr.mxu0 0.0
    %1905 = vmatpush1.msra.mxu0 0.0
    %1906 = vmatprep.subr.mxu0 0.0
    %1907 = vmatpush1.msra.mxu0 0.0
    %1908 = vmatprep.subr.mxu0 0.0
    %1909 = vmatpush1.msra.mxu0 0.0
    %1910 = vmatprep.subr.mxu0 0.0
    %1911 = vmatpush1.msra.mxu0 0.0
    %1912 = vmatprep.subr.mxu0 0.0
    %1913 = vmatpush1.msra.mxu0 0.0
    %1914 = vmatprep.subr.mxu0 0.0
    %1915 = vmatpush1.msra.mxu0 0.0
    %1916 = vmatprep.subr.mxu0 0.0
    %1917 = vmatpush1.msra.mxu0 0.0
    %1918 = vmatprep.subr.mxu0 0.0
    %1919 = vmatpush1.msra.mxu0 0.0
    %1920 = vmatprep.subr.mxu0 0.0
    %1921 = vmatpush1.msra.mxu0 0.0
    %1922 = vmatprep.subr.mxu0 0.0
    %1923 = vmatpush1.msra.mxu0 0.0
    %1924 = vmatprep.subr.mxu0 0.0
    %1925 = vmatpush1.msra.mxu0 0.0
    %1926 = vmatprep.subr.mxu0 0.0
    %1927 = vmatpush1.msra.mxu0 0.0
    %1928 = vmatprep.subr.mxu0 0.0
    %1929 = vmatpush1.msra.mxu0 0.0
    %1930 = vmatprep.subr.mxu0 0.0
    %1931 = vmatpush1.msra.mxu0 0.0
    %1932 = vmatprep.subr.mxu0 0.0
    %1933 = vmatpush1.msra.mxu0 0.0
    %1934 = vmatprep.subr.mxu0 0.0
    %1935 = vmatpush1.msra.mxu0 0.0
    %1936 = vmatprep.mubr.f32.mxu0 0.0
    %1937 = vmatmul.mubr.f32.gmra.mrb[0].mxu0 %v1865
    %v1938 = vpop.f32.mrb[0].mxu0
    %v1939 = vadd.f32 %v1856, %v1938
    %v1940 = vpop.f32.mrb[0].mxu0
    %1941 = vmatprep.mubr.f32.mxu0 0.0
    %1942 = vmatmul.mubr.f32.gmra.mrb[0].mxu0 %v1868
    %v1943 = vpop.f32.mrb[0].mxu0
    %v1944 = vadd.f32 %v1861, %v1943
    %v1945 = vpop.f32.mrb[0].mxu0
    %1946 = vdwg.mxu0
    %s1947 = scalar_lea.vmem %s16, 32
    %v1948 = vld [vmem:[%s1947] sm:$0xff]
    %v1949 = vld [vmem:[%s1947 + $0x8] sm:$0x3f]
    %1951 = vrot.lane.b32.xlu0 %v1767, 16
    %v1952 = vpop.permute.xlu0 %1951
    %1953 = vrot.lane.b32.xlu0 %v1768, 16
    %v1954 = vpop.permute.xlu0 %1953
    %v1955 = vsel %vm1621, %v1952, %v1954
    %v1957 = vsel %vm1779, %v1948, 0
    %v1960 = vsel %vm1779, %v1949, 0
    %v1962 = vsel %vm1786, %v1955, 0
    %1964 = vmatprep.subr.mxu0 0.0
    %1965 = vmatpush1.msra.mxu0 %v1962
    %1966 = vmatprep.subr.mxu0 0.0
    %1967 = vmatpush1.msra.mxu0 0.0
    %1968 = vmatprep.subr.mxu0 0.0
    %1969 = vmatpush1.msra.mxu0 0.0
    %1970 = vmatprep.subr.mxu0 0.0
    %1971 = vmatpush1.msra.mxu0 0.0
    %1972 = vmatprep.subr.mxu0 0.0
    %1973 = vmatpush1.msra.mxu0 0.0
    %1974 = vmatprep.subr.mxu0 0.0
    %1975 = vmatpush1.msra.mxu0 0.0
    %1976 = vmatprep.subr.mxu0 0.0
    %1977 = vmatpush1.msra.mxu0 0.0
    %1978 = vmatprep.subr.mxu0 0.0
    %1979 = vmatpush1.msra.mxu0 0.0
    %1980 = vmatprep.subr.mxu0 0.0
    %1981 = vmatpush1.msra.mxu0 0.0
    %1982 = vmatprep.subr.mxu0 0.0
    %1983 = vmatpush1.msra.mxu0 0.0
    %1984 = vmatprep.subr.mxu0 0.0
    %1985 = vmatpush1.msra.mxu0 0.0
    %1986 = vmatprep.subr.mxu0 0.0
    %1987 = vmatpush1.msra.mxu0 0.0
    %1988 = vmatprep.subr.mxu0 0.0
    %1989 = vmatpush1.msra.mxu0 0.0
    %1990 = vmatprep.subr.mxu0 0.0
    %1991 = vmatpush1.msra.mxu0 0.0
    %1992 = vmatprep.subr.mxu0 0.0
    %1993 = vmatpush1.msra.mxu0 0.0
    %1994 = vmatprep.subr.mxu0 0.0
    %1995 = vmatpush1.msra.mxu0 0.0
    %1996 = vmatprep.subr.mxu0 0.0
    %1997 = vmatpush1.msra.mxu0 0.0
    %1998 = vmatprep.subr.mxu0 0.0
    %1999 = vmatpush1.msra.mxu0 0.0
    %2000 = vmatprep.subr.mxu0 0.0
    %2001 = vmatpush1.msra.mxu0 0.0
    %2002 = vmatprep.subr.mxu0 0.0
    %2003 = vmatpush1.msra.mxu0 0.0
    %2004 = vmatprep.subr.mxu0 0.0
    %2005 = vmatpush1.msra.mxu0 0.0
    %2006 = vmatprep.subr.mxu0 0.0
    %2007 = vmatpush1.msra.mxu0 0.0
    %2008 = vmatprep.subr.mxu0 0.0
    %2009 = vmatpush1.msra.mxu0 0.0
    %2010 = vmatprep.subr.mxu0 0.0
    %2011 = vmatpush1.msra.mxu0 0.0
    %2012 = vmatprep.subr.mxu0 0.0
    %2013 = vmatpush1.msra.mxu0 0.0
    %2014 = vmatprep.subr.mxu0 0.0
    %2015 = vmatpush1.msra.mxu0 0.0
    %2016 = vmatprep.subr.mxu0 0.0
    %2017 = vmatpush1.msra.mxu0 0.0
    %2018 = vmatprep.subr.mxu0 0.0
    %2019 = vmatpush1.msra.mxu0 0.0
    %2020 = vmatprep.subr.mxu0 0.0
    %2021 = vmatpush1.msra.mxu0 0.0
    %2022 = vmatprep.subr.mxu0 0.0
    %2023 = vmatpush1.msra.mxu0 0.0
    %2024 = vmatprep.subr.mxu0 0.0
    %2025 = vmatpush1.msra.mxu0 0.0
    %2026 = vmatprep.subr.mxu0 0.0
    %2027 = vmatpush1.msra.mxu0 0.0
    %2028 = vmatprep.mubr.f32.mxu0 0.0
    %2029 = vmatmul.mubr.f32.gmra.mrb[0].mxu0 %v1957
    %v2030 = vpop.f32.mrb[0].mxu0
    %v2031 = vadd.f32 0.0, %v2030
    %v2032 = vpop.f32.mrb[0].mxu0
    %2033 = vmatprep.mubr.f32.mxu0 0.0
    %2034 = vmatmul.mubr.f32.gmra.mrb[0].mxu0 %v1960
    %v2035 = vpop.f32.mrb[0].mxu0
    %v2036 = vadd.f32 0.0, %v2035
    %v2037 = vpop.f32.mrb[0].mxu0
    %2038 = vdwg.mxu0
    %v2039 = vadd.f32 %v1939, %v2031
    %v2040 = vadd.f32 %v1944, %v2036
    %s2041 = scalar_lea.vmem %s16, 48
    %v2042 = vld [vmem:[%s2041] sm:$0xff]
    %v2043 = vld [vmem:[%s2041 + $0x8] sm:$0x3f]
    %2044 = vrot.lane.b32.xlu0 %v1768, 88
    %v2045 = vpop.permute.xlu0 %2044
    %v2047 = vsel %vm1779, %v2042, 0
    %v2050 = vsel %vm1779, %v2043, 0
    %v2052 = vsel %vm1786, %v2045, 0
    %2054 = vmatprep.subr.mxu0 0.0
    %2055 = vmatpush1.msra.mxu0 %v2052
    %2056 = vmatprep.subr.mxu0 0.0
    %2057 = vmatpush1.msra.mxu0 0.0
    %2058 = vmatprep.subr.mxu0 0.0
    %2059 = vmatpush1.msra.mxu0 0.0
    %2060 = vmatprep.subr.mxu0 0.0
    %2061 = vmatpush1.msra.mxu0 0.0
    %2062 = vmatprep.subr.mxu0 0.0
    %2063 = vmatpush1.msra.mxu0 0.0
    %2064 = vmatprep.subr.mxu0 0.0
    %2065 = vmatpush1.msra.mxu0 0.0
    %2066 = vmatprep.subr.mxu0 0.0
    %2067 = vmatpush1.msra.mxu0 0.0
    %2068 = vmatprep.subr.mxu0 0.0
    %2069 = vmatpush1.msra.mxu0 0.0
    %2070 = vmatprep.subr.mxu0 0.0
    %2071 = vmatpush1.msra.mxu0 0.0
    %2072 = vmatprep.subr.mxu0 0.0
    %2073 = vmatpush1.msra.mxu0 0.0
    %2074 = vmatprep.subr.mxu0 0.0
    %2075 = vmatpush1.msra.mxu0 0.0
    %2076 = vmatprep.subr.mxu0 0.0
    %2077 = vmatpush1.msra.mxu0 0.0
    %2078 = vmatprep.subr.mxu0 0.0
    %2079 = vmatpush1.msra.mxu0 0.0
    %2080 = vmatprep.subr.mxu0 0.0
    %2081 = vmatpush1.msra.mxu0 0.0
    %2082 = vmatprep.subr.mxu0 0.0
    %2083 = vmatpush1.msra.mxu0 0.0
    %2084 = vmatprep.subr.mxu0 0.0
    %2085 = vmatpush1.msra.mxu0 0.0
    %2086 = vmatprep.subr.mxu0 0.0
    %2087 = vmatpush1.msra.mxu0 0.0
    %2088 = vmatprep.subr.mxu0 0.0
    %2089 = vmatpush1.msra.mxu0 0.0
    %2090 = vmatprep.subr.mxu0 0.0
    %2091 = vmatpush1.msra.mxu0 0.0
    %2092 = vmatprep.subr.mxu0 0.0
    %2093 = vmatpush1.msra.mxu0 0.0
    %2094 = vmatprep.subr.mxu0 0.0
    %2095 = vmatpush1.msra.mxu0 0.0
    %2096 = vmatprep.subr.mxu0 0.0
    %2097 = vmatpush1.msra.mxu0 0.0
    %2098 = vmatprep.subr.mxu0 0.0
    %2099 = vmatpush1.msra.mxu0 0.0
    %2100 = vmatprep.subr.mxu0 0.0
    %2101 = vmatpush1.msra.mxu0 0.0
    %2102 = vmatprep.subr.mxu0 0.0
    %2103 = vmatpush1.msra.mxu0 0.0
    %2104 = vmatprep.subr.mxu0 0.0
    %2105 = vmatpush1.msra.mxu0 0.0
    %2106 = vmatprep.subr.mxu0 0.0
    %2107 = vmatpush1.msra.mxu0 0.0
    %2108 = vmatprep.subr.mxu0 0.0
    %2109 = vmatpush1.msra.mxu0 0.0
    %2110 = vmatprep.subr.mxu0 0.0
    %2111 = vmatpush1.msra.mxu0 0.0
    %2112 = vmatprep.subr.mxu0 0.0
    %2113 = vmatpush1.msra.mxu0 0.0
    %2114 = vmatprep.subr.mxu0 0.0
    %2115 = vmatpush1.msra.mxu0 0.0
    %2116 = vmatprep.subr.mxu0 0.0
    %2117 = vmatpush1.msra.mxu0 0.0
    %2118 = vmatprep.mubr.f32.mxu0 0.0
    %2119 = vmatmul.mubr.f32.gmra.mrb[0].mxu0 %v2047
    %v2120 = vpop.f32.mrb[0].mxu0
    %v2121 = vadd.f32 0.0, %v2120
    %v2122 = vpop.f32.mrb[0].mxu0
    %2123 = vmatprep.mubr.f32.mxu0 0.0
    %2124 = vmatmul.mubr.f32.gmra.mrb[0].mxu0 %v2050
    %v2125 = vpop.f32.mrb[0].mxu0
    %v2126 = vadd.f32 0.0, %v2125
    %v2127 = vpop.f32.mrb[0].mxu0
    %2128 = vdwg.mxu0
    %v2129 = vadd.f32 %v2039, %v2121
    %v2130 = vadd.f32 %v2040, %v2126
    %s2131 = scalar_lea.vmem %s16, 64
    %v2132 = vld [vmem:[%s2131] sm:$0xff]
    %v2133 = vld [vmem:[%s2131 + $0x8] sm:$0x3f]
    %2135 = vrot.lane.b32.xlu0 %v1768, 32
    %v2136 = vpop.permute.xlu0 %2135
    %2137 = vrot.lane.b32.xlu0 %v1769, 32
    %v2138 = vpop.permute.xlu0 %2137
    %v2139 = vsel %vm1415, %v2136, %v2138
    %v2141 = vsel %vm1779, %v2132, 0
    %v2144 = vsel %vm1779, %v2133, 0
    %v2146 = vsel %vm1786, %v2139, 0
    %2148 = vmatprep.subr.mxu0 0.0
    %2149 = vmatpush1.msra.mxu0 %v2146
    %2150 = vmatprep.subr.mxu0 0.0
    %2151 = vmatpush1.msra.mxu0 0.0
    %2152 = vmatprep.subr.mxu0 0.0
    %2153 = vmatpush1.msra.mxu0 0.0
    %2154 = vmatprep.subr.mxu0 0.0
    %2155 = vmatpush1.msra.mxu0 0.0
    %2156 = vmatprep.subr.mxu0 0.0
    %2157 = vmatpush1.msra.mxu0 0.0
    %2158 = vmatprep.subr.mxu0 0.0
    %2159 = vmatpush1.msra.mxu0 0.0
    %2160 = vmatprep.subr.mxu0 0.0
    %2161 = vmatpush1.msra.mxu0 0.0
    %2162 = vmatprep.subr.mxu0 0.0
    %2163 = vmatpush1.msra.mxu0 0.0
    %2164 = vmatprep.subr.mxu0 0.0
    %2165 = vmatpush1.msra.mxu0 0.0
    %2166 = vmatprep.subr.mxu0 0.0
    %2167 = vmatpush1.msra.mxu0 0.0
    %2168 = vmatprep.subr.mxu0 0.0
    %2169 = vmatpush1.msra.mxu0 0.0
    %2170 = vmatprep.subr.mxu0 0.0
    %2171 = vmatpush1.msra.mxu0 0.0
    %2172 = vmatprep.subr.mxu0 0.0
    %2173 = vmatpush1.msra.mxu0 0.0
    %2174 = vmatprep.subr.mxu0 0.0
    %2175 = vmatpush1.msra.mxu0 0.0
    %2176 = vmatprep.subr.mxu0 0.0
    %2177 = vmatpush1.msra.mxu0 0.0
    %2178 = vmatprep.subr.mxu0 0.0
    %2179 = vmatpush1.msra.mxu0 0.0
    %2180 = vmatprep.subr.mxu0 0.0
    %2181 = vmatpush1.msra.mxu0 0.0
    %2182 = vmatprep.subr.mxu0 0.0
    %2183 = vmatpush1.msra.mxu0 0.0
    %2184 = vmatprep.subr.mxu0 0.0
    %2185 = vmatpush1.msra.mxu0 0.0
    %2186 = vmatprep.subr.mxu0 0.0
    %2187 = vmatpush1.msra.mxu0 0.0
    %2188 = vmatprep.subr.mxu0 0.0
    %2189 = vmatpush1.msra.mxu0 0.0
    %2190 = vmatprep.subr.mxu0 0.0
    %2191 = vmatpush1.msra.mxu0 0.0
    %2192 = vmatprep.subr.mxu0 0.0
    %2193 = vmatpush1.msra.mxu0 0.0
    %2194 = vmatprep.subr.mxu0 0.0
    %2195 = vmatpush1.msra.mxu0 0.0
    %2196 = vmatprep.subr.mxu0 0.0
    %2197 = vmatpush1.msra.mxu0 0.0
    %2198 = vmatprep.subr.mxu0 0.0
    %2199 = vmatpush1.msra.mxu0 0.0
    %2200 = vmatprep.subr.mxu0 0.0
    %2201 = vmatpush1.msra.mxu0 0.0
    %2202 = vmatprep.subr.mxu0 0.0
    %2203 = vmatpush1.msra.mxu0 0.0
    %2204 = vmatprep.subr.mxu0 0.0
    %2205 = vmatpush1.msra.mxu0 0.0
    %2206 = vmatprep.subr.mxu0 0.0
    %2207 = vmatpush1.msra.mxu0 0.0
    %2208 = vmatprep.subr.mxu0 0.0
    %2209 = vmatpush1.msra.mxu0 0.0
    %2210 = vmatprep.subr.mxu0 0.0
    %2211 = vmatpush1.msra.mxu0 0.0
    %2212 = vmatprep.mubr.f32.mxu0 0.0
    %2213 = vmatmul.mubr.f32.gmra.mrb[0].mxu0 %v2141
    %v2214 = vpop.f32.mrb[0].mxu0
    %v2215 = vadd.f32 0.0, %v2214
    %v2216 = vpop.f32.mrb[0].mxu0
    %2217 = vmatprep.mubr.f32.mxu0 0.0
    %2218 = vmatmul.mubr.f32.gmra.mrb[0].mxu0 %v2144
    %v2219 = vpop.f32.mrb[0].mxu0
    %v2220 = vadd.f32 0.0, %v2219
    %v2221 = vpop.f32.mrb[0].mxu0
    %2222 = vdwg.mxu0
    %v2223 = vadd.f32 %v2129, %v2215
    %v2224 = vadd.f32 %v2130, %v2220
    %s2225 = scalar_lea.vmem %s16, 80
    %v2226 = vld [vmem:[%s2225] sm:$0xff]
    %v2227 = vld [vmem:[%s2225 + $0x8] sm:$0x3f]
    %2228 = vrot.lane.b32.xlu0 %v1769, 104
    %v2229 = vpop.permute.xlu0 %2228
    %v2231 = vsel %vm1779, %v2226, 0
    %v2234 = vsel %vm1779, %v2227, 0
    %v2236 = vsel %vm1786, %v2229, 0
    %2238 = vmatprep.subr.mxu0 0.0
    %2239 = vmatpush1.msra.mxu0 %v2236
    %2240 = vmatprep.subr.mxu0 0.0
    %2241 = vmatpush1.msra.mxu0 0.0
    %2242 = vmatprep.subr.mxu0 0.0
    %2243 = vmatpush1.msra.mxu0 0.0
    %2244 = vmatprep.subr.mxu0 0.0
    %2245 = vmatpush1.msra.mxu0 0.0
    %2246 = vmatprep.subr.mxu0 0.0
    %2247 = vmatpush1.msra.mxu0 0.0
    %2248 = vmatprep.subr.mxu0 0.0
    %2249 = vmatpush1.msra.mxu0 0.0
    %2250 = vmatprep.subr.mxu0 0.0
    %2251 = vmatpush1.msra.mxu0 0.0
    %2252 = vmatprep.subr.mxu0 0.0
    %2253 = vmatpush1.msra.mxu0 0.0
    %2254 = vmatprep.subr.mxu0 0.0
    %2255 = vmatpush1.msra.mxu0 0.0
    %2256 = vmatprep.subr.mxu0 0.0
    %2257 = vmatpush1.msra.mxu0 0.0
    %2258 = vmatprep.subr.mxu0 0.0
    %2259 = vmatpush1.msra.mxu0 0.0
    %2260 = vmatprep.subr.mxu0 0.0
    %2261 = vmatpush1.msra.mxu0 0.0
    %2262 = vmatprep.subr.mxu0 0.0
    %2263 = vmatpush1.msra.mxu0 0.0
    %2264 = vmatprep.subr.mxu0 0.0
    %2265 = vmatpush1.msra.mxu0 0.0
    %2266 = vmatprep.subr.mxu0 0.0
    %2267 = vmatpush1.msra.mxu0 0.0
    %2268 = vmatprep.subr.mxu0 0.0
    %2269 = vmatpush1.msra.mxu0 0.0
    %2270 = vmatprep.subr.mxu0 0.0
    %2271 = vmatpush1.msra.mxu0 0.0
    %2272 = vmatprep.subr.mxu0 0.0
    %2273 = vmatpush1.msra.mxu0 0.0
    %2274 = vmatprep.subr.mxu0 0.0
    %2275 = vmatpush1.msra.mxu0 0.0
    %2276 = vmatprep.subr.mxu0 0.0
    %2277 = vmatpush1.msra.mxu0 0.0
    %2278 = vmatprep.subr.mxu0 0.0
    %2279 = vmatpush1.msra.mxu0 0.0
    %2280 = vmatprep.subr.mxu0 0.0
    %2281 = vmatpush1.msra.mxu0 0.0
    %2282 = vmatprep.subr.mxu0 0.0
    %2283 = vmatpush1.msra.mxu0 0.0
    %2284 = vmatprep.subr.mxu0 0.0
    %2285 = vmatpush1.msra.mxu0 0.0
    %2286 = vmatprep.subr.mxu0 0.0
    %2287 = vmatpush1.msra.mxu0 0.0
    %2288 = vmatprep.subr.mxu0 0.0
    %2289 = vmatpush1.msra.mxu0 0.0
    %2290 = vmatprep.subr.mxu0 0.0
    %2291 = vmatpush1.msra.mxu0 0.0
    %2292 = vmatprep.subr.mxu0 0.0
    %2293 = vmatpush1.msra.mxu0 0.0
    %2294 = vmatprep.subr.mxu0 0.0
    %2295 = vmatpush1.msra.mxu0 0.0
    %2296 = vmatprep.subr.mxu0 0.0
    %2297 = vmatpush1.msra.mxu0 0.0
    %2298 = vmatprep.subr.mxu0 0.0
    %2299 = vmatpush1.msra.mxu0 0.0
    %2300 = vmatprep.subr.mxu0 0.0
    %2301 = vmatpush1.msra.mxu0 0.0
    %2302 = vmatprep.mubr.f32.mxu0 0.0
    %2303 = vmatmul.mubr.f32.gmra.mrb[0].mxu0 %v2231
    %v2304 = vpop.f32.mrb[0].mxu0
    %v2305 = vadd.f32 0.0, %v2304
    %v2306 = vpop.f32.mrb[0].mxu0
    %2307 = vmatprep.mubr.f32.mxu0 0.0
    %2308 = vmatmul.mubr.f32.gmra.mrb[0].mxu0 %v2234
    %v2309 = vpop.f32.mrb[0].mxu0
    %v2310 = vadd.f32 0.0, %v2309
    %v2311 = vpop.f32.mrb[0].mxu0
    %2312 = vdwg.mxu0
    %v2313 = vadd.f32 %v2223, %v2305
    %v2314 = vadd.f32 %v2224, %v2310
    %s2315 = scalar_lea.vmem %s16, 96
    %v2316 = vld [vmem:[%s2315] sm:$0xff]
    %v2317 = vld [vmem:[%s2315 + $0x8] sm:$0x3f]
    %2319 = vrot.lane.b32.xlu0 %v1769, 48
    %v2320 = vpop.permute.xlu0 %2319
    %2321 = vrot.lane.b32.xlu0 %v1770, 48
    %v2322 = vpop.permute.xlu0 %2321
    %vm2323 = vcmask 392192
    %v2324 = vsel %vm2323, %v2320, %v2322
    %v2326 = vsel %vm1779, %v2316, 0
    %v2329 = vsel %vm1779, %v2317, 0
    %v2331 = vsel %vm1786, %v2324, 0
    %2333 = vmatprep.subr.mxu0 0.0
    %2334 = vmatpush1.msra.mxu0 %v2331
    %2335 = vmatprep.subr.mxu0 0.0
    %2336 = vmatpush1.msra.mxu0 0.0
    %2337 = vmatprep.subr.mxu0 0.0
    %2338 = vmatpush1.msra.mxu0 0.0
    %2339 = vmatprep.subr.mxu0 0.0
    %2340 = vmatpush1.msra.mxu0 0.0
    %2341 = vmatprep.subr.mxu0 0.0
    %2342 = vmatpush1.msra.mxu0 0.0
    %2343 = vmatprep.subr.mxu0 0.0
    %2344 = vmatpush1.msra.mxu0 0.0
    %2345 = vmatprep.subr.mxu0 0.0
    %2346 = vmatpush1.msra.mxu0 0.0
    %2347 = vmatprep.subr.mxu0 0.0
    %2348 = vmatpush1.msra.mxu0 0.0
    %2349 = vmatprep.subr.mxu0 0.0
    %2350 = vmatpush1.msra.mxu0 0.0
    %2351 = vmatprep.subr.mxu0 0.0
    %2352 = vmatpush1.msra.mxu0 0.0
    %2353 = vmatprep.subr.mxu0 0.0
    %2354 = vmatpush1.msra.mxu0 0.0
    %2355 = vmatprep.subr.mxu0 0.0
    %2356 = vmatpush1.msra.mxu0 0.0
    %2357 = vmatprep.subr.mxu0 0.0
    %2358 = vmatpush1.msra.mxu0 0.0
    %2359 = vmatprep.subr.mxu0 0.0
    %2360 = vmatpush1.msra.mxu0 0.0
    %2361 = vmatprep.subr.mxu0 0.0
    %2362 = vmatpush1.msra.mxu0 0.0
    %2363 = vmatprep.subr.mxu0 0.0
    %2364 = vmatpush1.msra.mxu0 0.0
    %2365 = vmatprep.subr.mxu0 0.0
    %2366 = vmatpush1.msra.mxu0 0.0
    %2367 = vmatprep.subr.mxu0 0.0
    %2368 = vmatpush1.msra.mxu0 0.0
    %2369 = vmatprep.subr.mxu0 0.0
    %2370 = vmatpush1.msra.mxu0 0.0
    %2371 = vmatprep.subr.mxu0 0.0
    %2372 = vmatpush1.msra.mxu0 0.0
    %2373 = vmatprep.subr.mxu0 0.0
    %2374 = vmatpush1.msra.mxu0 0.0
    %2375 = vmatprep.subr.mxu0 0.0
    %2376 = vmatpush1.msra.mxu0 0.0
    %2377 = vmatprep.subr.mxu0 0.0
    %2378 = vmatpush1.msra.mxu0 0.0
    %2379 = vmatprep.subr.mxu0 0.0
    %2380 = vmatpush1.msra.mxu0 0.0
    %2381 = vmatprep.subr.mxu0 0.0
    %2382 = vmatpush1.msra.mxu0 0.0
    %2383 = vmatprep.subr.mxu0 0.0
    %2384 = vmatpush1.msra.mxu0 0.0
    %2385 = vmatprep.subr.mxu0 0.0
    %2386 = vmatpush1.msra.mxu0 0.0
    %2387 = vmatprep.subr.mxu0 0.0
    %2388 = vmatpush1.msra.mxu0 0.0
    %2389 = vmatprep.subr.mxu0 0.0
    %2390 = vmatpush1.msra.mxu0 0.0
    %2391 = vmatprep.subr.mxu0 0.0
    %2392 = vmatpush1.msra.mxu0 0.0
    %2393 = vmatprep.subr.mxu0 0.0
    %2394 = vmatpush1.msra.mxu0 0.0
    %2395 = vmatprep.subr.mxu0 0.0
    %2396 = vmatpush1.msra.mxu0 0.0
    %2397 = vmatprep.mubr.f32.mxu0 0.0
    %2398 = vmatmul.mubr.f32.gmra.mrb[0].mxu0 %v2326
    %v2399 = vpop.f32.mrb[0].mxu0
    %v2400 = vadd.f32 0.0, %v2399
    %v2401 = vpop.f32.mrb[0].mxu0
    %2402 = vmatprep.mubr.f32.mxu0 0.0
    %2403 = vmatmul.mubr.f32.gmra.mrb[0].mxu0 %v2329
    %v2404 = vpop.f32.mrb[0].mxu0
    %v2405 = vadd.f32 0.0, %v2404
    %v2406 = vpop.f32.mrb[0].mxu0
    %2407 = vdwg.mxu0
    %v2408 = vadd.f32 %v2313, %v2400
    %v2409 = vadd.f32 %v2314, %v2405
    %v2410 = vpack.c.bf16 %v2409, %v2408
    %v2411 = vld [vmem:[%s17] sm:$0xf]
    %v2412 = vld [vmem:[%s17 + $0x4] sm:$0xf]
    %v2413 = vld [vmem:[%s17 + $0x8] sm:$0xf]
    %v2414 = vld [vmem:[%s17 + $0xc] sm:$0x3]
    %v2419 = vunpack.c.l.b16 %v2411
    %v2420 = vunpack.c.l.b16 %v2412
    %v2421 = vunpack.c.l.b16 %v2413
    %v2422 = vunpack.c.l.b16 %v2414
    %v2423 = vpack.c.b16 %v2420, %v2419
    %v2424 = vpack.c.b16 %v2422, %v2421
    %v2426 = vsel %vm1232, %v2423, 0
    %v2429 = vsel %vm1232, %v2424, 0
    %vm2431 = vcmask 1046528
    %v2433 = vsel %vm2431, %v2410, 0
    %2435 = vmatprep.subr.bf16.mxu0 0
    %2436 = vmatpush1.bf16.msra.mxu0 %v2433
    %2437 = vmatprep.subr.bf16.mxu0 0
    %2438 = vmatpush1.bf16.msra.mxu0 0
    %2439 = vmatprep.subr.bf16.mxu0 0
    %2440 = vmatpush1.bf16.msra.mxu0 0
    %2441 = vmatprep.subr.bf16.mxu0 0
    %2442 = vmatpush1.bf16.msra.mxu0 0
    %2443 = vmatprep.subr.bf16.mxu0 0
    %2444 = vmatpush1.bf16.msra.mxu0 0
    %2445 = vmatprep.subr.bf16.mxu0 0
    %2446 = vmatpush1.bf16.msra.mxu0 0
    %2447 = vmatprep.subr.bf16.mxu0 0
    %2448 = vmatpush1.bf16.msra.mxu0 0
    %2449 = vmatprep.subr.bf16.mxu0 0
    %2450 = vmatpush1.bf16.msra.mxu0 0
    %2451 = vmatprep.subr.bf16.mxu0 0
    %2452 = vmatpush1.bf16.msra.mxu0 0
    %2453 = vmatprep.subr.bf16.mxu0 0
    %2454 = vmatpush1.bf16.msra.mxu0 0
    %2455 = vmatprep.subr.bf16.mxu0 0
    %2456 = vmatpush1.bf16.msra.mxu0 0
    %2457 = vmatprep.subr.bf16.mxu0 0
    %2458 = vmatpush1.bf16.msra.mxu0 0
    %2459 = vmatprep.subr.bf16.mxu0 0
    %2460 = vmatpush1.bf16.msra.mxu0 0
    %2461 = vmatprep.subr.bf16.mxu0 0
    %2462 = vmatpush1.bf16.msra.mxu0 0
    %2463 = vmatprep.subr.bf16.mxu0 0
    %2464 = vmatpush1.bf16.msra.mxu0 0
    %2465 = vmatprep.subr.bf16.mxu0 0
    %2466 = vmatpush1.bf16.msra.mxu0 0
    %2467 = vmatprep.mubr.bf16.mxu0 0
    %2468 = vmatmul.mubr.bf16.gmra.mrb[0].mxu0 %v2426
    %v2469 = vpop.f32.mrb[0].mxu0
    %v2470 = vadd.f32 0.0, %v2469
    %v2471 = vpop.f32.mrb[0].mxu0
    %v2472 = vpop.f32.mrb[0].mxu0
    %v2473 = vadd.f32 0.0, %v2472
    %v2474 = vpop.f32.mrb[0].mxu0
    %2475 = vmatprep.mubr.bf16.mxu0 0
    %2476 = vmatmul.mubr.bf16.gmra.mrb[0].mxu0 %v2429
    %v2477 = vpop.f32.mrb[0].mxu0
    %v2478 = vadd.f32 0.0, %v2477
    %v2479 = vpop.f32.mrb[0].mxu0
    %v2480 = vpop.f32.mrb[0].mxu0
    %v2481 = vadd.f32 0.0, %v2480
    %v2482 = vpop.f32.mrb[0].mxu0
    %2483 = vdwg.mxu0
    %v2484 = vpack.c.bf16 %v2473, %v2470
    %v2485 = vpack.c.bf16 %v2481, %v2478
    %v2486 = vld [vmem:[%s18] sm:$0xf]
    %v2487 = vld [vmem:[%s18 + $0x4] sm:$0xf]
    %v2488 = vld [vmem:[%s18 + $0x8] sm:$0xf]
    %v2489 = vld [vmem:[%s18 + $0xc] sm:$0xf]
    %v2490 = vld [vmem:[%s18 + $0x10] sm:$0xf]
    %v2491 = vld [vmem:[%s18 + $0x14] sm:$0xf]
    %v2492 = vld [vmem:[%s18 + $0x18] sm:$0xf]
    %s2493 = scalar_lea.vmem %s17, 16
    %v2494 = vld [vmem:[%s2493] sm:$0xf]
    %v2495 = vld [vmem:[%s2493 + $0x4] sm:$0xf]
    %v2496 = vld [vmem:[%s2493 + $0x8] sm:$0xf]
    %v2497 = vld [vmem:[%s2493 + $0xc] sm:$0x3]
    %v2502 = vunpack.c.l.b16 %v2494
    %v2503 = vunpack.c.l.b16 %v2495
    %v2504 = vunpack.c.l.b16 %v2496
    %v2505 = vunpack.c.l.b16 %v2497
    %v2506 = vpack.c.b16 %v2503, %v2502
    %v2507 = vpack.c.b16 %v2505, %v2504
    %v2509 = vsel %vm1232, %v2506, 0
    %v2512 = vsel %vm1232, %v2507, 0
    %2514 = vmatprep.subr.bf16.mxu0 0
    %2515 = vmatpush1.bf16.msra.mxu0 %v2433
    %2516 = vmatprep.subr.bf16.mxu0 0
    %2517 = vmatpush1.bf16.msra.mxu0 0
    %2518 = vmatprep.subr.bf16.mxu0 0
    %2519 = vmatpush1.bf16.msra.mxu0 0
    %2520 = vmatprep.subr.bf16.mxu0 0
    %2521 = vmatpush1.bf16.msra.mxu0 0
    %2522 = vmatprep.subr.bf16.mxu0 0
    %2523 = vmatpush1.bf16.msra.mxu0 0
    %2524 = vmatprep.subr.bf16.mxu0 0
    %2525 = vmatpush1.bf16.msra.mxu0 0
    %2526 = vmatprep.subr.bf16.mxu0 0
    %2527 = vmatpush1.bf16.msra.mxu0 0
    %2528 = vmatprep.subr.bf16.mxu0 0
    %2529 = vmatpush1.bf16.msra.mxu0 0
    %2530 = vmatprep.subr.bf16.mxu0 0
    %2531 = vmatpush1.bf16.msra.mxu0 0
    %2532 = vmatprep.subr.bf16.mxu0 0
    %2533 = vmatpush1.bf16.msra.mxu0 0
    %2534 = vmatprep.subr.bf16.mxu0 0
    %2535 = vmatpush1.bf16.msra.mxu0 0
    %2536 = vmatprep.subr.bf16.mxu0 0
    %2537 = vmatpush1.bf16.msra.mxu0 0
    %2538 = vmatprep.subr.bf16.mxu0 0
    %2539 = vmatpush1.bf16.msra.mxu0 0
    %2540 = vmatprep.subr.bf16.mxu0 0
    %2541 = vmatpush1.bf16.msra.mxu0 0
    %2542 = vmatprep.subr.bf16.mxu0 0
    %2543 = vmatpush1.bf16.msra.mxu0 0
    %2544 = vmatprep.subr.bf16.mxu0 0
    %2545 = vmatpush1.bf16.msra.mxu0 0
    %2546 = vmatprep.mubr.bf16.mxu0 0
    %2547 = vmatmul.mubr.bf16.gmra.mrb[0].mxu0 %v2509
    %v2548 = vpop.f32.mrb[0].mxu0
    %v2549 = vadd.f32 0.0, %v2548
    %v2550 = vpop.f32.mrb[0].mxu0
    %v2551 = vpop.f32.mrb[0].mxu0
    %v2552 = vadd.f32 0.0, %v2551
    %v2553 = vpop.f32.mrb[0].mxu0
    %2554 = vmatprep.mubr.bf16.mxu0 0
    %2555 = vmatmul.mubr.bf16.gmra.mrb[0].mxu0 %v2512
    %v2556 = vpop.f32.mrb[0].mxu0
    %v2557 = vadd.f32 0.0, %v2556
    %v2558 = vpop.f32.mrb[0].mxu0
    %v2559 = vpop.f32.mrb[0].mxu0
    %v2560 = vadd.f32 0.0, %v2559
    %v2561 = vpop.f32.mrb[0].mxu0
    %2562 = vdwg.mxu0
    %v2563 = vpack.c.bf16 %v2552, %v2549
    %v2564 = vpack.c.bf16 %v2560, %v2557
    %s2565 = scalar_lea.vmem %s18, 28
    %v2566 = vld [vmem:[%s2565] sm:$0xf]
    %v2567 = vld [vmem:[%s2565 + $0x4] sm:$0xf]
    %v2568 = vld [vmem:[%s2565 + $0x8] sm:$0xf]
    %v2569 = vld [vmem:[%s2565 + $0xc] sm:$0xf]
    %v2570 = vld [vmem:[%s2565 + $0x10] sm:$0xf]
    %v2571 = vld [vmem:[%s2565 + $0x14] sm:$0xf]
    %v2572 = vld [vmem:[%s2565 + $0x18] sm:$0xf]
    %v2580 = vunpack.c.l.b16 %v2566
    %v2581 = vunpack.c.l.b16 %v2567
    %v2582 = vunpack.c.l.b16 %v2568
    %v2583 = vunpack.c.l.b16 %v2569
    %v2584 = vunpack.c.l.b16 %v2570
    %v2585 = vunpack.c.l.b16 %v2571
    %v2586 = vunpack.c.l.b16 %v2572
    %v2587 = vpack.c.b16 %v2581, %v2580
    %v2588 = vpack.c.b16 %v2583, %v2582
    %v2589 = vpack.c.b16 %v2585, %v2584
    %v2590 = vpack.c.b16 %v2586, %v2586
    %v2595 = vsel %vm294, %v2563, 0
    %v2598 = vsel %vm294, %v2564, 0
    %v2601 = vsel %vm301, %v2590, 0
    %2603 = vmatprep.subr.bf16.mxu0 0
    %2604 = vmatpush1.bf16.msra.mxu0 %v2587
    %2605 = vmatprep.subr.bf16.mxu0 0
    %2606 = vmatpush1.bf16.msra.mxu0 %v2588
    %2607 = vmatprep.subr.bf16.mxu0 0
    %2608 = vmatpush1.bf16.msra.mxu0 %v2589
    %2609 = vmatprep.subr.bf16.mxu0 0
    %2610 = vmatpush1.bf16.msra.mxu0 %v2601
    %2611 = vmatprep.subr.bf16.mxu0 0
    %2612 = vmatpush1.bf16.msra.mxu0 0
    %2613 = vmatprep.subr.bf16.mxu0 0
    %2614 = vmatpush1.bf16.msra.mxu0 0
    %2615 = vmatprep.subr.bf16.mxu0 0
    %2616 = vmatpush1.bf16.msra.mxu0 0
    %2617 = vmatprep.subr.bf16.mxu0 0
    %2618 = vmatpush1.bf16.msra.mxu0 0
    %2619 = vmatprep.subr.bf16.mxu0 0
    %2620 = vmatpush1.bf16.msra.mxu0 0
    %2621 = vmatprep.subr.bf16.mxu0 0
    %2622 = vmatpush1.bf16.msra.mxu0 0
    %2623 = vmatprep.subr.bf16.mxu0 0
    %2624 = vmatpush1.bf16.msra.mxu0 0
    %2625 = vmatprep.subr.bf16.mxu0 0
    %2626 = vmatpush1.bf16.msra.mxu0 0
    %2627 = vmatprep.subr.bf16.mxu0 0
    %2628 = vmatpush1.bf16.msra.mxu0 0
    %2629 = vmatprep.subr.bf16.mxu0 0
    %2630 = vmatpush1.bf16.msra.mxu0 0
    %2631 = vmatprep.subr.bf16.mxu0 0
    %2632 = vmatpush1.bf16.msra.mxu0 0
    %2633 = vmatprep.subr.bf16.mxu0 0
    %2634 = vmatpush1.bf16.msra.mxu0 0
    %2635 = vmatprep.mubr.bf16.mxu0 0
    %2636 = vmatmul.mubr.bf16.gmra.mrb[0].mxu0 %v2595
    %v2637 = vpop.f32.mrb[0].mxu0
    %v2638 = vadd.f32 0.0, %v2637
    %v2639 = vpop.f32.mrb[0].mxu0
    %v2640 = vpop.f32.mrb[0].mxu0
    %v2641 = vadd.f32 0.0, %v2640
    %v2642 = vpop.f32.mrb[0].mxu0
    %2643 = vmatprep.mubr.bf16.mxu0 0
    %2644 = vmatmul.mubr.bf16.gmra.mrb[0].mxu0 %v2598
    %v2645 = vpop.f32.mrb[0].mxu0
    %v2646 = vadd.f32 0.0, %v2645
    %v2647 = vpop.f32.mrb[0].mxu0
    %v2648 = vpop.f32.mrb[0].mxu0
    %v2649 = vadd.f32 0.0, %v2648
    %v2650 = vpop.f32.mrb[0].mxu0
    %2651 = vdwg.mxu0
    %v2659 = vunpack.c.l.b16 %v2486
    %v2660 = vunpack.c.l.b16 %v2487
    %v2661 = vunpack.c.l.b16 %v2488
    %v2662 = vunpack.c.l.b16 %v2489
    %v2663 = vunpack.c.l.b16 %v2490
    %v2664 = vunpack.c.l.b16 %v2491
    %v2665 = vunpack.c.l.b16 %v2492
    %v2666 = vpack.c.b16 %v2660, %v2659
    %v2667 = vpack.c.b16 %v2662, %v2661
    %v2668 = vpack.c.b16 %v2664, %v2663
    %v2669 = vpack.c.b16 %v2665, %v2665
    %v2674 = vsel %vm294, %v2484, 0
    %v2677 = vsel %vm294, %v2485, 0
    %v2680 = vsel %vm301, %v2669, 0
    %2682 = vmatprep.subr.bf16.mxu0 0
    %2683 = vmatpush1.bf16.msra.mxu0 %v2666
    %2684 = vmatprep.subr.bf16.mxu0 0
    %2685 = vmatpush1.bf16.msra.mxu0 %v2667
    %2686 = vmatprep.subr.bf16.mxu0 0
    %2687 = vmatpush1.bf16.msra.mxu0 %v2668
    %2688 = vmatprep.subr.bf16.mxu0 0
    %2689 = vmatpush1.bf16.msra.mxu0 %v2680
    %2690 = vmatprep.subr.bf16.mxu0 0
    %2691 = vmatpush1.bf16.msra.mxu0 0
    %2692 = vmatprep.subr.bf16.mxu0 0
    %2693 = vmatpush1.bf16.msra.mxu0 0
    %2694 = vmatprep.subr.bf16.mxu0 0
    %2695 = vmatpush1.bf16.msra.mxu0 0
    %2696 = vmatprep.subr.bf16.mxu0 0
    %2697 = vmatpush1.bf16.msra.mxu0 0
    %2698 = vmatprep.subr.bf16.mxu0 0
    %2699 = vmatpush1.bf16.msra.mxu0 0
    %2700 = vmatprep.subr.bf16.mxu0 0
    %2701 = vmatpush1.bf16.msra.mxu0 0
    %2702 = vmatprep.subr.bf16.mxu0 0
    %2703 = vmatpush1.bf16.msra.mxu0 0
    %2704 = vmatprep.subr.bf16.mxu0 0
    %2705 = vmatpush1.bf16.msra.mxu0 0
    %2706 = vmatprep.subr.bf16.mxu0 0
    %2707 = vmatpush1.bf16.msra.mxu0 0
    %2708 = vmatprep.subr.bf16.mxu0 0
    %2709 = vmatpush1.bf16.msra.mxu0 0
    %2710 = vmatprep.subr.bf16.mxu0 0
    %2711 = vmatpush1.bf16.msra.mxu0 0
    %2712 = vmatprep.subr.bf16.mxu0 0
    %2713 = vmatpush1.bf16.msra.mxu0 0
    %2714 = vmatprep.mubr.bf16.mxu0 0
    %2715 = vmatmul.mubr.bf16.gmra.mrb[0].mxu0 %v2674
    %v2716 = vpop.f32.mrb[0].mxu0
    %v2717 = vadd.f32 %v2638, %v2716
    %v2718 = vpop.f32.mrb[0].mxu0
    %v2719 = vpop.f32.mrb[0].mxu0
    %v2720 = vadd.f32 %v2641, %v2719
    %v2721 = vpop.f32.mrb[0].mxu0
    %2722 = vmatprep.mubr.bf16.mxu0 0
    %2723 = vmatmul.mubr.bf16.gmra.mrb[0].mxu0 %v2677
    %v2724 = vpop.f32.mrb[0].mxu0
    %v2725 = vadd.f32 %v2646, %v2724
    %v2726 = vpop.f32.mrb[0].mxu0
    %v2727 = vpop.f32.mrb[0].mxu0
    %v2728 = vadd.f32 %v2649, %v2727
    %v2729 = vpop.f32.mrb[0].mxu0
    %2730 = vdwg.mxu0
    %s2731 = scalar_lea.vmem %s17, 32
    %v2732 = vld [vmem:[%s2731] sm:$0xf]
    %v2733 = vld [vmem:[%s2731 + $0x4] sm:$0xf]
    %v2734 = vld [vmem:[%s2731 + $0x8] sm:$0xf]
    %v2735 = vld [vmem:[%s2731 + $0xc] sm:$0x3]
    %v2740 = vunpack.c.l.b16 %v2732
    %v2741 = vunpack.c.l.b16 %v2733
    %v2742 = vunpack.c.l.b16 %v2734
    %v2743 = vunpack.c.l.b16 %v2735
    %v2744 = vpack.c.b16 %v2741, %v2740
    %v2745 = vpack.c.b16 %v2743, %v2742
    %v2747 = vsel %vm1232, %v2744, 0
    %v2750 = vsel %vm1232, %v2745, 0
    %2752 = vmatprep.subr.bf16.mxu0 0
    %2753 = vmatpush1.bf16.msra.mxu0 %v2433
    %2754 = vmatprep.subr.bf16.mxu0 0
    %2755 = vmatpush1.bf16.msra.mxu0 0
    %2756 = vmatprep.subr.bf16.mxu0 0
    %2757 = vmatpush1.bf16.msra.mxu0 0
    %2758 = vmatprep.subr.bf16.mxu0 0
    %2759 = vmatpush1.bf16.msra.mxu0 0
    %2760 = vmatprep.subr.bf16.mxu0 0
    %2761 = vmatpush1.bf16.msra.mxu0 0
    %2762 = vmatprep.subr.bf16.mxu0 0
    %2763 = vmatpush1.bf16.msra.mxu0 0
    %2764 = vmatprep.subr.bf16.mxu0 0
    %2765 = vmatpush1.bf16.msra.mxu0 0
    %2766 = vmatprep.subr.bf16.mxu0 0
    %2767 = vmatpush1.bf16.msra.mxu0 0
    %2768 = vmatprep.subr.bf16.mxu0 0
    %2769 = vmatpush1.bf16.msra.mxu0 0
    %2770 = vmatprep.subr.bf16.mxu0 0
    %2771 = vmatpush1.bf16.msra.mxu0 0
    %2772 = vmatprep.subr.bf16.mxu0 0
    %2773 = vmatpush1.bf16.msra.mxu0 0
    %2774 = vmatprep.subr.bf16.mxu0 0
    %2775 = vmatpush1.bf16.msra.mxu0 0
    %2776 = vmatprep.subr.bf16.mxu0 0
    %2777 = vmatpush1.bf16.msra.mxu0 0
    %2778 = vmatprep.subr.bf16.mxu0 0
    %2779 = vmatpush1.bf16.msra.mxu0 0
    %2780 = vmatprep.subr.bf16.mxu0 0
    %2781 = vmatpush1.bf16.msra.mxu0 0
    %2782 = vmatprep.subr.bf16.mxu0 0
    %2783 = vmatpush1.bf16.msra.mxu0 0
    %2784 = vmatprep.mubr.bf16.mxu0 0
    %2785 = vmatmul.mubr.bf16.gmra.mrb[0].mxu0 %v2747
    %v2786 = vpop.f32.mrb[0].mxu0
    %v2787 = vadd.f32 0.0, %v2786
    %v2788 = vpop.f32.mrb[0].mxu0
    %v2789 = vpop.f32.mrb[0].mxu0
    %v2790 = vadd.f32 0.0, %v2789
    %v2791 = vpop.f32.mrb[0].mxu0
    %2792 = vmatprep.mubr.bf16.mxu0 0
    %2793 = vmatmul.mubr.bf16.gmra.mrb[0].mxu0 %v2750
    %v2794 = vpop.f32.mrb[0].mxu0
    %v2795 = vadd.f32 0.0, %v2794
    %v2796 = vpop.f32.mrb[0].mxu0
    %v2797 = vpop.f32.mrb[0].mxu0
    %v2798 = vadd.f32 0.0, %v2797
    %v2799 = vpop.f32.mrb[0].mxu0
    %2800 = vdwg.mxu0
    %v2801 = vpack.c.bf16 %v2790, %v2787
    %v2802 = vpack.c.bf16 %v2798, %v2795
    %s2803 = scalar_lea.vmem %s18, 56
    %v2804 = vld [vmem:[%s2803] sm:$0xf]
    %v2805 = vld [vmem:[%s2803 + $0x4] sm:$0xf]
    %v2806 = vld [vmem:[%s2803 + $0x8] sm:$0xf]
    %v2807 = vld [vmem:[%s2803 + $0xc] sm:$0xf]
    %v2808 = vld [vmem:[%s2803 + $0x10] sm:$0xf]
    %v2809 = vld [vmem:[%s2803 + $0x14] sm:$0xf]
    %v2810 = vld [vmem:[%s2803 + $0x18] sm:$0xf]
    %v2818 = vunpack.c.l.b16 %v2804
    %v2819 = vunpack.c.l.b16 %v2805
    %v2820 = vunpack.c.l.b16 %v2806
    %v2821 = vunpack.c.l.b16 %v2807
    %v2822 = vunpack.c.l.b16 %v2808
    %v2823 = vunpack.c.l.b16 %v2809
    %v2824 = vunpack.c.l.b16 %v2810
    %v2825 = vpack.c.b16 %v2819, %v2818
    %v2826 = vpack.c.b16 %v2821, %v2820
    %v2827 = vpack.c.b16 %v2823, %v2822
    %v2828 = vpack.c.b16 %v2824, %v2824
    %v2833 = vsel %vm294, %v2801, 0
    %v2836 = vsel %vm294, %v2802, 0
    %v2839 = vsel %vm301, %v2828, 0
    %2841 = vmatprep.subr.bf16.mxu0 0
    %2842 = vmatpush1.bf16.msra.mxu0 %v2825
    %2843 = vmatprep.subr.bf16.mxu0 0
    %2844 = vmatpush1.bf16.msra.mxu0 %v2826
    %2845 = vmatprep.subr.bf16.mxu0 0
    %2846 = vmatpush1.bf16.msra.mxu0 %v2827
    %2847 = vmatprep.subr.bf16.mxu0 0
    %2848 = vmatpush1.bf16.msra.mxu0 %v2839
    %2849 = vmatprep.subr.bf16.mxu0 0
    %2850 = vmatpush1.bf16.msra.mxu0 0
    %2851 = vmatprep.subr.bf16.mxu0 0
    %2852 = vmatpush1.bf16.msra.mxu0 0
    %2853 = vmatprep.subr.bf16.mxu0 0
    %2854 = vmatpush1.bf16.msra.mxu0 0
    %2855 = vmatprep.subr.bf16.mxu0 0
    %2856 = vmatpush1.bf16.msra.mxu0 0
    %2857 = vmatprep.subr.bf16.mxu0 0
    %2858 = vmatpush1.bf16.msra.mxu0 0
    %2859 = vmatprep.subr.bf16.mxu0 0
    %2860 = vmatpush1.bf16.msra.mxu0 0
    %2861 = vmatprep.subr.bf16.mxu0 0
    %2862 = vmatpush1.bf16.msra.mxu0 0
    %2863 = vmatprep.subr.bf16.mxu0 0
    %2864 = vmatpush1.bf16.msra.mxu0 0
    %2865 = vmatprep.subr.bf16.mxu0 0
    %2866 = vmatpush1.bf16.msra.mxu0 0
    %2867 = vmatprep.subr.bf16.mxu0 0
    %2868 = vmatpush1.bf16.msra.mxu0 0
    %2869 = vmatprep.subr.bf16.mxu0 0
    %2870 = vmatpush1.bf16.msra.mxu0 0
    %2871 = vmatprep.subr.bf16.mxu0 0
    %2872 = vmatpush1.bf16.msra.mxu0 0
    %2873 = vmatprep.mubr.bf16.mxu0 0
    %2874 = vmatmul.mubr.bf16.gmra.mrb[0].mxu0 %v2833
    %v2875 = vpop.f32.mrb[0].mxu0
    %v2876 = vadd.f32 0.0, %v2875
    %v2877 = vpop.f32.mrb[0].mxu0
    %v2878 = vpop.f32.mrb[0].mxu0
    %v2879 = vadd.f32 0.0, %v2878
    %v2880 = vpop.f32.mrb[0].mxu0
    %2881 = vmatprep.mubr.bf16.mxu0 0
    %2882 = vmatmul.mubr.bf16.gmra.mrb[0].mxu0 %v2836
    %v2883 = vpop.f32.mrb[0].mxu0
    %v2884 = vadd.f32 0.0, %v2883
    %v2885 = vpop.f32.mrb[0].mxu0
    %v2886 = vpop.f32.mrb[0].mxu0
    %v2887 = vadd.f32 0.0, %v2886
    %v2888 = vpop.f32.mrb[0].mxu0
    %2889 = vdwg.mxu0
    %v2890 = vadd.f32 %v2717, %v2876
    %v2891 = vadd.f32 %v2720, %v2879
    %v2892 = vadd.f32 %v2725, %v2884
    %v2893 = vadd.f32 %v2728, %v2887
    %s2894 = scalar_lea.vmem %s17, 48
    %v2895 = vld [vmem:[%s2894] sm:$0xf]
    %v2896 = vld [vmem:[%s2894 + $0x4] sm:$0xf]
    %v2897 = vld [vmem:[%s2894 + $0x8] sm:$0xf]
    %v2898 = vld [vmem:[%s2894 + $0xc] sm:$0x3]
    %v2903 = vunpack.c.l.b16 %v2895
    %v2904 = vunpack.c.l.b16 %v2896
    %v2905 = vunpack.c.l.b16 %v2897
    %v2906 = vunpack.c.l.b16 %v2898
    %v2907 = vpack.c.b16 %v2904, %v2903
    %v2908 = vpack.c.b16 %v2906, %v2905
    %v2910 = vsel %vm1232, %v2907, 0
    %v2913 = vsel %vm1232, %v2908, 0
    %2915 = vmatprep.subr.bf16.mxu0 0
    %2916 = vmatpush1.bf16.msra.mxu0 %v2433
    %2917 = vmatprep.subr.bf16.mxu0 0
    %2918 = vmatpush1.bf16.msra.mxu0 0
    %2919 = vmatprep.subr.bf16.mxu0 0
    %2920 = vmatpush1.bf16.msra.mxu0 0
    %2921 = vmatprep.subr.bf16.mxu0 0
    %2922 = vmatpush1.bf16.msra.mxu0 0
    %2923 = vmatprep.subr.bf16.mxu0 0
    %2924 = vmatpush1.bf16.msra.mxu0 0
    %2925 = vmatprep.subr.bf16.mxu0 0
    %2926 = vmatpush1.bf16.msra.mxu0 0
    %2927 = vmatprep.subr.bf16.mxu0 0
    %2928 = vmatpush1.bf16.msra.mxu0 0
    %2929 = vmatprep.subr.bf16.mxu0 0
    %2930 = vmatpush1.bf16.msra.mxu0 0
    %2931 = vmatprep.subr.bf16.mxu0 0
    %2932 = vmatpush1.bf16.msra.mxu0 0
    %2933 = vmatprep.subr.bf16.mxu0 0
    %2934 = vmatpush1.bf16.msra.mxu0 0
    %2935 = vmatprep.subr.bf16.mxu0 0
    %2936 = vmatpush1.bf16.msra.mxu0 0
    %2937 = vmatprep.subr.bf16.mxu0 0
    %2938 = vmatpush1.bf16.msra.mxu0 0
    %2939 = vmatprep.subr.bf16.mxu0 0
    %2940 = vmatpush1.bf16.msra.mxu0 0
    %2941 = vmatprep.subr.bf16.mxu0 0
    %2942 = vmatpush1.bf16.msra.mxu0 0
    %2943 = vmatprep.subr.bf16.mxu0 0
    %2944 = vmatpush1.bf16.msra.mxu0 0
    %2945 = vmatprep.subr.bf16.mxu0 0
    %2946 = vmatpush1.bf16.msra.mxu0 0
    %2947 = vmatprep.mubr.bf16.mxu0 0
    %2948 = vmatmul.mubr.bf16.gmra.mrb[0].mxu0 %v2910
    %v2949 = vpop.f32.mrb[0].mxu0
    %v2950 = vadd.f32 0.0, %v2949
    %v2951 = vpop.f32.mrb[0].mxu0
    %v2952 = vpop.f32.mrb[0].mxu0
    %v2953 = vadd.f32 0.0, %v2952
    %v2954 = vpop.f32.mrb[0].mxu0
    %2955 = vmatprep.mubr.bf16.mxu0 0
    %2956 = vmatmul.mubr.bf16.gmra.mrb[0].mxu0 %v2913
    %v2957 = vpop.f32.mrb[0].mxu0
    %v2958 = vadd.f32 0.0, %v2957
    %v2959 = vpop.f32.mrb[0].mxu0
    %v2960 = vpop.f32.mrb[0].mxu0
    %v2961 = vadd.f32 0.0, %v2960
    %v2962 = vpop.f32.mrb[0].mxu0
    %2963 = vdwg.mxu0
    %v2964 = vpack.c.bf16 %v2953, %v2950
    %v2965 = vpack.c.bf16 %v2961, %v2958
    %s2966 = scalar_lea.vmem %s18, 84
    %v2967 = vld [vmem:[%s2966] sm:$0xf]
    %v2968 = vld [vmem:[%s2966 + $0x4] sm:$0xf]
    %v2969 = vld [vmem:[%s2966 + $0x8] sm:$0xf]
    %v2970 = vld [vmem:[%s2966 + $0xc] sm:$0xf]
    %v2971 = vld [vmem:[%s2966 + $0x10] sm:$0xf]
    %v2972 = vld [vmem:[%s2966 + $0x14] sm:$0xf]
    %v2973 = vld [vmem:[%s2966 + $0x18] sm:$0xf]
    %v2981 = vunpack.c.l.b16 %v2967
    %v2982 = vunpack.c.l.b16 %v2968
    %v2983 = vunpack.c.l.b16 %v2969
    %v2984 = vunpack.c.l.b16 %v2970
    %v2985 = vunpack.c.l.b16 %v2971
    %v2986 = vunpack.c.l.b16 %v2972
    %v2987 = vunpack.c.l.b16 %v2973
    %v2988 = vpack.c.b16 %v2982, %v2981
    %v2989 = vpack.c.b16 %v2984, %v2983
    %v2990 = vpack.c.b16 %v2986, %v2985
    %v2991 = vpack.c.b16 %v2987, %v2987
    %v2996 = vsel %vm294, %v2964, 0
    %v2999 = vsel %vm294, %v2965, 0
    %v3002 = vsel %vm301, %v2991, 0
    %3004 = vmatprep.subr.bf16.mxu0 0
    %3005 = vmatpush1.bf16.msra.mxu0 %v2988
    %3006 = vmatprep.subr.bf16.mxu0 0
    %3007 = vmatpush1.bf16.msra.mxu0 %v2989
    %3008 = vmatprep.subr.bf16.mxu0 0
    %3009 = vmatpush1.bf16.msra.mxu0 %v2990
    %3010 = vmatprep.subr.bf16.mxu0 0
    %3011 = vmatpush1.bf16.msra.mxu0 %v3002
    %3012 = vmatprep.subr.bf16.mxu0 0
    %3013 = vmatpush1.bf16.msra.mxu0 0
    %3014 = vmatprep.subr.bf16.mxu0 0
    %3015 = vmatpush1.bf16.msra.mxu0 0
    %3016 = vmatprep.subr.bf16.mxu0 0
    %3017 = vmatpush1.bf16.msra.mxu0 0
    %3018 = vmatprep.subr.bf16.mxu0 0
    %3019 = vmatpush1.bf16.msra.mxu0 0
    %3020 = vmatprep.subr.bf16.mxu0 0
    %3021 = vmatpush1.bf16.msra.mxu0 0
    %3022 = vmatprep.subr.bf16.mxu0 0
    %3023 = vmatpush1.bf16.msra.mxu0 0
    %3024 = vmatprep.subr.bf16.mxu0 0
    %3025 = vmatpush1.bf16.msra.mxu0 0
    %3026 = vmatprep.subr.bf16.mxu0 0
    %3027 = vmatpush1.bf16.msra.mxu0 0
    %3028 = vmatprep.subr.bf16.mxu0 0
    %3029 = vmatpush1.bf16.msra.mxu0 0
    %3030 = vmatprep.subr.bf16.mxu0 0
    %3031 = vmatpush1.bf16.msra.mxu0 0
    %3032 = vmatprep.subr.bf16.mxu0 0
    %3033 = vmatpush1.bf16.msra.mxu0 0
    %3034 = vmatprep.subr.bf16.mxu0 0
    %3035 = vmatpush1.bf16.msra.mxu0 0
    %3036 = vmatprep.mubr.bf16.mxu0 0
    %3037 = vmatmul.mubr.bf16.gmra.mrb[0].mxu0 %v2996
    %v3038 = vpop.f32.mrb[0].mxu0
    %v3039 = vadd.f32 0.0, %v3038
    %v3040 = vpop.f32.mrb[0].mxu0
    %v3041 = vpop.f32.mrb[0].mxu0
    %v3042 = vadd.f32 0.0, %v3041
    %v3043 = vpop.f32.mrb[0].mxu0
    %3044 = vmatprep.mubr.bf16.mxu0 0
    %3045 = vmatmul.mubr.bf16.gmra.mrb[0].mxu0 %v2999
    %v3046 = vpop.f32.mrb[0].mxu0
    %v3047 = vadd.f32 0.0, %v3046
    %v3048 = vpop.f32.mrb[0].mxu0
    %v3049 = vpop.f32.mrb[0].mxu0
    %v3050 = vadd.f32 0.0, %v3049
    %v3051 = vpop.f32.mrb[0].mxu0
    %3052 = vdwg.mxu0
    %v3053 = vadd.f32 %v2890, %v3039
    %v3054 = vadd.f32 %v2891, %v3042
    %v3055 = vadd.f32 %v2892, %v3047
    %v3056 = vadd.f32 %v2893, %v3050
    %v3057 = vld [vmem:[#allocation22] sm:$0x1]
    %v3059 = vlaneseq
    %v3060 = vshrl.u32 %v3059, 7
    %v3061 = vsub.s32 0, %v3060
    %v3062 = vrot.slane %v3057, %v3061
    %v3064 = vadd.f32 %v3053, %v3062
    %v3065 = vadd.f32 %v3054, %v3062
    %v3066 = vadd.f32 %v3055, %v3062
    %v3067 = vadd.f32 %v3056, %v3062
    %v3068 = vmax.f32 %v3064, 0.0
    %v3069 = vmax.f32 %v3065, 0.0
    %v3070 = vmax.f32 %v3066, 0.0
    %v3071 = vmax.f32 %v3067, 0.0
    %v3072 = vpack.c.bf16 %v3069, %v3068
    %v3073 = vpack.c.bf16 %v3071, %v3070
    %v3074 = vld [vmem:[%s20] sm:$0xf]
    %v3075 = vld [vmem:[%s20 + $0x4] sm:$0xf]
    %v3076 = vld [vmem:[%s20 + $0x8] sm:$0xf]
    %v3077 = vld [vmem:[%s20 + $0xc] sm:$0x3]
    %v3082 = vunpack.c.l.b16 %v3074
    %v3083 = vunpack.c.l.b16 %v3075
    %v3084 = vunpack.c.l.b16 %v3076
    %v3085 = vunpack.c.l.b16 %v3077
    %v3086 = vpack.c.b16 %v3083, %v3082
    %v3087 = vpack.c.b16 %v3085, %v3084
    %v3089 = vsel %vm448, %v3086, 0
    %v3092 = vsel %vm448, %v3087, 0
    %v3095 = vsel %vm455, %v3073, 0
    %3097 = vmatprep.subr.bf16.mxu0 0
    %3098 = vmatpush1.bf16.msra.mxu0 %v3072
    %3099 = vmatprep.subr.bf16.mxu0 0
    %3100 = vmatpush1.bf16.msra.mxu0 %v3095
    %3101 = vmatprep.subr.bf16.mxu0 0
    %3102 = vmatpush1.bf16.msra.mxu0 0
    %3103 = vmatprep.subr.bf16.mxu0 0
    %3104 = vmatpush1.bf16.msra.mxu0 0
    %3105 = vmatprep.subr.bf16.mxu0 0
    %3106 = vmatpush1.bf16.msra.mxu0 0
    %3107 = vmatprep.subr.bf16.mxu0 0
    %3108 = vmatpush1.bf16.msra.mxu0 0
    %3109 = vmatprep.subr.bf16.mxu0 0
    %3110 = vmatpush1.bf16.msra.mxu0 0
    %3111 = vmatprep.subr.bf16.mxu0 0
    %3112 = vmatpush1.bf16.msra.mxu0 0
    %3113 = vmatprep.subr.bf16.mxu0 0
    %3114 = vmatpush1.bf16.msra.mxu0 0
    %3115 = vmatprep.subr.bf16.mxu0 0
    %3116 = vmatpush1.bf16.msra.mxu0 0
    %3117 = vmatprep.subr.bf16.mxu0 0
    %3118 = vmatpush1.bf16.msra.mxu0 0
    %3119 = vmatprep.subr.bf16.mxu0 0
    %3120 = vmatpush1.bf16.msra.mxu0 0
    %3121 = vmatprep.subr.bf16.mxu0 0
    %3122 = vmatpush1.bf16.msra.mxu0 0
    %3123 = vmatprep.subr.bf16.mxu0 0
    %3124 = vmatpush1.bf16.msra.mxu0 0
    %3125 = vmatprep.subr.bf16.mxu0 0
    %3126 = vmatpush1.bf16.msra.mxu0 0
    %3127 = vmatprep.subr.bf16.mxu0 0
    %3128 = vmatpush1.bf16.msra.mxu0 0
    %3129 = vmatprep.mubr.bf16.mxu0 0
    %3130 = vmatmul.mubr.bf16.gmra.mrb[0].mxu0 %v3089
    %v3131 = vpop.f32.mrb[0].mxu0
    %v3132 = vadd.f32 0.0, %v3131
    %v3133 = vpop.f32.mrb[0].mxu0
    %v3134 = vpop.f32.mrb[0].mxu0
    %v3135 = vadd.f32 0.0, %v3134
    %v3136 = vpop.f32.mrb[0].mxu0
    %3137 = vmatprep.mubr.bf16.mxu0 0
    %3138 = vmatmul.mubr.bf16.gmra.mrb[0].mxu0 %v3092
    %v3139 = vpop.f32.mrb[0].mxu0
    %v3140 = vadd.f32 0.0, %v3139
    %v3141 = vpop.f32.mrb[0].mxu0
    %v3142 = vpop.f32.mrb[0].mxu0
    %v3143 = vadd.f32 0.0, %v3142
    %v3144 = vpop.f32.mrb[0].mxu0
    %3145 = vdwg.mxu0
    %v3146 = vpack.c.bf16 %v3135, %v3132
    %v3147 = vpack.c.bf16 %v3143, %v3140
    %v3148 = vld [vmem:[%s21] sm:$0xf]
    %v3149 = vld [vmem:[%s21 + $0x4] sm:$0xf]
    %v3150 = vld [vmem:[%s21 + $0x8] sm:$0xf]
    %v3151 = vld [vmem:[%s21 + $0xc] sm:$0xf]
    %v3152 = vld [vmem:[%s21 + $0x10] sm:$0xf]
    %v3153 = vld [vmem:[%s21 + $0x14] sm:$0xf]
    %v3154 = vld [vmem:[%s21 + $0x18] sm:$0xf]
    %v3155 = vld [vmem:[%s21 + $0x1c] sm:$0xf]
    %v3156 = vld [vmem:[%s21 + $0x20] sm:$0xf]
    %v3157 = vld [vmem:[%s21 + $0x24] sm:$0xf]
    %v3158 = vld [vmem:[%s21 + $0x28] sm:$0xf]
    %v3159 = vld [vmem:[%s21 + $0x2c] sm:$0xf]
    %v3160 = vld [vmem:[%s21 + $0x30] sm:$0xf]
    %v3161 = vld [vmem:[%s21 + $0x34] sm:$0xf]
    %s3162 = scalar_lea.vmem %s20, 16
    %v3163 = vld [vmem:[%s3162] sm:$0xf]
    %v3164 = vld [vmem:[%s3162 + $0x4] sm:$0xf]
    %v3165 = vld [vmem:[%s3162 + $0x8] sm:$0xf]
    %v3166 = vld [vmem:[%s3162 + $0xc] sm:$0x3]
    %v3171 = vunpack.c.l.b16 %v3163
    %v3172 = vunpack.c.l.b16 %v3164
    %v3173 = vunpack.c.l.b16 %v3165
    %v3174 = vunpack.c.l.b16 %v3166
    %v3175 = vpack.c.b16 %v3172, %v3171
    %v3176 = vpack.c.b16 %v3174, %v3173
    %v3178 = vsel %vm448, %v3175, 0
    %v3181 = vsel %vm448, %v3176, 0
    %3183 = vmatprep.subr.bf16.mxu0 0
    %3184 = vmatpush1.bf16.msra.mxu0 %v3072
    %3185 = vmatprep.subr.bf16.mxu0 0
    %3186 = vmatpush1.bf16.msra.mxu0 %v3095
    %3187 = vmatprep.subr.bf16.mxu0 0
    %3188 = vmatpush1.bf16.msra.mxu0 0
    %3189 = vmatprep.subr.bf16.mxu0 0
    %3190 = vmatpush1.bf16.msra.mxu0 0
    %3191 = vmatprep.subr.bf16.mxu0 0
    %3192 = vmatpush1.bf16.msra.mxu0 0
    %3193 = vmatprep.subr.bf16.mxu0 0
    %3194 = vmatpush1.bf16.msra.mxu0 0
    %3195 = vmatprep.subr.bf16.mxu0 0
    %3196 = vmatpush1.bf16.msra.mxu0 0
    %3197 = vmatprep.subr.bf16.mxu0 0
    %3198 = vmatpush1.bf16.msra.mxu0 0
    %3199 = vmatprep.subr.bf16.mxu0 0
    %3200 = vmatpush1.bf16.msra.mxu0 0
    %3201 = vmatprep.subr.bf16.mxu0 0
    %3202 = vmatpush1.bf16.msra.mxu0 0
    %3203 = vmatprep.subr.bf16.mxu0 0
    %3204 = vmatpush1.bf16.msra.mxu0 0
    %3205 = vmatprep.subr.bf16.mxu0 0
    %3206 = vmatpush1.bf16.msra.mxu0 0
    %3207 = vmatprep.subr.bf16.mxu0 0
    %3208 = vmatpush1.bf16.msra.mxu0 0
    %3209 = vmatprep.subr.bf16.mxu0 0
    %3210 = vmatpush1.bf16.msra.mxu0 0
    %3211 = vmatprep.subr.bf16.mxu0 0
    %3212 = vmatpush1.bf16.msra.mxu0 0
    %3213 = vmatprep.subr.bf16.mxu0 0
    %3214 = vmatpush1.bf16.msra.mxu0 0
    %3215 = vmatprep.mubr.bf16.mxu0 0
    %3216 = vmatmul.mubr.bf16.gmra.mrb[0].mxu0 %v3178
    %v3217 = vpop.f32.mrb[0].mxu0
    %v3218 = vadd.f32 0.0, %v3217
    %v3219 = vpop.f32.mrb[0].mxu0
    %v3220 = vpop.f32.mrb[0].mxu0
    %v3221 = vadd.f32 0.0, %v3220
    %v3222 = vpop.f32.mrb[0].mxu0
    %3223 = vmatprep.mubr.bf16.mxu0 0
    %3224 = vmatmul.mubr.bf16.gmra.mrb[0].mxu0 %v3181
    %v3225 = vpop.f32.mrb[0].mxu0
    %v3226 = vadd.f32 0.0, %v3225
    %v3227 = vpop.f32.mrb[0].mxu0
    %v3228 = vpop.f32.mrb[0].mxu0
    %v3229 = vadd.f32 0.0, %v3228
    %v3230 = vpop.f32.mrb[0].mxu0
    %3231 = vdwg.mxu0
    %v3232 = vpack.c.bf16 %v3221, %v3218
    %v3233 = vpack.c.bf16 %v3229, %v3226
    %s3234 = scalar_lea.vmem %s21, 56
    %v3235 = vld [vmem:[%s3234] sm:$0xf]
    %v3236 = vld [vmem:[%s3234 + $0x4] sm:$0xf]
    %v3237 = vld [vmem:[%s3234 + $0x8] sm:$0xf]
    %v3238 = vld [vmem:[%s3234 + $0xc] sm:$0xf]
    %v3239 = vld [vmem:[%s3234 + $0x10] sm:$0xf]
    %v3240 = vld [vmem:[%s3234 + $0x14] sm:$0xf]
    %v3241 = vld [vmem:[%s3234 + $0x18] sm:$0xf]
    %v3242 = vld [vmem:[%s3234 + $0x1c] sm:$0xf]
    %v3243 = vld [vmem:[%s3234 + $0x20] sm:$0xf]
    %v3244 = vld [vmem:[%s3234 + $0x24] sm:$0xf]
    %v3245 = vld [vmem:[%s3234 + $0x28] sm:$0xf]
    %v3246 = vld [vmem:[%s3234 + $0x2c] sm:$0xf]
    %v3247 = vld [vmem:[%s3234 + $0x30] sm:$0xf]
    %v3248 = vld [vmem:[%s3234 + $0x34] sm:$0xf]
    %v3263 = vunpack.c.l.b16 %v3235
    %v3264 = vunpack.c.l.b16 %v3236
    %v3265 = vunpack.c.l.b16 %v3237
    %v3266 = vunpack.c.l.b16 %v3238
    %v3267 = vunpack.c.l.b16 %v3239
    %v3268 = vunpack.c.l.b16 %v3240
    %v3269 = vunpack.c.l.b16 %v3241
    %v3270 = vunpack.c.l.b16 %v3242
    %v3271 = vunpack.c.l.b16 %v3243
    %v3272 = vunpack.c.l.b16 %v3244
    %v3273 = vunpack.c.l.b16 %v3245
    %v3274 = vunpack.c.l.b16 %v3246
    %v3275 = vunpack.c.l.b16 %v3247
    %v3276 = vunpack.c.l.b16 %v3248
    %v3277 = vpack.c.b16 %v3264, %v3263
    %v3278 = vpack.c.b16 %v3266, %v3265
    %v3279 = vpack.c.b16 %v3268, %v3267
    %v3280 = vpack.c.b16 %v3270, %v3269
    %v3281 = vpack.c.b16 %v3272, %v3271
    %v3282 = vpack.c.b16 %v3274, %v3273
    %v3283 = vpack.c.b16 %v3276, %v3275
    %v3292 = vsel %vm923, %v3232, 0
    %v3295 = vsel %vm923, %v3233, 0
    %3297 = vmatprep.subr.bf16.mxu0 0
    %3298 = vmatpush1.bf16.msra.mxu0 %v3277
    %3299 = vmatprep.subr.bf16.mxu0 0
    %3300 = vmatpush1.bf16.msra.mxu0 %v3278
    %3301 = vmatprep.subr.bf16.mxu0 0
    %3302 = vmatpush1.bf16.msra.mxu0 %v3279
    %3303 = vmatprep.subr.bf16.mxu0 0
    %3304 = vmatpush1.bf16.msra.mxu0 %v3280
    %3305 = vmatprep.subr.bf16.mxu0 0
    %3306 = vmatpush1.bf16.msra.mxu0 %v3281
    %3307 = vmatprep.subr.bf16.mxu0 0
    %3308 = vmatpush1.bf16.msra.mxu0 %v3282
    %3309 = vmatprep.subr.bf16.mxu0 0
    %3310 = vmatpush1.bf16.msra.mxu0 %v3283
    %3311 = vmatprep.subr.bf16.mxu0 0
    %3312 = vmatpush1.bf16.msra.mxu0 0
    %3313 = vmatprep.subr.bf16.mxu0 0
    %3314 = vmatpush1.bf16.msra.mxu0 0
    %3315 = vmatprep.subr.bf16.mxu0 0
    %3316 = vmatpush1.bf16.msra.mxu0 0
    %3317 = vmatprep.subr.bf16.mxu0 0
    %3318 = vmatpush1.bf16.msra.mxu0 0
    %3319 = vmatprep.subr.bf16.mxu0 0
    %3320 = vmatpush1.bf16.msra.mxu0 0
    %3321 = vmatprep.subr.bf16.mxu0 0
    %3322 = vmatpush1.bf16.msra.mxu0 0
    %3323 = vmatprep.subr.bf16.mxu0 0
    %3324 = vmatpush1.bf16.msra.mxu0 0
    %3325 = vmatprep.subr.bf16.mxu0 0
    %3326 = vmatpush1.bf16.msra.mxu0 0
    %3327 = vmatprep.subr.bf16.mxu0 0
    %3328 = vmatpush1.bf16.msra.mxu0 0
    %3329 = vmatprep.mubr.bf16.mxu0 0
    %3330 = vmatmul.mubr.bf16.gmra.mrb[0].mxu0 %v3292
    %v3331 = vpop.f32.mrb[0].mxu0
    %v3332 = vadd.f32 0.0, %v3331
    %v3333 = vpop.f32.mrb[0].mxu0
    %v3334 = vpop.f32.mrb[0].mxu0
    %v3335 = vadd.f32 0.0, %v3334
    %v3336 = vpop.f32.mrb[0].mxu0
    %3337 = vmatprep.mubr.bf16.mxu0 0
    %3338 = vmatmul.mubr.bf16.gmra.mrb[0].mxu0 %v3295
    %v3339 = vpop.f32.mrb[0].mxu0
    %v3340 = vadd.f32 0.0, %v3339
    %v3341 = vpop.f32.mrb[0].mxu0
    %v3342 = vpop.f32.mrb[0].mxu0
    %v3343 = vadd.f32 0.0, %v3342
    %v3344 = vpop.f32.mrb[0].mxu0
    %3345 = vdwg.mxu0
    %v3360 = vunpack.c.l.b16 %v3148
    %v3361 = vunpack.c.l.b16 %v3149
    %v3362 = vunpack.c.l.b16 %v3150
    %v3363 = vunpack.c.l.b16 %v3151
    %v3364 = vunpack.c.l.b16 %v3152
    %v3365 = vunpack.c.l.b16 %v3153
    %v3366 = vunpack.c.l.b16 %v3154
    %v3367 = vunpack.c.l.b16 %v3155
    %v3368 = vunpack.c.l.b16 %v3156
    %v3369 = vunpack.c.l.b16 %v3157
    %v3370 = vunpack.c.l.b16 %v3158
    %v3371 = vunpack.c.l.b16 %v3159
    %v3372 = vunpack.c.l.b16 %v3160
    %v3373 = vunpack.c.l.b16 %v3161
    %v3374 = vpack.c.b16 %v3361, %v3360
    %v3375 = vpack.c.b16 %v3363, %v3362
    %v3376 = vpack.c.b16 %v3365, %v3364
    %v3377 = vpack.c.b16 %v3367, %v3366
    %v3378 = vpack.c.b16 %v3369, %v3368
    %v3379 = vpack.c.b16 %v3371, %v3370
    %v3380 = vpack.c.b16 %v3373, %v3372
    %v3389 = vsel %vm923, %v3146, 0
    %v3392 = vsel %vm923, %v3147, 0
    %3394 = vmatprep.subr.bf16.mxu0 0
    %3395 = vmatpush1.bf16.msra.mxu0 %v3374
    %3396 = vmatprep.subr.bf16.mxu0 0
    %3397 = vmatpush1.bf16.msra.mxu0 %v3375
    %3398 = vmatprep.subr.bf16.mxu0 0
    %3399 = vmatpush1.bf16.msra.mxu0 %v3376
    %3400 = vmatprep.subr.bf16.mxu0 0
    %3401 = vmatpush1.bf16.msra.mxu0 %v3377
    %3402 = vmatprep.subr.bf16.mxu0 0
    %3403 = vmatpush1.bf16.msra.mxu0 %v3378
    %3404 = vmatprep.subr.bf16.mxu0 0
    %3405 = vmatpush1.bf16.msra.mxu0 %v3379
    %3406 = vmatprep.subr.bf16.mxu0 0
    %3407 = vmatpush1.bf16.msra.mxu0 %v3380
    %3408 = vmatprep.subr.bf16.mxu0 0
    %3409 = vmatpush1.bf16.msra.mxu0 0
    %3410 = vmatprep.subr.bf16.mxu0 0
    %3411 = vmatpush1.bf16.msra.mxu0 0
    %3412 = vmatprep.subr.bf16.mxu0 0
    %3413 = vmatpush1.bf16.msra.mxu0 0
    %3414 = vmatprep.subr.bf16.mxu0 0
    %3415 = vmatpush1.bf16.msra.mxu0 0
    %3416 = vmatprep.subr.bf16.mxu0 0
    %3417 = vmatpush1.bf16.msra.mxu0 0
    %3418 = vmatprep.subr.bf16.mxu0 0
    %3419 = vmatpush1.bf16.msra.mxu0 0
    %3420 = vmatprep.subr.bf16.mxu0 0
    %3421 = vmatpush1.bf16.msra.mxu0 0
    %3422 = vmatprep.subr.bf16.mxu0 0
    %3423 = vmatpush1.bf16.msra.mxu0 0
    %3424 = vmatprep.subr.bf16.mxu0 0
    %3425 = vmatpush1.bf16.msra.mxu0 0
    %3426 = vmatprep.mubr.bf16.mxu0 0
    %3427 = vmatmul.mubr.bf16.gmra.mrb[0].mxu0 %v3389
    %v3428 = vpop.f32.mrb[0].mxu0
    %v3429 = vadd.f32 %v3332, %v3428
    %v3430 = vpop.f32.mrb[0].mxu0
    %v3431 = vpop.f32.mrb[0].mxu0
    %v3432 = vadd.f32 %v3335, %v3431
    %v3433 = vpop.f32.mrb[0].mxu0
    %3434 = vmatprep.mubr.bf16.mxu0 0
    %3435 = vmatmul.mubr.bf16.gmra.mrb[0].mxu0 %v3392
    %v3436 = vpop.f32.mrb[0].mxu0
    %v3437 = vadd.f32 %v3340, %v3436
    %v3438 = vpop.f32.mrb[0].mxu0
    %v3439 = vpop.f32.mrb[0].mxu0
    %v3440 = vadd.f32 %v3343, %v3439
    %v3441 = vpop.f32.mrb[0].mxu0
    %3442 = vdwg.mxu0
    %s3443 = scalar_lea.vmem %s20, 32
    %v3444 = vld [vmem:[%s3443] sm:$0xf]
    %v3445 = vld [vmem:[%s3443 + $0x4] sm:$0xf]
    %v3446 = vld [vmem:[%s3443 + $0x8] sm:$0xf]
    %v3447 = vld [vmem:[%s3443 + $0xc] sm:$0x3]
    %v3452 = vunpack.c.l.b16 %v3444
    %v3453 = vunpack.c.l.b16 %v3445
    %v3454 = vunpack.c.l.b16 %v3446
    %v3455 = vunpack.c.l.b16 %v3447
    %v3456 = vpack.c.b16 %v3453, %v3452
    %v3457 = vpack.c.b16 %v3455, %v3454
    %v3459 = vsel %vm448, %v3456, 0
    %v3462 = vsel %vm448, %v3457, 0
    %3464 = vmatprep.subr.bf16.mxu0 0
    %3465 = vmatpush1.bf16.msra.mxu0 %v3072
    %3466 = vmatprep.subr.bf16.mxu0 0
    %3467 = vmatpush1.bf16.msra.mxu0 %v3095
    %3468 = vmatprep.subr.bf16.mxu0 0
    %3469 = vmatpush1.bf16.msra.mxu0 0
    %3470 = vmatprep.subr.bf16.mxu0 0
    %3471 = vmatpush1.bf16.msra.mxu0 0
    %3472 = vmatprep.subr.bf16.mxu0 0
    %3473 = vmatpush1.bf16.msra.mxu0 0
    %3474 = vmatprep.subr.bf16.mxu0 0
    %3475 = vmatpush1.bf16.msra.mxu0 0
    %3476 = vmatprep.subr.bf16.mxu0 0
    %3477 = vmatpush1.bf16.msra.mxu0 0
    %3478 = vmatprep.subr.bf16.mxu0 0
    %3479 = vmatpush1.bf16.msra.mxu0 0
    %3480 = vmatprep.subr.bf16.mxu0 0
    %3481 = vmatpush1.bf16.msra.mxu0 0
    %3482 = vmatprep.subr.bf16.mxu0 0
    %3483 = vmatpush1.bf16.msra.mxu0 0
    %3484 = vmatprep.subr.bf16.mxu0 0
    %3485 = vmatpush1.bf16.msra.mxu0 0
    %3486 = vmatprep.subr.bf16.mxu0 0
    %3487 = vmatpush1.bf16.msra.mxu0 0
    %3488 = vmatprep.subr.bf16.mxu0 0
    %3489 = vmatpush1.bf16.msra.mxu0 0
    %3490 = vmatprep.subr.bf16.mxu0 0
    %3491 = vmatpush1.bf16.msra.mxu0 0
    %3492 = vmatprep.subr.bf16.mxu0 0
    %3493 = vmatpush1.bf16.msra.mxu0 0
    %3494 = vmatprep.subr.bf16.mxu0 0
    %3495 = vmatpush1.bf16.msra.mxu0 0
    %3496 = vmatprep.mubr.bf16.mxu0 0
    %3497 = vmatmul.mubr.bf16.gmra.mrb[0].mxu0 %v3459
    %v3498 = vpop.f32.mrb[0].mxu0
    %v3499 = vadd.f32 0.0, %v3498
    %v3500 = vpop.f32.mrb[0].mxu0
    %v3501 = vpop.f32.mrb[0].mxu0
    %v3502 = vadd.f32 0.0, %v3501
    %v3503 = vpop.f32.mrb[0].mxu0
    %3504 = vmatprep.mubr.bf16.mxu0 0
    %3505 = vmatmul.mubr.bf16.gmra.mrb[0].mxu0 %v3462
    %v3506 = vpop.f32.mrb[0].mxu0
    %v3507 = vadd.f32 0.0, %v3506
    %v3508 = vpop.f32.mrb[0].mxu0
    %v3509 = vpop.f32.mrb[0].mxu0
    %v3510 = vadd.f32 0.0, %v3509
    %v3511 = vpop.f32.mrb[0].mxu0
    %3512 = vdwg.mxu0
    %v3513 = vpack.c.bf16 %v3502, %v3499
    %v3514 = vpack.c.bf16 %v3510, %v3507
    %s3515 = scalar_lea.vmem %s21, 112
    %v3516 = vld [vmem:[%s3515] sm:$0xf]
    %v3517 = vld [vmem:[%s3515 + $0x4] sm:$0xf]
    %v3518 = vld [vmem:[%s3515 + $0x8] sm:$0xf]
    %v3519 = vld [vmem:[%s3515 + $0xc] sm:$0xf]
    %v3520 = vld [vmem:[%s3515 + $0x10] sm:$0xf]
    %v3521 = vld [vmem:[%s3515 + $0x14] sm:$0xf]
    %v3522 = vld [vmem:[%s3515 + $0x18] sm:$0xf]
    %v3523 = vld [vmem:[%s3515 + $0x1c] sm:$0xf]
    %v3524 = vld [vmem:[%s3515 + $0x20] sm:$0xf]
    %v3525 = vld [vmem:[%s3515 + $0x24] sm:$0xf]
    %v3526 = vld [vmem:[%s3515 + $0x28] sm:$0xf]
    %v3527 = vld [vmem:[%s3515 + $0x2c] sm:$0xf]
    %v3528 = vld [vmem:[%s3515 + $0x30] sm:$0xf]
    %v3529 = vld [vmem:[%s3515 + $0x34] sm:$0xf]
    %v3544 = vunpack.c.l.b16 %v3516
    %v3545 = vunpack.c.l.b16 %v3517
    %v3546 = vunpack.c.l.b16 %v3518
    %v3547 = vunpack.c.l.b16 %v3519
    %v3548 = vunpack.c.l.b16 %v3520
    %v3549 = vunpack.c.l.b16 %v3521
    %v3550 = vunpack.c.l.b16 %v3522
    %v3551 = vunpack.c.l.b16 %v3523
    %v3552 = vunpack.c.l.b16 %v3524
    %v3553 = vunpack.c.l.b16 %v3525
    %v3554 = vunpack.c.l.b16 %v3526
    %v3555 = vunpack.c.l.b16 %v3527
    %v3556 = vunpack.c.l.b16 %v3528
    %v3557 = vunpack.c.l.b16 %v3529
    %v3558 = vpack.c.b16 %v3545, %v3544
    %v3559 = vpack.c.b16 %v3547, %v3546
    %v3560 = vpack.c.b16 %v3549, %v3548
    %v3561 = vpack.c.b16 %v3551, %v3550
    %v3562 = vpack.c.b16 %v3553, %v3552
    %v3563 = vpack.c.b16 %v3555, %v3554
    %v3564 = vpack.c.b16 %v3557, %v3556
    %v3573 = vsel %vm923, %v3513, 0
    %v3576 = vsel %vm923, %v3514, 0
    %3578 = vmatprep.subr.bf16.mxu0 0
    %3579 = vmatpush1.bf16.msra.mxu0 %v3558
    %3580 = vmatprep.subr.bf16.mxu0 0
    %3581 = vmatpush1.bf16.msra.mxu0 %v3559
    %3582 = vmatprep.subr.bf16.mxu0 0
    %3583 = vmatpush1.bf16.msra.mxu0 %v3560
    %3584 = vmatprep.subr.bf16.mxu0 0
    %3585 = vmatpush1.bf16.msra.mxu0 %v3561
    %3586 = vmatprep.subr.bf16.mxu0 0
    %3587 = vmatpush1.bf16.msra.mxu0 %v3562
    %3588 = vmatprep.subr.bf16.mxu0 0
    %3589 = vmatpush1.bf16.msra.mxu0 %v3563
    %3590 = vmatprep.subr.bf16.mxu0 0
    %3591 = vmatpush1.bf16.msra.mxu0 %v3564
    %3592 = vmatprep.subr.bf16.mxu0 0
    %3593 = vmatpush1.bf16.msra.mxu0 0
    %3594 = vmatprep.subr.bf16.mxu0 0
    %3595 = vmatpush1.bf16.msra.mxu0 0
    %3596 = vmatprep.subr.bf16.mxu0 0
    %3597 = vmatpush1.bf16.msra.mxu0 0
    %3598 = vmatprep.subr.bf16.mxu0 0
    %3599 = vmatpush1.bf16.msra.mxu0 0
    %3600 = vmatprep.subr.bf16.mxu0 0
    %3601 = vmatpush1.bf16.msra.mxu0 0
    %3602 = vmatprep.subr.bf16.mxu0 0
    %3603 = vmatpush1.bf16.msra.mxu0 0
    %3604 = vmatprep.subr.bf16.mxu0 0
    %3605 = vmatpush1.bf16.msra.mxu0 0
    %3606 = vmatprep.subr.bf16.mxu0 0
    %3607 = vmatpush1.bf16.msra.mxu0 0
    %3608 = vmatprep.subr.bf16.mxu0 0
    %3609 = vmatpush1.bf16.msra.mxu0 0
    %3610 = vmatprep.mubr.bf16.mxu0 0
    %3611 = vmatmul.mubr.bf16.gmra.mrb[0].mxu0 %v3573
    %v3612 = vpop.f32.mrb[0].mxu0
    %v3613 = vadd.f32 0.0, %v3612
    %v3614 = vpop.f32.mrb[0].mxu0
    %v3615 = vpop.f32.mrb[0].mxu0
    %v3616 = vadd.f32 0.0, %v3615
    %v3617 = vpop.f32.mrb[0].mxu0
    %3618 = vmatprep.mubr.bf16.mxu0 0
    %3619 = vmatmul.mubr.bf16.gmra.mrb[0].mxu0 %v3576
    %v3620 = vpop.f32.mrb[0].mxu0
    %v3621 = vadd.f32 0.0, %v3620
    %v3622 = vpop.f32.mrb[0].mxu0
    %v3623 = vpop.f32.mrb[0].mxu0
    %v3624 = vadd.f32 0.0, %v3623
    %v3625 = vpop.f32.mrb[0].mxu0
    %3626 = vdwg.mxu0
    %v3627 = vadd.f32 %v3429, %v3613
    %v3628 = vadd.f32 %v3432, %v3616
    %v3629 = vadd.f32 %v3437, %v3621
    %v3630 = vadd.f32 %v3440, %v3624
    %s3631 = scalar_lea.vmem %s20, 48
    %v3632 = vld [vmem:[%s3631] sm:$0xf]
    %v3633 = vld [vmem:[%s3631 + $0x4] sm:$0xf]
    %v3634 = vld [vmem:[%s3631 + $0x8] sm:$0xf]
    %v3635 = vld [vmem:[%s3631 + $0xc] sm:$0x3]
    %v3640 = vunpack.c.l.b16 %v3632
    %v3641 = vunpack.c.l.b16 %v3633
    %v3642 = vunpack.c.l.b16 %v3634
    %v3643 = vunpack.c.l.b16 %v3635
    %v3644 = vpack.c.b16 %v3641, %v3640
    %v3645 = vpack.c.b16 %v3643, %v3642
    %v3647 = vsel %vm448, %v3644, 0
    %v3650 = vsel %vm448, %v3645, 0
    %3652 = vmatprep.subr.bf16.mxu0 0
    %3653 = vmatpush1.bf16.msra.mxu0 %v3072
    %3654 = vmatprep.subr.bf16.mxu0 0
    %3655 = vmatpush1.bf16.msra.mxu0 %v3095
    %3656 = vmatprep.subr.bf16.mxu0 0
    %3657 = vmatpush1.bf16.msra.mxu0 0
    %3658 = vmatprep.subr.bf16.mxu0 0
    %3659 = vmatpush1.bf16.msra.mxu0 0
    %3660 = vmatprep.subr.bf16.mxu0 0
    %3661 = vmatpush1.bf16.msra.mxu0 0
    %3662 = vmatprep.subr.bf16.mxu0 0
    %3663 = vmatpush1.bf16.msra.mxu0 0
    %3664 = vmatprep.subr.bf16.mxu0 0
    %3665 = vmatpush1.bf16.msra.mxu0 0
    %3666 = vmatprep.subr.bf16.mxu0 0
    %3667 = vmatpush1.bf16.msra.mxu0 0
    %3668 = vmatprep.subr.bf16.mxu0 0
    %3669 = vmatpush1.bf16.msra.mxu0 0
    %3670 = vmatprep.subr.bf16.mxu0 0
    %3671 = vmatpush1.bf16.msra.mxu0 0
    %3672 = vmatprep.subr.bf16.mxu0 0
    %3673 = vmatpush1.bf16.msra.mxu0 0
    %3674 = vmatprep.subr.bf16.mxu0 0
    %3675 = vmatpush1.bf16.msra.mxu0 0
    %3676 = vmatprep.subr.bf16.mxu0 0
    %3677 = vmatpush1.bf16.msra.mxu0 0
    %3678 = vmatprep.subr.bf16.mxu0 0
    %3679 = vmatpush1.bf16.msra.mxu0 0
    %3680 = vmatprep.subr.bf16.mxu0 0
    %3681 = vmatpush1.bf16.msra.mxu0 0
    %3682 = vmatprep.subr.bf16.mxu0 0
    %3683 = vmatpush1.bf16.msra.mxu0 0
    %3684 = vmatprep.mubr.bf16.mxu0 0
    %3685 = vmatmul.mubr.bf16.gmra.mrb[0].mxu0 %v3647
    %v3686 = vpop.f32.mrb[0].mxu0
    %v3687 = vadd.f32 0.0, %v3686
    %v3688 = vpop.f32.mrb[0].mxu0
    %v3689 = vpop.f32.mrb[0].mxu0
    %v3690 = vadd.f32 0.0, %v3689
    %v3691 = vpop.f32.mrb[0].mxu0
    %3692 = vmatprep.mubr.bf16.mxu0 0
    %3693 = vmatmul.mubr.bf16.gmra.mrb[0].mxu0 %v3650
    %v3694 = vpop.f32.mrb[0].mxu0
    %v3695 = vadd.f32 0.0, %v3694
    %v3696 = vpop.f32.mrb[0].mxu0
    %v3697 = vpop.f32.mrb[0].mxu0
    %v3698 = vadd.f32 0.0, %v3697
    %v3699 = vpop.f32.mrb[0].mxu0
    %3700 = vdwg.mxu0
    %v3701 = vpack.c.bf16 %v3690, %v3687
    %v3702 = vpack.c.bf16 %v3698, %v3695
    %s3703 = scalar_lea.vmem %s21, 168
    %v3704 = vld [vmem:[%s3703] sm:$0xf]
    %v3705 = vld [vmem:[%s3703 + $0x4] sm:$0xf]
    %v3706 = vld [vmem:[%s3703 + $0x8] sm:$0xf]
    %v3707 = vld [vmem:[%s3703 + $0xc] sm:$0xf]
    %v3708 = vld [vmem:[%s3703 + $0x10] sm:$0xf]
    %v3709 = vld [vmem:[%s3703 + $0x14] sm:$0xf]
    %v3710 = vld [vmem:[%s3703 + $0x18] sm:$0xf]
    %v3711 = vld [vmem:[%s3703 + $0x1c] sm:$0xf]
    %v3712 = vld [vmem:[%s3703 + $0x20] sm:$0xf]
    %v3713 = vld [vmem:[%s3703 + $0x24] sm:$0xf]
    %v3714 = vld [vmem:[%s3703 + $0x28] sm:$0xf]
    %v3715 = vld [vmem:[%s3703 + $0x2c] sm:$0xf]
    %v3716 = vld [vmem:[%s3703 + $0x30] sm:$0xf]
    %v3717 = vld [vmem:[%s3703 + $0x34] sm:$0xf]
    %v3732 = vunpack.c.l.b16 %v3704
    %v3733 = vunpack.c.l.b16 %v3705
    %v3734 = vunpack.c.l.b16 %v3706
    %v3735 = vunpack.c.l.b16 %v3707
    %v3736 = vunpack.c.l.b16 %v3708
    %v3737 = vunpack.c.l.b16 %v3709
    %v3738 = vunpack.c.l.b16 %v3710
    %v3739 = vunpack.c.l.b16 %v3711
    %v3740 = vunpack.c.l.b16 %v3712
    %v3741 = vunpack.c.l.b16 %v3713
    %v3742 = vunpack.c.l.b16 %v3714
    %v3743 = vunpack.c.l.b16 %v3715
    %v3744 = vunpack.c.l.b16 %v3716
    %v3745 = vunpack.c.l.b16 %v3717
    %v3746 = vpack.c.b16 %v3733, %v3732
    %v3747 = vpack.c.b16 %v3735, %v3734
    %v3748 = vpack.c.b16 %v3737, %v3736
    %v3749 = vpack.c.b16 %v3739, %v3738
    %v3750 = vpack.c.b16 %v3741, %v3740
    %v3751 = vpack.c.b16 %v3743, %v3742
    %v3752 = vpack.c.b16 %v3745, %v3744
    %v3761 = vsel %vm923, %v3701, 0
    %v3764 = vsel %vm923, %v3702, 0
    %3766 = vmatprep.subr.bf16.mxu0 0
    %3767 = vmatpush1.bf16.msra.mxu0 %v3746
    %3768 = vmatprep.subr.bf16.mxu0 0
    %3769 = vmatpush1.bf16.msra.mxu0 %v3747
    %3770 = vmatprep.subr.bf16.mxu0 0
    %3771 = vmatpush1.bf16.msra.mxu0 %v3748
    %3772 = vmatprep.subr.bf16.mxu0 0
    %3773 = vmatpush1.bf16.msra.mxu0 %v3749
    %3774 = vmatprep.subr.bf16.mxu0 0
    %3775 = vmatpush1.bf16.msra.mxu0 %v3750
    %3776 = vmatprep.subr.bf16.mxu0 0
    %3777 = vmatpush1.bf16.msra.mxu0 %v3751
    %3778 = vmatprep.subr.bf16.mxu0 0
    %3779 = vmatpush1.bf16.msra.mxu0 %v3752
    %3780 = vmatprep.subr.bf16.mxu0 0
    %3781 = vmatpush1.bf16.msra.mxu0 0
    %3782 = vmatprep.subr.bf16.mxu0 0
    %3783 = vmatpush1.bf16.msra.mxu0 0
    %3784 = vmatprep.subr.bf16.mxu0 0
    %3785 = vmatpush1.bf16.msra.mxu0 0
    %3786 = vmatprep.subr.bf16.mxu0 0
    %3787 = vmatpush1.bf16.msra.mxu0 0
    %3788 = vmatprep.subr.bf16.mxu0 0
    %3789 = vmatpush1.bf16.msra.mxu0 0
    %3790 = vmatprep.subr.bf16.mxu0 0
    %3791 = vmatpush1.bf16.msra.mxu0 0
    %3792 = vmatprep.subr.bf16.mxu0 0
    %3793 = vmatpush1.bf16.msra.mxu0 0
    %3794 = vmatprep.subr.bf16.mxu0 0
    %3795 = vmatpush1.bf16.msra.mxu0 0
    %3796 = vmatprep.subr.bf16.mxu0 0
    %3797 = vmatpush1.bf16.msra.mxu0 0
    %3798 = vmatprep.mubr.bf16.mxu0 0
    %3799 = vmatmul.mubr.bf16.gmra.mrb[0].mxu0 %v3761
    %v3800 = vpop.f32.mrb[0].mxu0
    %v3801 = vadd.f32 0.0, %v3800
    %v3802 = vpop.f32.mrb[0].mxu0
    %v3803 = vpop.f32.mrb[0].mxu0
    %v3804 = vadd.f32 0.0, %v3803
    %v3805 = vpop.f32.mrb[0].mxu0
    %3806 = vmatprep.mubr.bf16.mxu0 0
    %3807 = vmatmul.mubr.bf16.gmra.mrb[0].mxu0 %v3764
    %v3808 = vpop.f32.mrb[0].mxu0
    %v3809 = vadd.f32 0.0, %v3808
    %v3810 = vpop.f32.mrb[0].mxu0
    %v3811 = vpop.f32.mrb[0].mxu0
    %v3812 = vadd.f32 0.0, %v3811
    %v3813 = vpop.f32.mrb[0].mxu0
    %3814 = vdwg.mxu0
    %v3815 = vadd.f32 %v3627, %v3801
    %v3816 = vadd.f32 %v3628, %v3804
    %v3817 = vadd.f32 %v3629, %v3809
    %v3818 = vadd.f32 %v3630, %v3812
    %v3819 = vld [vmem:[#allocation23] sm:$0x1]
    %v3821 = vlaneseq
    %v3822 = vshrl.u32 %v3821, 7
    %v3823 = vsub.s32 0, %v3822
    %v3824 = vrot.slane %v3819, %v3823
    %v3826 = vadd.f32 %v3815, %v3824
    %v3827 = vadd.f32 %v3816, %v3824
    %v3828 = vadd.f32 %v3817, %v3824
    %v3829 = vadd.f32 %v3818, %v3824
    %v3830 = vsub.f32 0.0, %v3826
    %v3831 = vsub.f32 0.0, %v3827
    %v3832 = vsub.f32 0.0, %v3828
    %v3833 = vsub.f32 0.0, %v3829
    %v3834 = vmul.f32 %v3830, 1.442695
    %v3835 = vpow.pop %v3834
    %v3836 = vmul.f32 %v3831, 1.442695
    %v3837 = vpow.pop %v3836
    %v3838 = vmul.f32 %v3832, 1.442695
    %v3839 = vpow.pop %v3838
    %v3840 = vmul.f32 %v3833, 1.442695
    %v3841 = vpow.pop %v3840
    %v3842 = vadd.f32 %v3835, 1.0
    %v3843 = vadd.f32 %v3837, 1.0
    %v3844 = vadd.f32 %v3839, 1.0
    %v3845 = vadd.f32 %v3841, 1.0
    %v3846 = vrcp.pop %v3842
    %v3847 = vrcp.pop %v3843
    %v3848 = vrcp.pop %v3844
    %v3849 = vrcp.pop %v3845
    %3850 = vst.msk [vmem:[%s23] sm:$0xff] %vm294, %v3846
    %3851 = vst.msk [vmem:[%s23 + $0x8] sm:$0xff] %vm294, %v3847
    %3852 = vst.msk [vmem:[%s23 + $0x10] sm:$0xff] %vm294, %v3848
    %vm3853 = vcmask 453632
    %3854 = vst.msk [vmem:[%s23 + $0x18] sm:$0xf] %vm3853, %v3849
    // Predicated region
    $region150: #{conv_vae_forward.1} parent=1 // pred_check
      _
    $region151: #{conv_vae_forward.1} parent=1 // pred_check_branch
      %3856 = sbr.rel (0) target = $region153
    $region152: #{conv_vae_forward.1} parent=1 // pred_region
      _
    $region153: #{conv_vae_forward.1} parent=1 // pred_fallthru
      _
    // Predicated region
    $region154: #{conv_vae_forward.1} parent=1 // pred_check
      _
    $region155: #{conv_vae_forward.1} parent=1 // pred_check_branch
      %3858 = sbr.rel (0) target = $region157
    $region156: #{conv_vae_forward.1} parent=1 // pred_region
      %s3860 = ssub.s32 32, 32
      %3861 = vsyncadd [#allocation4], %s3860
      %s3863 = sshll.u32 [#allocation25], 4
      %s3864 = int_to_ptr.vmem [resolvable:$true] %s3863
      %3866 = dma.vmem_to_hbm [thread:$0]  %s3864, 32, %s24, [#allocation4]
    $region157: #{conv_vae_forward.1} parent=1 // pred_fallthru
      _
    // Predicated region
    $region158: #{conv_vae_forward.1} parent=1 // pred_check
      _
    $region159: #{conv_vae_forward.1} parent=1 // pred_check_branch
      %3868 = sbr.rel (0) target = $region161
    $region160: #{conv_vae_forward.1} parent=1 // pred_region
      %s3870 = ssub.s32 32, 32
      %3871 = vsyncadd [#allocation27], %s3870
      %s3873 = sshll.u32 [#allocation26], 4
      %s3874 = int_to_ptr.vmem [resolvable:$true] %s3873
      %3876 = dma.vmem_to_hbm [thread:$0]  %s3874, 32, %s25, [#allocation27]
    $region161: #{conv_vae_forward.1} parent=1 // pred_fallthru
      _
    // Predicated region
    $region162: #{conv_vae_forward.1} parent=1 // pred_check
      _
    $region163: #{conv_vae_forward.1} parent=1 // pred_check_branch
      %3878 = sbr.rel (0) target = $region165
    $region164: #{conv_vae_forward.1} parent=1 // pred_region
      _
    $region165: #{conv_vae_forward.1} parent=1 // pred_fallthru
      _
    // Predicated region
    $region166: #{conv_vae_forward.1} parent=1 // pred_check
      _
    $region167: #{conv_vae_forward.1} parent=1 // pred_check_branch
      %3880 = sbr.rel (0) target = $region169
    $region168: #{conv_vae_forward.1} parent=1 // pred_region
      %3881 = dma.done [#allocation4], 32
    $region169: #{conv_vae_forward.1} parent=1 // pred_fallthru
      _
    // Predicated region
    $region170: #{conv_vae_forward.1} parent=1 // pred_check
      _
    $region171: #{conv_vae_forward.1} parent=1 // pred_check_branch
      %3883 = sbr.rel (0) target = $region173
    $region172: #{conv_vae_forward.1} parent=1 // pred_region
      %3884 = dma.done [#allocation27], 32
    $region173: #{conv_vae_forward.1} parent=1 // pred_fallthru
      _
    %3885 = vsyncpa [#allocation3], 1
    %3886 = vsyncpa [#allocation6], 1
    %3887 = vsyncpa [#allocation9], 1
    %3888 = vsyncpa [#allocation12], 1
    %3889 = vsyncpa [#allocation15], 1
    %3890 = vsyncpa [#allocation18], 1
    %3891 = vsyncpa [#allocation21], 1
    %3892 = vsyncpa [#allocation24], 1
    %3893 = vsyncpa [#allocation4], 1
    %3894 = vsyncpa [#allocation27], 1

</llo_original>
